<compile_context>
chip_gen: v5e
topology: v5e:2x2
jax: 0.10.0
libtpu: 0.0.40
codegen_flags: <defaults>
</compile_context>

<pallas_src>
import jax
import jax.numpy as jnp
from jax.experimental import pallas as pl
from jax.experimental.pallas import tpu as pltpu

HIDDEN = 800      # hidden width hardcoded in the PyTorch module
PROB_HIDDEN = 10  # hidden width hardcoded in Probability_encoder
N_SAMPLES = 10    # mean_t.repeat(10, 1, 1)


def _softplus(x):
    # torch.nn.Softplus default: log(1 + exp(x)), linear above threshold=20
    return jnp.where(x > 20.0, x, jnp.log1p(jnp.exp(jnp.minimum(x, 20.0))))


# ----------------------------- Pallas kernel ------------------------------- #

def fused_forward_kernel(x_ref, eps_ref,
                         we1, be1, we2, be2, we3m, be3m, we3s, be3s,
                         wp1, bp1, wp2, bp2, wp3, bp3,
                         wd1, bd1, wd2, bd2,
                         out_ref):
    """Encoder -> reparameterized t (all samples) -> prob-encoder -> decoder, fully in VMEM."""
    # --- IBP_encoder MLP ---
    h = jnp.maximum(
        jnp.dot(x_ref[...], we1[...], preferred_element_type=jnp.float32) + be1[...], 0.0)
    h = jnp.maximum(
        jnp.dot(h, we2[...], preferred_element_type=jnp.float32) + be2[...], 0.0)
    # split head: two lane-aligned matmuls instead of slicing a (B, 2K) result
    mean_t = jnp.dot(h, we3m[...], preferred_element_type=jnp.float32) + be3m[...]   # (B, K)
    sigma_t = _softplus(
        jnp.dot(h, we3s[...], preferred_element_type=jnp.float32) + be3s[...])       # (B, K)

    # --- reparameterization for all N_SAMPLES at once ---
    # eps_ref is (S*B, K) with row s*B + b <-> (sample s, batch b); tile mean/sigma to match.
    reps = (N_SAMPLES, 1)
    t = jnp.tile(mean_t, reps) + jnp.tile(sigma_t, reps) * eps_ref[...]               # (S*B, K)

    # --- Probability_encoder: Linear(K,10)-ReLU-Linear(10,10)-ReLU-Linear(10,K)-Sigmoid ---
    p = jnp.maximum(
        jnp.dot(t, wp1[...], preferred_element_type=jnp.float32) + bp1[...], 0.0)
    p = jnp.maximum(
        jnp.dot(p, wp2[...], preferred_element_type=jnp.float32) + bp2[...], 0.0)
    gamma = jax.nn.sigmoid(
        jnp.dot(p, wp3[...], preferred_element_type=jnp.float32) + bp3[...])          # (S*B, K)

    # --- Deterministic_decoder: Linear(K,800)(t*gamma)-ReLU-Linear(800,n_y) ---
    tg = t * gamma
    h2 = jnp.maximum(
        jnp.dot(tg, wd1[...], preferred_element_type=jnp.float32) + bd1[...], 0.0)
    out_ref[...] = jnp.dot(h2, wd2[...], preferred_element_type=jnp.float32) + bd2[...]


# ------------------------------ JAX wrapper -------------------------------- #

def init_linear(key, fan_in, fan_out):
    """Deterministic stand-in for torch.nn.Linear default init (U(-1/sqrt(in), 1/sqrt(in)))."""
    kw, kb = jax.random.split(key)
    bound = 1.0 / jnp.sqrt(float(fan_in))
    w = jax.random.uniform(kw, (fan_in, fan_out), jnp.float32, -bound, bound)
    b = jax.random.uniform(kb, (1, fan_out), jnp.float32, -bound, bound)
    return w, b


def init_params(key, K, n_x, n_y):
    ks = jax.random.split(key, 9)
    p = {}
    # IBP_encoder.f_theta   (the Linear(800, 2K) head is stored pre-split into the
    #  mean columns [:K] and sigma columns [K:] — numerically identical to slicing tmp1)
    p["we1"], p["be1"] = init_linear(ks[0], n_x, HIDDEN)
    p["we2"], p["be2"] = init_linear(ks[1], HIDDEN, HIDDEN)
    p["we3m"], p["be3m"] = init_linear(ks[2], HIDDEN, K)
    p["we3s"], p["be3s"] = init_linear(ks[3], HIDDEN, K)
    # Probability_encoder.prob_theta
    p["wp1"], p["bp1"] = init_linear(ks[4], K, PROB_HIDDEN)
    p["wp2"], p["bp2"] = init_linear(ks[5], PROB_HIDDEN, PROB_HIDDEN)
    p["wp3"], p["bp3"] = init_linear(ks[6], PROB_HIDDEN, K)
    # Deterministic_decoder.g_theta
    p["wd1"], p["bd1"] = init_linear(ks[7], K, HIDDEN)
    p["wd2"], p["bd2"] = init_linear(ks[8], HIDDEN, n_y)
    return p


def nlib_forward(x, params, noise_key):
    K = params["wp1"].shape[0]
    n_y = params["wd2"].shape[1]
    B = x.shape[0]
    x2 = x.reshape(B, -1).astype(jnp.float32)

    # reparameterization noise (torch.randn_like); flattened so sample s, batch b -> row s*B + b.
    # TODO(synk): could be generated in-kernel with pltpu.prng_seed/stateful_normal to skip this
    #             tiny HBM round-trip, at the cost of changing the exact random stream.
    eps = jax.random.normal(noise_key, (N_SAMPLES, B, K), dtype=jnp.float32)
    eps_flat = eps.reshape(N_SAMPLES * B, K)

    args = (x2, eps_flat,
            params["we1"], params["be1"], params["we2"], params["be2"],
            params["we3m"], params["be3m"], params["we3s"], params["be3s"],
            params["wp1"], params["bp1"], params["wp2"], params["bp2"],
            params["wp3"], params["bp3"],
            params["wd1"], params["bd1"], params["wd2"], params["bd2"])

    # Single fused call, no grid: every operand is small enough to live whole in VMEM
    # (~3 MB total, dominated by we2 = 800x800 f32) on v5e/v6e/v7x with the default scoped limit.
    in_specs = [pl.BlockSpec(memory_space=pltpu.MemorySpace.VMEM) for _ in args]
    logits_flat = pl.pallas_call(
        fused_forward_kernel,
        in_specs=in_specs,
        out_specs=pl.BlockSpec(memory_space=pltpu.MemorySpace.VMEM),
        out_shape=jax.ShapeDtypeStruct((N_SAMPLES * B, n_y), jnp.float32),
    )(*args)

    return logits_flat.reshape(N_SAMPLES, B, n_y)  # (10, B, n_y), same as PyTorch forward output


# --------------------------- pure-JAX reference ----------------------------- #

def ref_forward(x, params, eps):
    x2 = x.reshape(x.shape[0], -1).astype(jnp.float32)
    h = jax.nn.relu(x2 @ params["we1"] + params["be1"])
    h = jax.nn.relu(h @ params["we2"] + params["be2"])
    mean_t = h @ params["we3m"] + params["be3m"]
    sigma_t = jax.nn.softplus(h @ params["we3s"] + params["be3s"])
    t = mean_t[None] + sigma_t[None] * eps                     # (S, B, K)
    p = jax.nn.relu(t @ params["wp1"] + params["bp1"])
    p = jax.nn.relu(p @ params["wp2"] + params["bp2"])
    gamma = jax.nn.sigmoid(p @ params["wp3"] + params["bp3"])
    h2 = jax.nn.relu((t * gamma) @ params["wd1"] + params["bd1"])
    return h2 @ params["wd2"] + params["bd2"]                   # (S, B, n_y)


if __name__ == "__main__":
    K, n_x, n_y, B = 16, 64, 10, 8

    root = jax.random.PRNGKey(0)
    k_param, k_x, k_eps = jax.random.split(root, 3)

    params = init_params(k_param, K, n_x, n_y)
    x = jax.random.normal(k_x, (B, n_x), dtype=jnp.float32)

    logits = nlib_forward(x, params, k_eps)
    jax.block_until_ready(logits)

    assert logits.shape == (N_SAMPLES, B, n_y)
    assert jnp.all(jnp.isfinite(logits))

    # correctness check against a pure-JAX reference using the same eps stream
    eps = jax.random.normal(k_eps, (N_SAMPLES, B, K), dtype=jnp.float32)
    ref = ref_forward(x, params, eps)
    assert jnp.allclose(logits, ref, rtol=1e-5, atol=1e-4), float(jnp.max(jnp.abs(logits - ref)))

    print("KERNEL_OK")
</pallas_src>

<mosaic_0001>
module attributes {stable_mosaic.version = 11 : i64} {
  func.func @fused_forward_kernel(%arg0: memref<8x64xf32, #tpu.memory_space<vmem>>, %arg1: memref<80x16xf32, #tpu.memory_space<vmem>>, %arg2: memref<64x800xf32, #tpu.memory_space<vmem>>, %arg3: memref<1x800xf32, #tpu.memory_space<vmem>>, %arg4: memref<800x800xf32, #tpu.memory_space<vmem>>, %arg5: memref<1x800xf32, #tpu.memory_space<vmem>>, %arg6: memref<800x16xf32, #tpu.memory_space<vmem>>, %arg7: memref<1x16xf32, #tpu.memory_space<vmem>>, %arg8: memref<800x16xf32, #tpu.memory_space<vmem>>, %arg9: memref<1x16xf32, #tpu.memory_space<vmem>>, %arg10: memref<16x10xf32, #tpu.memory_space<vmem>>, %arg11: memref<1x10xf32, #tpu.memory_space<vmem>>, %arg12: memref<10x10xf32, #tpu.memory_space<vmem>>, %arg13: memref<1x10xf32, #tpu.memory_space<vmem>>, %arg14: memref<10x16xf32, #tpu.memory_space<vmem>>, %arg15: memref<1x16xf32, #tpu.memory_space<vmem>>, %arg16: memref<16x800xf32, #tpu.memory_space<vmem>>, %arg17: memref<1x800xf32, #tpu.memory_space<vmem>>, %arg18: memref<800x10xf32, #tpu.memory_space<vmem>>, %arg19: memref<1x10xf32, #tpu.memory_space<vmem>>, %arg20: memref<80x10xf32, #tpu.memory_space<vmem>>) attributes {dimension_semantics = [], scalar_prefetch = 0 : i64, scratch_operands = 0 : i64, tpu.core_type = #tpu.core_type<tc>} {
    %c0 = arith.constant 0 : index
    %c0_0 = arith.constant 0 : index
    %0 = vector.load %arg0[%c0, %c0_0] : memref<8x64xf32, #tpu.memory_space<vmem>>, vector<8x64xf32>
    %c0_1 = arith.constant 0 : index
    %c0_2 = arith.constant 0 : index
    %1 = vector.load %arg2[%c0_1, %c0_2] : memref<64x800xf32, #tpu.memory_space<vmem>>, vector<64x800xf32>
    %cst = arith.constant dense<0.000000e+00> : vector<8x800xf32>
    %2 = tpu.matmul %0, %1, %cst {dimension_numbers = #tpu.dot_dimension_numbers<[1], [0], [0], [1], [0, 0, 1, 1], [], []>} : vector<8x64xf32>, vector<64x800xf32>, vector<8x800xf32> -> vector<8x800xf32>
    %c0_3 = arith.constant 0 : index
    %c0_4 = arith.constant 0 : index
    %3 = vector.load %arg3[%c0_3, %c0_4] : memref<1x800xf32, #tpu.memory_space<vmem>>, vector<1x800xf32>
    %4 = vector.broadcast %3 : vector<1x800xf32> to vector<8x800xf32>
    %5 = arith.addf %2, %4 : vector<8x800xf32>
    %cst_5 = arith.constant 0.000000e+00 : f32
    %6 = vector.broadcast %cst_5 : f32 to vector<8x800xf32>
    %7 = arith.maximumf %5, %6 : vector<8x800xf32>
    %c0_6 = arith.constant 0 : index
    %c0_7 = arith.constant 0 : index
    %8 = vector.load %arg4[%c0_6, %c0_7] : memref<800x800xf32, #tpu.memory_space<vmem>>, vector<800x800xf32>
    %cst_8 = arith.constant dense<0.000000e+00> : vector<8x800xf32>
    %9 = tpu.matmul %7, %8, %cst_8 {dimension_numbers = #tpu.dot_dimension_numbers<[1], [0], [0], [1], [0, 0, 1, 1], [], []>} : vector<8x800xf32>, vector<800x800xf32>, vector<8x800xf32> -> vector<8x800xf32>
    %c0_9 = arith.constant 0 : index
    %c0_10 = arith.constant 0 : index
    %10 = vector.load %arg5[%c0_9, %c0_10] : memref<1x800xf32, #tpu.memory_space<vmem>>, vector<1x800xf32>
    %11 = vector.broadcast %10 : vector<1x800xf32> to vector<8x800xf32>
    %12 = arith.addf %9, %11 : vector<8x800xf32>
    %cst_11 = arith.constant 0.000000e+00 : f32
    %13 = vector.broadcast %cst_11 : f32 to vector<8x800xf32>
    %14 = arith.maximumf %12, %13 : vector<8x800xf32>
    %c0_12 = arith.constant 0 : index
    %c0_13 = arith.constant 0 : index
    %15 = vector.load %arg6[%c0_12, %c0_13] : memref<800x16xf32, #tpu.memory_space<vmem>>, vector<800x16xf32>
    %cst_14 = arith.constant dense<0.000000e+00> : vector<8x16xf32>
    %16 = tpu.matmul %14, %15, %cst_14 {dimension_numbers = #tpu.dot_dimension_numbers<[1], [0], [0], [1], [0, 0, 1, 1], [], []>} : vector<8x800xf32>, vector<800x16xf32>, vector<8x16xf32> -> vector<8x16xf32>
    %c0_15 = arith.constant 0 : index
    %c0_16 = arith.constant 0 : index
    %17 = vector.load %arg7[%c0_15, %c0_16] : memref<1x16xf32, #tpu.memory_space<vmem>>, vector<1x16xf32>
    %18 = vector.broadcast %17 : vector<1x16xf32> to vector<8x16xf32>
    %19 = arith.addf %16, %18 : vector<8x16xf32>
    %c0_17 = arith.constant 0 : index
    %c0_18 = arith.constant 0 : index
    %20 = vector.load %arg8[%c0_17, %c0_18] : memref<800x16xf32, #tpu.memory_space<vmem>>, vector<800x16xf32>
    %cst_19 = arith.constant dense<0.000000e+00> : vector<8x16xf32>
    %21 = tpu.matmul %14, %20, %cst_19 {dimension_numbers = #tpu.dot_dimension_numbers<[1], [0], [0], [1], [0, 0, 1, 1], [], []>} : vector<8x800xf32>, vector<800x16xf32>, vector<8x16xf32> -> vector<8x16xf32>
    %c0_20 = arith.constant 0 : index
    %c0_21 = arith.constant 0 : index
    %22 = vector.load %arg9[%c0_20, %c0_21] : memref<1x16xf32, #tpu.memory_space<vmem>>, vector<1x16xf32>
    %23 = vector.broadcast %22 : vector<1x16xf32> to vector<8x16xf32>
    %24 = arith.addf %21, %23 : vector<8x16xf32>
    %cst_22 = arith.constant 2.000000e+01 : f32
    %25 = vector.broadcast %cst_22 : f32 to vector<8x16xf32>
    %26 = arith.cmpf ogt, %24, %25 : vector<8x16xf32>
    %cst_23 = arith.constant 2.000000e+01 : f32
    %27 = vector.broadcast %cst_23 : f32 to vector<8x16xf32>
    %28 = arith.minimumf %24, %27 : vector<8x16xf32>
    %29 = math.exp %28 : vector<8x16xf32>
    %30 = math.log1p %29 : vector<8x16xf32>
    %31 = arith.select %26, %24, %30 : vector<8x16xi1>, vector<8x16xf32>
    %32 = tpu.concatenate %19, %19, %19, %19, %19, %19, %19, %19, %19, %19 in 0 : vector<8x16xf32>, vector<8x16xf32>, vector<8x16xf32>, vector<8x16xf32>, vector<8x16xf32>, vector<8x16xf32>, vector<8x16xf32>, vector<8x16xf32>, vector<8x16xf32>, vector<8x16xf32> -> vector<80x16xf32>
    %33 = tpu.concatenate %31, %31, %31, %31, %31, %31, %31, %31, %31, %31 in 0 : vector<8x16xf32>, vector<8x16xf32>, vector<8x16xf32>, vector<8x16xf32>, vector<8x16xf32>, vector<8x16xf32>, vector<8x16xf32>, vector<8x16xf32>, vector<8x16xf32>, vector<8x16xf32> -> vector<80x16xf32>
    %c0_24 = arith.constant 0 : index
    %c0_25 = arith.constant 0 : index
    %34 = vector.load %arg1[%c0_24, %c0_25] : memref<80x16xf32, #tpu.memory_space<vmem>>, vector<80x16xf32>
    %35 = arith.mulf %33, %34 : vector<80x16xf32>
    %36 = arith.addf %32, %35 : vector<80x16xf32>
    %c0_26 = arith.constant 0 : index
    %c0_27 = arith.constant 0 : index
    %37 = vector.load %arg10[%c0_26, %c0_27] : memref<16x10xf32, #tpu.memory_space<vmem>>, vector<16x10xf32>
    %cst_28 = arith.constant dense<0.000000e+00> : vector<80x10xf32>
    %38 = tpu.matmul %36, %37, %cst_28 {dimension_numbers = #tpu.dot_dimension_numbers<[1], [0], [0], [1], [0, 0, 1, 1], [], []>} : vector<80x16xf32>, vector<16x10xf32>, vector<80x10xf32> -> vector<80x10xf32>
    %c0_29 = arith.constant 0 : index
    %c0_30 = arith.constant 0 : index
    %39 = vector.load %arg11[%c0_29, %c0_30] : memref<1x10xf32, #tpu.memory_space<vmem>>, vector<1x10xf32>
    %40 = vector.broadcast %39 : vector<1x10xf32> to vector<80x10xf32>
    %41 = arith.addf %38, %40 : vector<80x10xf32>
    %cst_31 = arith.constant 0.000000e+00 : f32
    %42 = vector.broadcast %cst_31 : f32 to vector<80x10xf32>
    %43 = arith.maximumf %41, %42 : vector<80x10xf32>
    %c0_32 = arith.constant 0 : index
    %c0_33 = arith.constant 0 : index
    %44 = vector.load %arg12[%c0_32, %c0_33] : memref<10x10xf32, #tpu.memory_space<vmem>>, vector<10x10xf32>
    %cst_34 = arith.constant dense<0.000000e+00> : vector<80x10xf32>
    %45 = tpu.matmul %43, %44, %cst_34 {dimension_numbers = #tpu.dot_dimension_numbers<[1], [0], [0], [1], [0, 0, 1, 1], [], []>} : vector<80x10xf32>, vector<10x10xf32>, vector<80x10xf32> -> vector<80x10xf32>
    %c0_35 = arith.constant 0 : index
    %c0_36 = arith.constant 0 : index
    %46 = vector.load %arg13[%c0_35, %c0_36] : memref<1x10xf32, #tpu.memory_space<vmem>>, vector<1x10xf32>
    %47 = vector.broadcast %46 : vector<1x10xf32> to vector<80x10xf32>
    %48 = arith.addf %45, %47 : vector<80x10xf32>
    %cst_37 = arith.constant 0.000000e+00 : f32
    %49 = vector.broadcast %cst_37 : f32 to vector<80x10xf32>
    %50 = arith.maximumf %48, %49 : vector<80x10xf32>
    %c0_38 = arith.constant 0 : index
    %c0_39 = arith.constant 0 : index
    %51 = vector.load %arg14[%c0_38, %c0_39] : memref<10x16xf32, #tpu.memory_space<vmem>>, vector<10x16xf32>
    %cst_40 = arith.constant dense<0.000000e+00> : vector<80x16xf32>
    %52 = tpu.matmul %50, %51, %cst_40 {dimension_numbers = #tpu.dot_dimension_numbers<[1], [0], [0], [1], [0, 0, 1, 1], [], []>} : vector<80x10xf32>, vector<10x16xf32>, vector<80x16xf32> -> vector<80x16xf32>
    %c0_41 = arith.constant 0 : index
    %c0_42 = arith.constant 0 : index
    %53 = vector.load %arg15[%c0_41, %c0_42] : memref<1x16xf32, #tpu.memory_space<vmem>>, vector<1x16xf32>
    %54 = vector.broadcast %53 : vector<1x16xf32> to vector<80x16xf32>
    %55 = arith.addf %52, %54 : vector<80x16xf32>
    %56 = arith.negf %55 : vector<80x16xf32>
    %57 = math.exp %56 : vector<80x16xf32>
    %cst_43 = arith.constant 1.000000e+00 : f32
    %58 = vector.broadcast %cst_43 : f32 to vector<80x16xf32>
    %59 = arith.addf %58, %57 : vector<80x16xf32>
    %60 = arith.divf %58, %59 : vector<80x16xf32>
    %61 = arith.mulf %36, %60 : vector<80x16xf32>
    %c0_44 = arith.constant 0 : index
    %c0_45 = arith.constant 0 : index
    %62 = vector.load %arg16[%c0_44, %c0_45] : memref<16x800xf32, #tpu.memory_space<vmem>>, vector<16x800xf32>
    %cst_46 = arith.constant dense<0.000000e+00> : vector<80x800xf32>
    %63 = tpu.matmul %61, %62, %cst_46 {dimension_numbers = #tpu.dot_dimension_numbers<[1], [0], [0], [1], [0, 0, 1, 1], [], []>} : vector<80x16xf32>, vector<16x800xf32>, vector<80x800xf32> -> vector<80x800xf32>
    %c0_47 = arith.constant 0 : index
    %c0_48 = arith.constant 0 : index
    %64 = vector.load %arg17[%c0_47, %c0_48] : memref<1x800xf32, #tpu.memory_space<vmem>>, vector<1x800xf32>
    %65 = vector.broadcast %64 : vector<1x800xf32> to vector<80x800xf32>
    %66 = arith.addf %63, %65 : vector<80x800xf32>
    %cst_49 = arith.constant 0.000000e+00 : f32
    %67 = vector.broadcast %cst_49 : f32 to vector<80x800xf32>
    %68 = arith.maximumf %66, %67 : vector<80x800xf32>
    %c0_50 = arith.constant 0 : index
    %c0_51 = arith.constant 0 : index
    %69 = vector.load %arg18[%c0_50, %c0_51] : memref<800x10xf32, #tpu.memory_space<vmem>>, vector<800x10xf32>
    %cst_52 = arith.constant dense<0.000000e+00> : vector<80x10xf32>
    %70 = tpu.matmul %68, %69, %cst_52 {dimension_numbers = #tpu.dot_dimension_numbers<[1], [0], [0], [1], [0, 0, 1, 1], [], []>} : vector<80x800xf32>, vector<800x10xf32>, vector<80x10xf32> -> vector<80x10xf32>
    %c0_53 = arith.constant 0 : index
    %c0_54 = arith.constant 0 : index
    %71 = vector.load %arg19[%c0_53, %c0_54] : memref<1x10xf32, #tpu.memory_space<vmem>>, vector<1x10xf32>
    %72 = vector.broadcast %71 : vector<1x10xf32> to vector<80x10xf32>
    %73 = arith.addf %70, %72 : vector<80x10xf32>
    %c0_55 = arith.constant 0 : index
    %c0_56 = arith.constant 0 : index
    %74 = vector.load %arg20[%c0_55, %c0_56] : memref<80x10xf32, #tpu.memory_space<vmem>>, vector<80x10xf32>
    tpu.vector_store %arg20[%c0_55, %c0_56], %73 {strides = array<i32>} : memref<80x10xf32, #tpu.memory_space<vmem>>, vector<80x10xf32>,
    return
  }
}

</mosaic_0001>

<llo_original>
// kernel: tpu_custom_call.1
$region0: #{tpu_custom_call.1}
  #allocation0 [shape = 'u32[]', space=smem, size = 0x4, offset = 0x4, fixed_abs, tag = 'smem constant byte address 0x4 - core index']
  #allocation1 [shape = 'u32[72,128]{1,0:T(1,128)}', space=vmem, size = 0x9000, scoped, tag = 'internal scratch']
  %s0 = inlined_call_operand.hbm [shape: f32[8,64], index: 0, kind: input, shape index: {}]
  %s1 = inlined_call_operand.vmem [shape: f32[80,16], index: 1, kind: input, shape index: {}]
  %s2 = inlined_call_operand.hbm [shape: f32[64,800], index: 2, kind: input, shape index: {}]
  %s3 = inlined_call_operand.hbm [shape: f32[1,800], index: 3, kind: input, shape index: {}]
  %s4 = inlined_call_operand.hbm [shape: f32[800,800], index: 4, kind: input, shape index: {}]
  %s5 = inlined_call_operand.hbm [shape: f32[1,800], index: 5, kind: input, shape index: {}]
  %s6 = inlined_call_operand.vmem [shape: f32[800,16], index: 6, kind: input, shape index: {}]
  %s7 = inlined_call_operand.hbm [shape: f32[1,16], index: 7, kind: input, shape index: {}]
  %s8 = inlined_call_operand.vmem [shape: f32[800,16], index: 8, kind: input, shape index: {}]
  %s9 = inlined_call_operand.hbm [shape: f32[1,16], index: 9, kind: input, shape index: {}]
  %s10 = inlined_call_operand.hbm [shape: f32[16,10], index: 10, kind: input, shape index: {}]
  %s11 = inlined_call_operand.hbm [shape: f32[1,10], index: 11, kind: input, shape index: {}]
  %s12 = inlined_call_operand.hbm [shape: f32[10,10], index: 12, kind: input, shape index: {}]
  %s13 = inlined_call_operand.hbm [shape: f32[1,10], index: 13, kind: input, shape index: {}]
  %s14 = inlined_call_operand.hbm [shape: f32[10,16], index: 14, kind: input, shape index: {}]
  %s15 = inlined_call_operand.hbm [shape: f32[1,16], index: 15, kind: input, shape index: {}]
  %s16 = inlined_call_operand.hbm [shape: f32[16,800], index: 16, kind: input, shape index: {}]
  %s17 = inlined_call_operand.hbm [shape: f32[1,800], index: 17, kind: input, shape index: {}]
  %s18 = inlined_call_operand.vmem [shape: f32[800,10], index: 18, kind: input, shape index: {}]
  %s19 = inlined_call_operand.hbm [shape: f32[1,10], index: 19, kind: input, shape index: {}]
  %s20 = inlined_call_operand.vmem [shape: f32[80,10], index: 20, kind: output, shape index: {}]
  %s21 = sld [smem:[#allocation0]]
  $region154: #{tpu_custom_call.1} parent=0
    _
  %s23 = ssub.s32 1, %s21
  %s24 = scalar_select 0, %s23, %s21
  $region1: #{tpu_custom_call.1} parent=0
    #allocation2 [shape = 'u8[4096]{0}', space=vmem, size = 0x1000, scoped, tag = 'input window, operand 0, single buffered']
    #allocation3 [shape = 's32[1]{0}', space=sflag, size = 0x4, scoped, tag = 'scoped memory for tpu_custom_call.1']
    #allocation4 [shape = 'u8[229376]{0}', space=vmem, size = 0x38000, scoped, tag = 'input window, operand 2, single buffered']
    #allocation5 [shape = 's32[1]{0}', space=sflag, size = 0x4, scoped, tag = 'scoped memory for tpu_custom_call.1']
    #allocation6 [shape = 'u8[3584]{0}', space=vmem, size = 0x1000, scoped, tag = 'input window, operand 3, single buffered']
    #allocation7 [shape = 'u8[2867200]{0}', space=vmem, size = 0x2bc000, scoped, tag = 'input window, operand 4, single buffered']
    #allocation8 [shape = 's32[1]{0}', space=sflag, size = 0x4, scoped, tag = 'scoped memory for tpu_custom_call.1']
    #allocation9 [shape = 'u8[3584]{0}', space=vmem, size = 0x1000, scoped, tag = 'input window, operand 5, single buffered']
    #allocation10 [shape = 'u8[512]{0}', space=vmem, size = 0x400, scoped, tag = 'input window, operand 7, single buffered']
    #allocation11 [shape = 's32[1]{0}', space=sflag, size = 0x4, scoped, tag = 'scoped memory for tpu_custom_call.1']
    #allocation12 [shape = 'u8[512]{0}', space=vmem, size = 0x400, scoped, tag = 'input window, operand 9, single buffered']
    #allocation13 [shape = 'u8[8192]{0}', space=vmem, size = 0x2000, scoped, tag = 'input window, operand 10, single buffered']
    #allocation14 [shape = 's32[1]{0}', space=sflag, size = 0x4, scoped, tag = 'scoped memory for tpu_custom_call.1']
    #allocation15 [shape = 'u8[512]{0}', space=vmem, size = 0x400, scoped, tag = 'input window, operand 11, single buffered']
    #allocation16 [shape = 'u8[8192]{0}', space=vmem, size = 0x2000, scoped, tag = 'input window, operand 12, single buffered']
    #allocation17 [shape = 's32[1]{0}', space=sflag, size = 0x4, scoped, tag = 'scoped memory for tpu_custom_call.1']
    #allocation18 [shape = 'u8[512]{0}', space=vmem, size = 0x400, scoped, tag = 'input window, operand 13, single buffered']
    #allocation19 [shape = 'u8[8192]{0}', space=vmem, size = 0x2000, scoped, tag = 'input window, operand 14, single buffered']
    #allocation20 [shape = 's32[1]{0}', space=sflag, size = 0x4, scoped, tag = 'scoped memory for tpu_custom_call.1']
    #allocation21 [shape = 'u8[512]{0}', space=vmem, size = 0x400, scoped, tag = 'input window, operand 15, single buffered']
    #allocation22 [shape = 'u8[57344]{0}', space=vmem, size = 0xe000, scoped, tag = 'input window, operand 16, single buffered']
    #allocation23 [shape = 's32[1]{0}', space=sflag, size = 0x4, scoped, tag = 'scoped memory for tpu_custom_call.1']
    #allocation24 [shape = 'u8[3584]{0}', space=vmem, size = 0x1000, scoped, tag = 'input window, operand 17, single buffered']
    #allocation25 [shape = 'u8[512]{0}', space=vmem, size = 0x400, scoped, tag = 'input window, operand 19, single buffered']
    #allocation26 [shape = 's32[1]{0}', space=sflag, size = 0x4, scoped, tag = 'scoped memory for tpu_custom_call.1']
    %25 = vsyncpa [#allocation3], 0
    %26 = vsyncpa [#allocation5], 0
    %27 = vsyncpa [#allocation8], 0
    %28 = vsyncpa [#allocation11], 0
    %29 = vsyncpa [#allocation14], 0
    %30 = vsyncpa [#allocation17], 0
    %31 = vsyncpa [#allocation20], 0
    %32 = vsyncpa [#allocation23], 0
    %33 = vsyncpa [#allocation26], 0
    // Predicated region
    $region2: #{tpu_custom_call.1} parent=1 // pred_check
      _
    $region3: #{tpu_custom_call.1} parent=1 // pred_check_branch
      %35 = sbr.rel (0) target = $region5
    $region4: #{tpu_custom_call.1} parent=1 // pred_region
      %37 = vsyncadd [#allocation3], 0
      %s39 = sshll.u32 %s0, 4
      %s40 = int_to_ptr.hbm [resolvable:$true] %s39
      %s41 = sshll.u32 [#allocation2], 4
      %s42 = int_to_ptr.vmem [resolvable:$true] %s41
      %44 = dma.hbm_to_vmem [thread:$0]  %s40, 128, %s42, [#allocation3]
    $region5: #{tpu_custom_call.1} parent=1 // pred_fallthru
      _
    // Predicated region
    $region6: #{tpu_custom_call.1} parent=1 // pred_check
      _
    $region7: #{tpu_custom_call.1} parent=1 // pred_check_branch
      %46 = sbr.rel (0) target = $region9
    $region8: #{tpu_custom_call.1} parent=1 // pred_region
      _
    $region9: #{tpu_custom_call.1} parent=1 // pred_fallthru
      _
    // Predicated region
    $region10: #{tpu_custom_call.1} parent=1 // pred_check
      _
    $region11: #{tpu_custom_call.1} parent=1 // pred_check_branch
      %48 = sbr.rel (0) target = $region13
    $region12: #{tpu_custom_call.1} parent=1 // pred_region
      %50 = vsyncadd [#allocation5], 0
      %s51 = sshll.u32 %s2, 4
      %s52 = int_to_ptr.hbm [resolvable:$true] %s51
      %s53 = sshll.u32 [#allocation4], 4
      %s54 = int_to_ptr.vmem [resolvable:$true] %s53
      %59 = dma.hbm_to_vmem [thread:$0]  %s52, 7168, %s54, [#allocation5], 896, 896, 56
    $region13: #{tpu_custom_call.1} parent=1 // pred_fallthru
      _
    // Predicated region
    $region14: #{tpu_custom_call.1} parent=1 // pred_check
      _
    $region15: #{tpu_custom_call.1} parent=1 // pred_check_branch
      %61 = sbr.rel (0) target = $region17
    $region16: #{tpu_custom_call.1} parent=1 // pred_region
      %63 = vsyncadd [#allocation5], 0
      %s65 = sshll.u32 %s3, 4
      %s66 = int_to_ptr.hbm [resolvable:$true] %s65
      %s67 = sshll.u32 [#allocation6], 4
      %s68 = int_to_ptr.vmem [resolvable:$true] %s67
      %70 = dma.hbm_to_vmem [thread:$0]  %s66, 112, %s68, [#allocation5]
    $region17: #{tpu_custom_call.1} parent=1 // pred_fallthru
      _
    // Predicated region
    $region18: #{tpu_custom_call.1} parent=1 // pred_check
      _
    $region19: #{tpu_custom_call.1} parent=1 // pred_check_branch
      %72 = sbr.rel (0) target = $region21
    $region20: #{tpu_custom_call.1} parent=1 // pred_region
      %74 = vsyncadd [#allocation8], 0
      %s75 = sshll.u32 %s4, 4
      %s76 = int_to_ptr.hbm [resolvable:$true] %s75
      %s77 = sshll.u32 [#allocation7], 4
      %s78 = int_to_ptr.vmem [resolvable:$true] %s77
      %83 = dma.hbm_to_vmem [thread:$0]  %s76, 89600, %s78, [#allocation8], 896, 896, 56
    $region21: #{tpu_custom_call.1} parent=1 // pred_fallthru
      _
    // Predicated region
    $region22: #{tpu_custom_call.1} parent=1 // pred_check
      _
    $region23: #{tpu_custom_call.1} parent=1 // pred_check_branch
      %85 = sbr.rel (0) target = $region25
    $region24: #{tpu_custom_call.1} parent=1 // pred_region
      %87 = vsyncadd [#allocation8], 0
      %s89 = sshll.u32 %s5, 4
      %s90 = int_to_ptr.hbm [resolvable:$true] %s89
      %s91 = sshll.u32 [#allocation9], 4
      %s92 = int_to_ptr.vmem [resolvable:$true] %s91
      %94 = dma.hbm_to_vmem [thread:$0]  %s90, 112, %s92, [#allocation8]
    $region25: #{tpu_custom_call.1} parent=1 // pred_fallthru
      _
    // Predicated region
    $region26: #{tpu_custom_call.1} parent=1 // pred_check
      _
    $region27: #{tpu_custom_call.1} parent=1 // pred_check_branch
      %96 = sbr.rel (0) target = $region29
    $region28: #{tpu_custom_call.1} parent=1 // pred_region
      _
    $region29: #{tpu_custom_call.1} parent=1 // pred_fallthru
      _
    // Predicated region
    $region30: #{tpu_custom_call.1} parent=1 // pred_check
      _
    $region31: #{tpu_custom_call.1} parent=1 // pred_check_branch
      %98 = sbr.rel (0) target = $region33
    $region32: #{tpu_custom_call.1} parent=1 // pred_region
      %100 = vsyncadd [#allocation11], 0
      %s102 = sshll.u32 %s7, 4
      %s103 = int_to_ptr.hbm [resolvable:$true] %s102
      %s104 = sshll.u32 [#allocation10], 4
      %s105 = int_to_ptr.vmem [resolvable:$true] %s104
      %107 = dma.hbm_to_vmem [thread:$0]  %s103, 16, %s105, [#allocation11]
    $region33: #{tpu_custom_call.1} parent=1 // pred_fallthru
      _
    // Predicated region
    $region34: #{tpu_custom_call.1} parent=1 // pred_check
      _
    $region35: #{tpu_custom_call.1} parent=1 // pred_check_branch
      %109 = sbr.rel (0) target = $region37
    $region36: #{tpu_custom_call.1} parent=1 // pred_region
      _
    $region37: #{tpu_custom_call.1} parent=1 // pred_fallthru
      _
    // Predicated region
    $region38: #{tpu_custom_call.1} parent=1 // pred_check
      _
    $region39: #{tpu_custom_call.1} parent=1 // pred_check_branch
      %111 = sbr.rel (0) target = $region41
    $region40: #{tpu_custom_call.1} parent=1 // pred_region
      %113 = vsyncadd [#allocation11], 0
      %s115 = sshll.u32 %s9, 4
      %s116 = int_to_ptr.hbm [resolvable:$true] %s115
      %s117 = sshll.u32 [#allocation12], 4
      %s118 = int_to_ptr.vmem [resolvable:$true] %s117
      %120 = dma.hbm_to_vmem [thread:$0]  %s116, 16, %s118, [#allocation11]
    $region41: #{tpu_custom_call.1} parent=1 // pred_fallthru
      _
    // Predicated region
    $region42: #{tpu_custom_call.1} parent=1 // pred_check
      _
    $region43: #{tpu_custom_call.1} parent=1 // pred_check_branch
      %122 = sbr.rel (0) target = $region45
    $region44: #{tpu_custom_call.1} parent=1 // pred_region
      %124 = vsyncadd [#allocation14], 0
      %s125 = sshll.u32 %s10, 4
      %s126 = int_to_ptr.hbm [resolvable:$true] %s125
      %s127 = sshll.u32 [#allocation13], 4
      %s128 = int_to_ptr.vmem [resolvable:$true] %s127
      %133 = dma.hbm_to_vmem [thread:$0]  %s126, 256, %s128, [#allocation14], 128, 128, 8
    $region45: #{tpu_custom_call.1} parent=1 // pred_fallthru
      _
    // Predicated region
    $region46: #{tpu_custom_call.1} parent=1 // pred_check
      _
    $region47: #{tpu_custom_call.1} parent=1 // pred_check_branch
      %135 = sbr.rel (0) target = $region49
    $region48: #{tpu_custom_call.1} parent=1 // pred_region
      %137 = vsyncadd [#allocation14], 0
      %s139 = sshll.u32 %s11, 4
      %s140 = int_to_ptr.hbm [resolvable:$true] %s139
      %s141 = sshll.u32 [#allocation15], 4
      %s142 = int_to_ptr.vmem [resolvable:$true] %s141
      %144 = dma.hbm_to_vmem [thread:$0]  %s140, 16, %s142, [#allocation14]
    $region49: #{tpu_custom_call.1} parent=1 // pred_fallthru
      _
    // Predicated region
    $region50: #{tpu_custom_call.1} parent=1 // pred_check
      _
    $region51: #{tpu_custom_call.1} parent=1 // pred_check_branch
      %146 = sbr.rel (0) target = $region53
    $region52: #{tpu_custom_call.1} parent=1 // pred_region
      %148 = vsyncadd [#allocation17], 0
      %s149 = sshll.u32 %s12, 4
      %s150 = int_to_ptr.hbm [resolvable:$true] %s149
      %s151 = sshll.u32 [#allocation16], 4
      %s152 = int_to_ptr.vmem [resolvable:$true] %s151
      %157 = dma.hbm_to_vmem [thread:$0]  %s150, 256, %s152, [#allocation17], 128, 128, 8
    $region53: #{tpu_custom_call.1} parent=1 // pred_fallthru
      _
    // Predicated region
    $region54: #{tpu_custom_call.1} parent=1 // pred_check
      _
    $region55: #{tpu_custom_call.1} parent=1 // pred_check_branch
      %159 = sbr.rel (0) target = $region57
    $region56: #{tpu_custom_call.1} parent=1 // pred_region
      %161 = vsyncadd [#allocation17], 0
      %s163 = sshll.u32 %s13, 4
      %s164 = int_to_ptr.hbm [resolvable:$true] %s163
      %s165 = sshll.u32 [#allocation18], 4
      %s166 = int_to_ptr.vmem [resolvable:$true] %s165
      %168 = dma.hbm_to_vmem [thread:$0]  %s164, 16, %s166, [#allocation17]
    $region57: #{tpu_custom_call.1} parent=1 // pred_fallthru
      _
    // Predicated region
    $region58: #{tpu_custom_call.1} parent=1 // pred_check
      _
    $region59: #{tpu_custom_call.1} parent=1 // pred_check_branch
      %170 = sbr.rel (0) target = $region61
    $region60: #{tpu_custom_call.1} parent=1 // pred_region
      %172 = vsyncadd [#allocation20], 0
      %s173 = sshll.u32 %s14, 4
      %s174 = int_to_ptr.hbm [resolvable:$true] %s173
      %s175 = sshll.u32 [#allocation19], 4
      %s176 = int_to_ptr.vmem [resolvable:$true] %s175
      %181 = dma.hbm_to_vmem [thread:$0]  %s174, 256, %s176, [#allocation20], 128, 128, 8
    $region61: #{tpu_custom_call.1} parent=1 // pred_fallthru
      _
    // Predicated region
    $region62: #{tpu_custom_call.1} parent=1 // pred_check
      _
    $region63: #{tpu_custom_call.1} parent=1 // pred_check_branch
      %183 = sbr.rel (0) target = $region65
    $region64: #{tpu_custom_call.1} parent=1 // pred_region
      %185 = vsyncadd [#allocation20], 0
      %s187 = sshll.u32 %s15, 4
      %s188 = int_to_ptr.hbm [resolvable:$true] %s187
      %s189 = sshll.u32 [#allocation21], 4
      %s190 = int_to_ptr.vmem [resolvable:$true] %s189
      %192 = dma.hbm_to_vmem [thread:$0]  %s188, 16, %s190, [#allocation20]
    $region65: #{tpu_custom_call.1} parent=1 // pred_fallthru
      _
    // Predicated region
    $region66: #{tpu_custom_call.1} parent=1 // pred_check
      _
    $region67: #{tpu_custom_call.1} parent=1 // pred_check_branch
      %194 = sbr.rel (0) target = $region69
    $region68: #{tpu_custom_call.1} parent=1 // pred_region
      %196 = vsyncadd [#allocation23], 0
      %s197 = sshll.u32 %s16, 4
      %s198 = int_to_ptr.hbm [resolvable:$true] %s197
      %s199 = sshll.u32 [#allocation22], 4
      %s200 = int_to_ptr.vmem [resolvable:$true] %s199
      %205 = dma.hbm_to_vmem [thread:$0]  %s198, 1792, %s200, [#allocation23], 896, 896, 56
    $region69: #{tpu_custom_call.1} parent=1 // pred_fallthru
      _
    // Predicated region
    $region70: #{tpu_custom_call.1} parent=1 // pred_check
      _
    $region71: #{tpu_custom_call.1} parent=1 // pred_check_branch
      %207 = sbr.rel (0) target = $region73
    $region72: #{tpu_custom_call.1} parent=1 // pred_region
      %209 = vsyncadd [#allocation23], 0
      %s211 = sshll.u32 %s17, 4
      %s212 = int_to_ptr.hbm [resolvable:$true] %s211
      %s213 = sshll.u32 [#allocation24], 4
      %s214 = int_to_ptr.vmem [resolvable:$true] %s213
      %216 = dma.hbm_to_vmem [thread:$0]  %s212, 112, %s214, [#allocation23]
    $region73: #{tpu_custom_call.1} parent=1 // pred_fallthru
      _
    // Predicated region
    $region74: #{tpu_custom_call.1} parent=1 // pred_check
      _
    $region75: #{tpu_custom_call.1} parent=1 // pred_check_branch
      %218 = sbr.rel (0) target = $region77
    $region76: #{tpu_custom_call.1} parent=1 // pred_region
      _
    $region77: #{tpu_custom_call.1} parent=1 // pred_fallthru
      _
    // Predicated region
    $region78: #{tpu_custom_call.1} parent=1 // pred_check
      _
    $region79: #{tpu_custom_call.1} parent=1 // pred_check_branch
      %220 = sbr.rel (0) target = $region81
    $region80: #{tpu_custom_call.1} parent=1 // pred_region
      %222 = vsyncadd [#allocation26], 0
      %s224 = sshll.u32 %s19, 4
      %s225 = int_to_ptr.hbm [resolvable:$true] %s224
      %s226 = sshll.u32 [#allocation25], 4
      %s227 = int_to_ptr.vmem [resolvable:$true] %s226
      %229 = dma.hbm_to_vmem [thread:$0]  %s225, 16, %s227, [#allocation26]
    $region81: #{tpu_custom_call.1} parent=1 // pred_fallthru
      _
    // Predicated region
    $region82: #{tpu_custom_call.1} parent=1 // pred_check
      _
    $region83: #{tpu_custom_call.1} parent=1 // pred_check_branch
      %231 = sbr.rel (0) target = $region85
    $region84: #{tpu_custom_call.1} parent=1 // pred_region
      %233 = dma.done [#allocation3], 128
    $region85: #{tpu_custom_call.1} parent=1 // pred_fallthru
      _
    // Predicated region
    $region86: #{tpu_custom_call.1} parent=1 // pred_check
      _
    $region87: #{tpu_custom_call.1} parent=1 // pred_check_branch
      %235 = sbr.rel (0) target = $region89
    $region88: #{tpu_custom_call.1} parent=1 // pred_region
      %237 = dma.done [#allocation5], 7168
    $region89: #{tpu_custom_call.1} parent=1 // pred_fallthru
      _
    // Predicated region
    $region90: #{tpu_custom_call.1} parent=1 // pred_check
      _
    $region91: #{tpu_custom_call.1} parent=1 // pred_check_branch
      %239 = sbr.rel (0) target = $region93
    $region92: #{tpu_custom_call.1} parent=1 // pred_region
      %241 = dma.done [#allocation5], 112
    $region93: #{tpu_custom_call.1} parent=1 // pred_fallthru
      _
    // Predicated region
    $region94: #{tpu_custom_call.1} parent=1 // pred_check
      _
    $region95: #{tpu_custom_call.1} parent=1 // pred_check_branch
      %243 = sbr.rel (0) target = $region97
    $region96: #{tpu_custom_call.1} parent=1 // pred_region
      %245 = dma.done [#allocation8], 89600
    $region97: #{tpu_custom_call.1} parent=1 // pred_fallthru
      _
    // Predicated region
    $region98: #{tpu_custom_call.1} parent=1 // pred_check
      _
    $region99: #{tpu_custom_call.1} parent=1 // pred_check_branch
      %247 = sbr.rel (0) target = $region101
    $region100: #{tpu_custom_call.1} parent=1 // pred_region
      %249 = dma.done [#allocation8], 112
    $region101: #{tpu_custom_call.1} parent=1 // pred_fallthru
      _
    // Predicated region
    $region102: #{tpu_custom_call.1} parent=1 // pred_check
      _
    $region103: #{tpu_custom_call.1} parent=1 // pred_check_branch
      %251 = sbr.rel (0) target = $region105
    $region104: #{tpu_custom_call.1} parent=1 // pred_region
      %253 = dma.done [#allocation11], 16
    $region105: #{tpu_custom_call.1} parent=1 // pred_fallthru
      _
    // Predicated region
    $region106: #{tpu_custom_call.1} parent=1 // pred_check
      _
    $region107: #{tpu_custom_call.1} parent=1 // pred_check_branch
      %255 = sbr.rel (0) target = $region109
    $region108: #{tpu_custom_call.1} parent=1 // pred_region
      %257 = dma.done [#allocation11], 16
    $region109: #{tpu_custom_call.1} parent=1 // pred_fallthru
      _
    // Predicated region
    $region110: #{tpu_custom_call.1} parent=1 // pred_check
      _
    $region111: #{tpu_custom_call.1} parent=1 // pred_check_branch
      %259 = sbr.rel (0) target = $region113
    $region112: #{tpu_custom_call.1} parent=1 // pred_region
      %261 = dma.done [#allocation14], 256
    $region113: #{tpu_custom_call.1} parent=1 // pred_fallthru
      _
    // Predicated region
    $region114: #{tpu_custom_call.1} parent=1 // pred_check
      _
    $region115: #{tpu_custom_call.1} parent=1 // pred_check_branch
      %263 = sbr.rel (0) target = $region117
    $region116: #{tpu_custom_call.1} parent=1 // pred_region
      %265 = dma.done [#allocation14], 16
    $region117: #{tpu_custom_call.1} parent=1 // pred_fallthru
      _
    // Predicated region
    $region118: #{tpu_custom_call.1} parent=1 // pred_check
      _
    $region119: #{tpu_custom_call.1} parent=1 // pred_check_branch
      %267 = sbr.rel (0) target = $region121
    $region120: #{tpu_custom_call.1} parent=1 // pred_region
      %269 = dma.done [#allocation17], 256
    $region121: #{tpu_custom_call.1} parent=1 // pred_fallthru
      _
    // Predicated region
    $region122: #{tpu_custom_call.1} parent=1 // pred_check
      _
    $region123: #{tpu_custom_call.1} parent=1 // pred_check_branch
      %271 = sbr.rel (0) target = $region125
    $region124: #{tpu_custom_call.1} parent=1 // pred_region
      %273 = dma.done [#allocation17], 16
    $region125: #{tpu_custom_call.1} parent=1 // pred_fallthru
      _
    // Predicated region
    $region126: #{tpu_custom_call.1} parent=1 // pred_check
      _
    $region127: #{tpu_custom_call.1} parent=1 // pred_check_branch
      %275 = sbr.rel (0) target = $region129
    $region128: #{tpu_custom_call.1} parent=1 // pred_region
      %277 = dma.done [#allocation20], 256
    $region129: #{tpu_custom_call.1} parent=1 // pred_fallthru
      _
    // Predicated region
    $region130: #{tpu_custom_call.1} parent=1 // pred_check
      _
    $region131: #{tpu_custom_call.1} parent=1 // pred_check_branch
      %279 = sbr.rel (0) target = $region133
    $region132: #{tpu_custom_call.1} parent=1 // pred_region
      %281 = dma.done [#allocation20], 16
    $region133: #{tpu_custom_call.1} parent=1 // pred_fallthru
      _
    // Predicated region
    $region134: #{tpu_custom_call.1} parent=1 // pred_check
      _
    $region135: #{tpu_custom_call.1} parent=1 // pred_check_branch
      %283 = sbr.rel (0) target = $region137
    $region136: #{tpu_custom_call.1} parent=1 // pred_region
      %285 = dma.done [#allocation23], 1792
    $region137: #{tpu_custom_call.1} parent=1 // pred_fallthru
      _
    // Predicated region
    $region138: #{tpu_custom_call.1} parent=1 // pred_check
      _
    $region139: #{tpu_custom_call.1} parent=1 // pred_check_branch
      %287 = sbr.rel (0) target = $region141
    $region140: #{tpu_custom_call.1} parent=1 // pred_region
      %289 = dma.done [#allocation23], 112
    $region141: #{tpu_custom_call.1} parent=1 // pred_fallthru
      _
    // Predicated region
    $region142: #{tpu_custom_call.1} parent=1 // pred_check
      _
    $region143: #{tpu_custom_call.1} parent=1 // pred_check_branch
      %291 = sbr.rel (0) target = $region145
    $region144: #{tpu_custom_call.1} parent=1 // pred_region
      %293 = dma.done [#allocation26], 16
    $region145: #{tpu_custom_call.1} parent=1 // pred_fallthru
      _
    %v294 = vld [vmem:[#allocation2] sm:$0xff]
    %v295 = vld [vmem:[#allocation4] sm:$0xff]
    %v296 = vld [vmem:[#allocation4 + $0x8] sm:$0xff]
    %v297 = vld [vmem:[#allocation4 + $0x10] sm:$0xff]
    %v298 = vld [vmem:[#allocation4 + $0x18] sm:$0xff]
    %v299 = vld [vmem:[#allocation4 + $0x20] sm:$0xff]
    %v300 = vld [vmem:[#allocation4 + $0x28] sm:$0xff]
    %v301 = vld [vmem:[#allocation4 + $0x30] sm:$0xff]
    %v302 = vld [vmem:[#allocation4 + $0x38] sm:$0xff]
    %v303 = vld [vmem:[#allocation4 + $0x40] sm:$0xff]
    %v304 = vld [vmem:[#allocation4 + $0x48] sm:$0xff]
    %v305 = vld [vmem:[#allocation4 + $0x50] sm:$0xff]
    %v306 = vld [vmem:[#allocation4 + $0x58] sm:$0xff]
    %v307 = vld [vmem:[#allocation4 + $0x60] sm:$0xff]
    %v308 = vld [vmem:[#allocation4 + $0x68] sm:$0xff]
    %v309 = vld [vmem:[#allocation4 + $0x70] sm:$0xff]
    %v310 = vld [vmem:[#allocation4 + $0x78] sm:$0xff]
    %v311 = vld [vmem:[#allocation4 + $0x80] sm:$0xff]
    %v312 = vld [vmem:[#allocation4 + $0x88] sm:$0xff]
    %v313 = vld [vmem:[#allocation4 + $0x90] sm:$0xff]
    %v314 = vld [vmem:[#allocation4 + $0x98] sm:$0xff]
    %v315 = vld [vmem:[#allocation4 + $0xa0] sm:$0xff]
    %v316 = vld [vmem:[#allocation4 + $0xa8] sm:$0xff]
    %v317 = vld [vmem:[#allocation4 + $0xb0] sm:$0xff]
    %v318 = vld [vmem:[#allocation4 + $0xb8] sm:$0xff]
    %v319 = vld [vmem:[#allocation4 + $0xc0] sm:$0xff]
    %v320 = vld [vmem:[#allocation4 + $0xc8] sm:$0xff]
    %v321 = vld [vmem:[#allocation4 + $0xd0] sm:$0xff]
    %v322 = vld [vmem:[#allocation4 + $0xd8] sm:$0xff]
    %v323 = vld [vmem:[#allocation4 + $0xe0] sm:$0xff]
    %v324 = vld [vmem:[#allocation4 + $0xe8] sm:$0xff]
    %v325 = vld [vmem:[#allocation4 + $0xf0] sm:$0xff]
    %v326 = vld [vmem:[#allocation4 + $0xf8] sm:$0xff]
    %v327 = vld [vmem:[#allocation4 + $0x100] sm:$0xff]
    %v328 = vld [vmem:[#allocation4 + $0x108] sm:$0xff]
    %v329 = vld [vmem:[#allocation4 + $0x110] sm:$0xff]
    %v330 = vld [vmem:[#allocation4 + $0x118] sm:$0xff]
    %v331 = vld [vmem:[#allocation4 + $0x120] sm:$0xff]
    %v332 = vld [vmem:[#allocation4 + $0x128] sm:$0xff]
    %v333 = vld [vmem:[#allocation4 + $0x130] sm:$0xff]
    %v334 = vld [vmem:[#allocation4 + $0x138] sm:$0xff]
    %v335 = vld [vmem:[#allocation4 + $0x140] sm:$0xff]
    %v336 = vld [vmem:[#allocation4 + $0x148] sm:$0xff]
    %v337 = vld [vmem:[#allocation4 + $0x150] sm:$0xff]
    %v338 = vld [vmem:[#allocation4 + $0x158] sm:$0xff]
    %v339 = vld [vmem:[#allocation4 + $0x160] sm:$0xff]
    %v340 = vld [vmem:[#allocation4 + $0x168] sm:$0xff]
    %v341 = vld [vmem:[#allocation4 + $0x170] sm:$0xff]
    %v342 = vld [vmem:[#allocation4 + $0x178] sm:$0xff]
    %v343 = vld [vmem:[#allocation4 + $0x180] sm:$0xff]
    %v344 = vld [vmem:[#allocation4 + $0x188] sm:$0xff]
    %v345 = vld [vmem:[#allocation4 + $0x190] sm:$0xff]
    %v346 = vld [vmem:[#allocation4 + $0x198] sm:$0xff]
    %v347 = vld [vmem:[#allocation4 + $0x1a0] sm:$0xff]
    %v348 = vld [vmem:[#allocation4 + $0x1a8] sm:$0xff]
    %v349 = vld [vmem:[#allocation4 + $0x1b0] sm:$0xff]
    %v350 = vld [vmem:[#allocation4 + $0x1b8] sm:$0xff]
    %v351 = vld [vmem:[#allocation6] sm:$0x7f]
    %v353 = vperm.slane %v351, 0
    %v354 = vperm.slane %v351, 1
    %v355 = vperm.slane %v351, 2
    %v356 = vperm.slane %v351, 3
    %v357 = vperm.slane %v351, 4
    %v358 = vperm.slane %v351, 5
    %v359 = vperm.slane %v351, 6
    %vm367 = vcmask 523264
    %v369 = vsel %vm367, %v294, 0
    %371 = vmatpush.msra.mxu0 0.0
    %372 = vmatpush.msra.mxu0 0.0
    %373 = vmatpush.msra.mxu0 0.0
    %374 = vmatpush.msra.mxu0 0.0
    %375 = vmatpush.msra.mxu0 0.0
    %376 = vmatpush.msra.mxu0 0.0
    %377 = vmatpush.msra.mxu0 0.0
    %378 = vmatpush.msra.mxu0 0.0
    %379 = vmatpush.msra.mxu0 %v344
    %380 = vmatpush.msra.mxu0 %v337
    %381 = vmatpush.msra.mxu0 %v330
    %382 = vmatpush.msra.mxu0 %v323
    %383 = vmatpush.msra.mxu0 %v316
    %384 = vmatpush.msra.mxu0 %v309
    %385 = vmatpush.msra.mxu0 %v302
    %386 = vmatpush.msra.mxu0 %v295
    %387 = vmatmul.f32.gmra.mxu0 %v369
    %v388 = vpop.f32.mrf.mxu0
    %v389 = vadd.f32 %v353, %v388
    %390 = vdwg.mxu0
    %391 = vmatpush.msra.mxu0 0.0
    %392 = vmatpush.msra.mxu0 0.0
    %393 = vmatpush.msra.mxu0 0.0
    %394 = vmatpush.msra.mxu0 0.0
    %395 = vmatpush.msra.mxu0 0.0
    %396 = vmatpush.msra.mxu0 0.0
    %397 = vmatpush.msra.mxu0 0.0
    %398 = vmatpush.msra.mxu0 0.0
    %399 = vmatpush.msra.mxu0 %v345
    %400 = vmatpush.msra.mxu0 %v338
    %401 = vmatpush.msra.mxu0 %v331
    %402 = vmatpush.msra.mxu0 %v324
    %403 = vmatpush.msra.mxu0 %v317
    %404 = vmatpush.msra.mxu0 %v310
    %405 = vmatpush.msra.mxu0 %v303
    %406 = vmatpush.msra.mxu0 %v296
    %407 = vmatmul.f32.gmra.mxu0 %v369
    %v408 = vpop.f32.mrf.mxu0
    %v409 = vadd.f32 %v354, %v408
    %410 = vdwg.mxu0
    %411 = vmatpush.msra.mxu0 0.0
    %412 = vmatpush.msra.mxu0 0.0
    %413 = vmatpush.msra.mxu0 0.0
    %414 = vmatpush.msra.mxu0 0.0
    %415 = vmatpush.msra.mxu0 0.0
    %416 = vmatpush.msra.mxu0 0.0
    %417 = vmatpush.msra.mxu0 0.0
    %418 = vmatpush.msra.mxu0 0.0
    %419 = vmatpush.msra.mxu0 %v346
    %420 = vmatpush.msra.mxu0 %v339
    %421 = vmatpush.msra.mxu0 %v332
    %422 = vmatpush.msra.mxu0 %v325
    %423 = vmatpush.msra.mxu0 %v318
    %424 = vmatpush.msra.mxu0 %v311
    %425 = vmatpush.msra.mxu0 %v304
    %426 = vmatpush.msra.mxu0 %v297
    %427 = vmatmul.f32.gmra.mxu0 %v369
    %v428 = vpop.f32.mrf.mxu0
    %v429 = vadd.f32 %v355, %v428
    %430 = vdwg.mxu0
    %431 = vmatpush.msra.mxu0 0.0
    %432 = vmatpush.msra.mxu0 0.0
    %433 = vmatpush.msra.mxu0 0.0
    %434 = vmatpush.msra.mxu0 0.0
    %435 = vmatpush.msra.mxu0 0.0
    %436 = vmatpush.msra.mxu0 0.0
    %437 = vmatpush.msra.mxu0 0.0
    %438 = vmatpush.msra.mxu0 0.0
    %439 = vmatpush.msra.mxu0 %v347
    %440 = vmatpush.msra.mxu0 %v340
    %441 = vmatpush.msra.mxu0 %v333
    %442 = vmatpush.msra.mxu0 %v326
    %443 = vmatpush.msra.mxu0 %v319
    %444 = vmatpush.msra.mxu0 %v312
    %445 = vmatpush.msra.mxu0 %v305
    %446 = vmatpush.msra.mxu0 %v298
    %447 = vmatmul.f32.gmra.mxu0 %v369
    %v448 = vpop.f32.mrf.mxu0
    %v449 = vadd.f32 %v356, %v448
    %450 = vdwg.mxu0
    %451 = vmatpush.msra.mxu0 0.0
    %452 = vmatpush.msra.mxu0 0.0
    %453 = vmatpush.msra.mxu0 0.0
    %454 = vmatpush.msra.mxu0 0.0
    %455 = vmatpush.msra.mxu0 0.0
    %456 = vmatpush.msra.mxu0 0.0
    %457 = vmatpush.msra.mxu0 0.0
    %458 = vmatpush.msra.mxu0 0.0
    %459 = vmatpush.msra.mxu0 %v348
    %460 = vmatpush.msra.mxu0 %v341
    %461 = vmatpush.msra.mxu0 %v334
    %462 = vmatpush.msra.mxu0 %v327
    %463 = vmatpush.msra.mxu0 %v320
    %464 = vmatpush.msra.mxu0 %v313
    %465 = vmatpush.msra.mxu0 %v306
    %466 = vmatpush.msra.mxu0 %v299
    %467 = vmatmul.f32.gmra.mxu0 %v369
    %v468 = vpop.f32.mrf.mxu0
    %v469 = vadd.f32 %v357, %v468
    %470 = vdwg.mxu0
    %471 = vmatpush.msra.mxu0 0.0
    %472 = vmatpush.msra.mxu0 0.0
    %473 = vmatpush.msra.mxu0 0.0
    %474 = vmatpush.msra.mxu0 0.0
    %475 = vmatpush.msra.mxu0 0.0
    %476 = vmatpush.msra.mxu0 0.0
    %477 = vmatpush.msra.mxu0 0.0
    %478 = vmatpush.msra.mxu0 0.0
    %479 = vmatpush.msra.mxu0 %v349
    %480 = vmatpush.msra.mxu0 %v342
    %481 = vmatpush.msra.mxu0 %v335
    %482 = vmatpush.msra.mxu0 %v328
    %483 = vmatpush.msra.mxu0 %v321
    %484 = vmatpush.msra.mxu0 %v314
    %485 = vmatpush.msra.mxu0 %v307
    %486 = vmatpush.msra.mxu0 %v300
    %487 = vmatmul.f32.gmra.mxu0 %v369
    %v488 = vpop.f32.mrf.mxu0
    %v489 = vadd.f32 %v358, %v488
    %490 = vdwg.mxu0
    %491 = vmatpush.msra.mxu0 0.0
    %492 = vmatpush.msra.mxu0 0.0
    %493 = vmatpush.msra.mxu0 0.0
    %494 = vmatpush.msra.mxu0 0.0
    %495 = vmatpush.msra.mxu0 0.0
    %496 = vmatpush.msra.mxu0 0.0
    %497 = vmatpush.msra.mxu0 0.0
    %498 = vmatpush.msra.mxu0 0.0
    %499 = vmatpush.msra.mxu0 %v350
    %500 = vmatpush.msra.mxu0 %v343
    %501 = vmatpush.msra.mxu0 %v336
    %502 = vmatpush.msra.mxu0 %v329
    %503 = vmatpush.msra.mxu0 %v322
    %504 = vmatpush.msra.mxu0 %v315
    %505 = vmatpush.msra.mxu0 %v308
    %506 = vmatpush.msra.mxu0 %v301
    %507 = vmatmul.f32.gmra.mxu0 %v369
    %v508 = vpop.f32.mrf.mxu0
    %v509 = vadd.f32 %v359, %v508
    %510 = vdwg.mxu0
    %v511 = vmax.f32 %v389, 0.0
    %v512 = vmax.f32 %v409, 0.0
    %v513 = vmax.f32 %v429, 0.0
    %v514 = vmax.f32 %v449, 0.0
    %v515 = vmax.f32 %v469, 0.0
    %v516 = vmax.f32 %v489, 0.0
    %v517 = vmax.f32 %v509, 0.0
    %v518 = vld [vmem:[#allocation7] sm:$0xff]
    %v519 = vld [vmem:[#allocation7 + $0x8] sm:$0xff]
    %v520 = vld [vmem:[#allocation7 + $0x10] sm:$0xff]
    %v521 = vld [vmem:[#allocation7 + $0x18] sm:$0xff]
    %v522 = vld [vmem:[#allocation7 + $0x20] sm:$0xff]
    %v523 = vld [vmem:[#allocation7 + $0x28] sm:$0xff]
    %v524 = vld [vmem:[#allocation7 + $0x30] sm:$0xff]
    %v525 = vld [vmem:[#allocation7 + $0x38] sm:$0xff]
    %v526 = vld [vmem:[#allocation7 + $0x40] sm:$0xff]
    %v527 = vld [vmem:[#allocation7 + $0x48] sm:$0xff]
    %v528 = vld [vmem:[#allocation7 + $0x50] sm:$0xff]
    %v529 = vld [vmem:[#allocation7 + $0x58] sm:$0xff]
    %v530 = vld [vmem:[#allocation7 + $0x60] sm:$0xff]
    %v531 = vld [vmem:[#allocation7 + $0x68] sm:$0xff]
    %v532 = vld [vmem:[#allocation7 + $0x70] sm:$0xff]
    %v533 = vld [vmem:[#allocation7 + $0x78] sm:$0xff]
    %v534 = vld [vmem:[#allocation7 + $0x80] sm:$0xff]
    %v535 = vld [vmem:[#allocation7 + $0x88] sm:$0xff]
    %v536 = vld [vmem:[#allocation7 + $0x90] sm:$0xff]
    %v537 = vld [vmem:[#allocation7 + $0x98] sm:$0xff]
    %v538 = vld [vmem:[#allocation7 + $0xa0] sm:$0xff]
    %v539 = vld [vmem:[#allocation7 + $0xa8] sm:$0xff]
    %v540 = vld [vmem:[#allocation7 + $0xb0] sm:$0xff]
    %v541 = vld [vmem:[#allocation7 + $0xb8] sm:$0xff]
    %v542 = vld [vmem:[#allocation7 + $0xc0] sm:$0xff]
    %v543 = vld [vmem:[#allocation7 + $0xc8] sm:$0xff]
    %v544 = vld [vmem:[#allocation7 + $0xd0] sm:$0xff]
    %v545 = vld [vmem:[#allocation7 + $0xd8] sm:$0xff]
    %v546 = vld [vmem:[#allocation7 + $0xe0] sm:$0xff]
    %v547 = vld [vmem:[#allocation7 + $0xe8] sm:$0xff]
    %v548 = vld [vmem:[#allocation7 + $0xf0] sm:$0xff]
    %v549 = vld [vmem:[#allocation7 + $0xf8] sm:$0xff]
    %v550 = vld [vmem:[#allocation7 + $0x100] sm:$0xff]
    %v551 = vld [vmem:[#allocation7 + $0x108] sm:$0xff]
    %v552 = vld [vmem:[#allocation7 + $0x110] sm:$0xff]
    %v553 = vld [vmem:[#allocation7 + $0x118] sm:$0xff]
    %v554 = vld [vmem:[#allocation7 + $0x120] sm:$0xff]
    %v555 = vld [vmem:[#allocation7 + $0x128] sm:$0xff]
    %v556 = vld [vmem:[#allocation7 + $0x130] sm:$0xff]
    %v557 = vld [vmem:[#allocation7 + $0x138] sm:$0xff]
    %v558 = vld [vmem:[#allocation7 + $0x140] sm:$0xff]
    %v559 = vld [vmem:[#allocation7 + $0x148] sm:$0xff]
    %v560 = vld [vmem:[#allocation7 + $0x150] sm:$0xff]
    %v561 = vld [vmem:[#allocation7 + $0x158] sm:$0xff]
    %v562 = vld [vmem:[#allocation7 + $0x160] sm:$0xff]
    %v563 = vld [vmem:[#allocation7 + $0x168] sm:$0xff]
    %v564 = vld [vmem:[#allocation7 + $0x170] sm:$0xff]
    %v565 = vld [vmem:[#allocation7 + $0x178] sm:$0xff]
    %v566 = vld [vmem:[#allocation7 + $0x180] sm:$0xff]
    %v567 = vld [vmem:[#allocation7 + $0x188] sm:$0xff]
    %v568 = vld [vmem:[#allocation7 + $0x190] sm:$0xff]
    %v569 = vld [vmem:[#allocation7 + $0x198] sm:$0xff]
    %v570 = vld [vmem:[#allocation7 + $0x1a0] sm:$0xff]
    %v571 = vld [vmem:[#allocation7 + $0x1a8] sm:$0xff]
    %v572 = vld [vmem:[#allocation7 + $0x1b0] sm:$0xff]
    %v573 = vld [vmem:[#allocation7 + $0x1b8] sm:$0xff]
    %v574 = vld [vmem:[#allocation7 + $0x1c0] sm:$0xff]
    %v575 = vld [vmem:[#allocation7 + $0x1c8] sm:$0xff]
    %v576 = vld [vmem:[#allocation7 + $0x1d0] sm:$0xff]
    %v577 = vld [vmem:[#allocation7 + $0x1d8] sm:$0xff]
    %v578 = vld [vmem:[#allocation7 + $0x1e0] sm:$0xff]
    %v579 = vld [vmem:[#allocation7 + $0x1e8] sm:$0xff]
    %v580 = vld [vmem:[#allocation7 + $0x1f0] sm:$0xff]
    %v581 = vld [vmem:[#allocation7 + $0x1f8] sm:$0xff]
    %v582 = vld [vmem:[#allocation7 + $0x200] sm:$0xff]
    %v583 = vld [vmem:[#allocation7 + $0x208] sm:$0xff]
    %v584 = vld [vmem:[#allocation7 + $0x210] sm:$0xff]
    %v585 = vld [vmem:[#allocation7 + $0x218] sm:$0xff]
    %v586 = vld [vmem:[#allocation7 + $0x220] sm:$0xff]
    %v587 = vld [vmem:[#allocation7 + $0x228] sm:$0xff]
    %v588 = vld [vmem:[#allocation7 + $0x230] sm:$0xff]
    %v589 = vld [vmem:[#allocation7 + $0x238] sm:$0xff]
    %v590 = vld [vmem:[#allocation7 + $0x240] sm:$0xff]
    %v591 = vld [vmem:[#allocation7 + $0x248] sm:$0xff]
    %v592 = vld [vmem:[#allocation7 + $0x250] sm:$0xff]
    %v593 = vld [vmem:[#allocation7 + $0x258] sm:$0xff]
    %v594 = vld [vmem:[#allocation7 + $0x260] sm:$0xff]
    %v595 = vld [vmem:[#allocation7 + $0x268] sm:$0xff]
    %v596 = vld [vmem:[#allocation7 + $0x270] sm:$0xff]
    %v597 = vld [vmem:[#allocation7 + $0x278] sm:$0xff]
    %v598 = vld [vmem:[#allocation7 + $0x280] sm:$0xff]
    %v599 = vld [vmem:[#allocation7 + $0x288] sm:$0xff]
    %v600 = vld [vmem:[#allocation7 + $0x290] sm:$0xff]
    %v601 = vld [vmem:[#allocation7 + $0x298] sm:$0xff]
    %v602 = vld [vmem:[#allocation7 + $0x2a0] sm:$0xff]
    %v603 = vld [vmem:[#allocation7 + $0x2a8] sm:$0xff]
    %v604 = vld [vmem:[#allocation7 + $0x2b0] sm:$0xff]
    %v605 = vld [vmem:[#allocation7 + $0x2b8] sm:$0xff]
    %v606 = vld [vmem:[#allocation7 + $0x2c0] sm:$0xff]
    %v607 = vld [vmem:[#allocation7 + $0x2c8] sm:$0xff]
    %v608 = vld [vmem:[#allocation7 + $0x2d0] sm:$0xff]
    %v609 = vld [vmem:[#allocation7 + $0x2d8] sm:$0xff]
    %v610 = vld [vmem:[#allocation7 + $0x2e0] sm:$0xff]
    %v611 = vld [vmem:[#allocation7 + $0x2e8] sm:$0xff]
    %v612 = vld [vmem:[#allocation7 + $0x2f0] sm:$0xff]
    %v613 = vld [vmem:[#allocation7 + $0x2f8] sm:$0xff]
    %v614 = vld [vmem:[#allocation7 + $0x300] sm:$0xff]
    %v615 = vld [vmem:[#allocation7 + $0x308] sm:$0xff]
    %v616 = vld [vmem:[#allocation7 + $0x310] sm:$0xff]
    %v617 = vld [vmem:[#allocation7 + $0x318] sm:$0xff]
    %v618 = vld [vmem:[#allocation7 + $0x320] sm:$0xff]
    %v619 = vld [vmem:[#allocation7 + $0x328] sm:$0xff]
    %v620 = vld [vmem:[#allocation7 + $0x330] sm:$0xff]
    %v621 = vld [vmem:[#allocation7 + $0x338] sm:$0xff]
    %v622 = vld [vmem:[#allocation7 + $0x340] sm:$0xff]
    %v623 = vld [vmem:[#allocation7 + $0x348] sm:$0xff]
    %v624 = vld [vmem:[#allocation7 + $0x350] sm:$0xff]
    %v625 = vld [vmem:[#allocation7 + $0x358] sm:$0xff]
    %v626 = vld [vmem:[#allocation7 + $0x360] sm:$0xff]
    %v627 = vld [vmem:[#allocation7 + $0x368] sm:$0xff]
    %v628 = vld [vmem:[#allocation7 + $0x370] sm:$0xff]
    %v629 = vld [vmem:[#allocation7 + $0x378] sm:$0xff]
    %v630 = vld [vmem:[#allocation7 + $0x380] sm:$0xff]
    %v631 = vld [vmem:[#allocation7 + $0x388] sm:$0xff]
    %v632 = vld [vmem:[#allocation7 + $0x390] sm:$0xff]
    %v633 = vld [vmem:[#allocation7 + $0x398] sm:$0xff]
    %v634 = vld [vmem:[#allocation7 + $0x3a0] sm:$0xff]
    %v635 = vld [vmem:[#allocation7 + $0x3a8] sm:$0xff]
    %v636 = vld [vmem:[#allocation7 + $0x3b0] sm:$0xff]
    %v637 = vld [vmem:[#allocation7 + $0x3b8] sm:$0xff]
    %v638 = vld [vmem:[#allocation7 + $0x3c0] sm:$0xff]
    %v639 = vld [vmem:[#allocation7 + $0x3c8] sm:$0xff]
    %v640 = vld [vmem:[#allocation7 + $0x3d0] sm:$0xff]
    %v641 = vld [vmem:[#allocation7 + $0x3d8] sm:$0xff]
    %v642 = vld [vmem:[#allocation7 + $0x3e0] sm:$0xff]
    %v643 = vld [vmem:[#allocation7 + $0x3e8] sm:$0xff]
    %v644 = vld [vmem:[#allocation7 + $0x3f0] sm:$0xff]
    %v645 = vld [vmem:[#allocation7 + $0x3f8] sm:$0xff]
    %v646 = vld [vmem:[#allocation7 + $0x400] sm:$0xff]
    %v647 = vld [vmem:[#allocation7 + $0x408] sm:$0xff]
    %v648 = vld [vmem:[#allocation7 + $0x410] sm:$0xff]
    %v649 = vld [vmem:[#allocation7 + $0x418] sm:$0xff]
    %v650 = vld [vmem:[#allocation7 + $0x420] sm:$0xff]
    %v651 = vld [vmem:[#allocation7 + $0x428] sm:$0xff]
    %v652 = vld [vmem:[#allocation7 + $0x430] sm:$0xff]
    %v653 = vld [vmem:[#allocation7 + $0x438] sm:$0xff]
    %v654 = vld [vmem:[#allocation7 + $0x440] sm:$0xff]
    %v655 = vld [vmem:[#allocation7 + $0x448] sm:$0xff]
    %v656 = vld [vmem:[#allocation7 + $0x450] sm:$0xff]
    %v657 = vld [vmem:[#allocation7 + $0x458] sm:$0xff]
    %v658 = vld [vmem:[#allocation7 + $0x460] sm:$0xff]
    %v659 = vld [vmem:[#allocation7 + $0x468] sm:$0xff]
    %v660 = vld [vmem:[#allocation7 + $0x470] sm:$0xff]
    %v661 = vld [vmem:[#allocation7 + $0x478] sm:$0xff]
    %v662 = vld [vmem:[#allocation7 + $0x480] sm:$0xff]
    %v663 = vld [vmem:[#allocation7 + $0x488] sm:$0xff]
    %v664 = vld [vmem:[#allocation7 + $0x490] sm:$0xff]
    %v665 = vld [vmem:[#allocation7 + $0x498] sm:$0xff]
    %v666 = vld [vmem:[#allocation7 + $0x4a0] sm:$0xff]
    %v667 = vld [vmem:[#allocation7 + $0x4a8] sm:$0xff]
    %v668 = vld [vmem:[#allocation7 + $0x4b0] sm:$0xff]
    %v669 = vld [vmem:[#allocation7 + $0x4b8] sm:$0xff]
    %v670 = vld [vmem:[#allocation7 + $0x4c0] sm:$0xff]
    %v671 = vld [vmem:[#allocation7 + $0x4c8] sm:$0xff]
    %v672 = vld [vmem:[#allocation7 + $0x4d0] sm:$0xff]
    %v673 = vld [vmem:[#allocation7 + $0x4d8] sm:$0xff]
    %v674 = vld [vmem:[#allocation7 + $0x4e0] sm:$0xff]
    %v675 = vld [vmem:[#allocation7 + $0x4e8] sm:$0xff]
    %v676 = vld [vmem:[#allocation7 + $0x4f0] sm:$0xff]
    %v677 = vld [vmem:[#allocation7 + $0x4f8] sm:$0xff]
    %v678 = vld [vmem:[#allocation7 + $0x500] sm:$0xff]
    %v679 = vld [vmem:[#allocation7 + $0x508] sm:$0xff]
    %v680 = vld [vmem:[#allocation7 + $0x510] sm:$0xff]
    %v681 = vld [vmem:[#allocation7 + $0x518] sm:$0xff]
    %v682 = vld [vmem:[#allocation7 + $0x520] sm:$0xff]
    %v683 = vld [vmem:[#allocation7 + $0x528] sm:$0xff]
    %v684 = vld [vmem:[#allocation7 + $0x530] sm:$0xff]
    %v685 = vld [vmem:[#allocation7 + $0x538] sm:$0xff]
    %v686 = vld [vmem:[#allocation7 + $0x540] sm:$0xff]
    %v687 = vld [vmem:[#allocation7 + $0x548] sm:$0xff]
    %v688 = vld [vmem:[#allocation7 + $0x550] sm:$0xff]
    %v689 = vld [vmem:[#allocation7 + $0x558] sm:$0xff]
    %v690 = vld [vmem:[#allocation7 + $0x560] sm:$0xff]
    %v691 = vld [vmem:[#allocation7 + $0x568] sm:$0xff]
    %v692 = vld [vmem:[#allocation7 + $0x570] sm:$0xff]
    %v693 = vld [vmem:[#allocation7 + $0x578] sm:$0xff]
    %v694 = vld [vmem:[#allocation7 + $0x580] sm:$0xff]
    %v695 = vld [vmem:[#allocation7 + $0x588] sm:$0xff]
    %v696 = vld [vmem:[#allocation7 + $0x590] sm:$0xff]
    %v697 = vld [vmem:[#allocation7 + $0x598] sm:$0xff]
    %v698 = vld [vmem:[#allocation7 + $0x5a0] sm:$0xff]
    %v699 = vld [vmem:[#allocation7 + $0x5a8] sm:$0xff]
    %v700 = vld [vmem:[#allocation7 + $0x5b0] sm:$0xff]
    %v701 = vld [vmem:[#allocation7 + $0x5b8] sm:$0xff]
    %v702 = vld [vmem:[#allocation7 + $0x5c0] sm:$0xff]
    %v703 = vld [vmem:[#allocation7 + $0x5c8] sm:$0xff]
    %v704 = vld [vmem:[#allocation7 + $0x5d0] sm:$0xff]
    %v705 = vld [vmem:[#allocation7 + $0x5d8] sm:$0xff]
    %v706 = vld [vmem:[#allocation7 + $0x5e0] sm:$0xff]
    %v707 = vld [vmem:[#allocation7 + $0x5e8] sm:$0xff]
    %v708 = vld [vmem:[#allocation7 + $0x5f0] sm:$0xff]
    %v709 = vld [vmem:[#allocation7 + $0x5f8] sm:$0xff]
    %v710 = vld [vmem:[#allocation7 + $0x600] sm:$0xff]
    %v711 = vld [vmem:[#allocation7 + $0x608] sm:$0xff]
    %v712 = vld [vmem:[#allocation7 + $0x610] sm:$0xff]
    %v713 = vld [vmem:[#allocation7 + $0x618] sm:$0xff]
    %v714 = vld [vmem:[#allocation7 + $0x620] sm:$0xff]
    %v715 = vld [vmem:[#allocation7 + $0x628] sm:$0xff]
    %v716 = vld [vmem:[#allocation7 + $0x630] sm:$0xff]
    %v717 = vld [vmem:[#allocation7 + $0x638] sm:$0xff]
    %v718 = vld [vmem:[#allocation7 + $0x640] sm:$0xff]
    %v719 = vld [vmem:[#allocation7 + $0x648] sm:$0xff]
    %v720 = vld [vmem:[#allocation7 + $0x650] sm:$0xff]
    %v721 = vld [vmem:[#allocation7 + $0x658] sm:$0xff]
    %v722 = vld [vmem:[#allocation7 + $0x660] sm:$0xff]
    %v723 = vld [vmem:[#allocation7 + $0x668] sm:$0xff]
    %v724 = vld [vmem:[#allocation7 + $0x670] sm:$0xff]
    %v725 = vld [vmem:[#allocation7 + $0x678] sm:$0xff]
    %v726 = vld [vmem:[#allocation7 + $0x680] sm:$0xff]
    %v727 = vld [vmem:[#allocation7 + $0x688] sm:$0xff]
    %v728 = vld [vmem:[#allocation7 + $0x690] sm:$0xff]
    %v729 = vld [vmem:[#allocation7 + $0x698] sm:$0xff]
    %v730 = vld [vmem:[#allocation7 + $0x6a0] sm:$0xff]
    %v731 = vld [vmem:[#allocation7 + $0x6a8] sm:$0xff]
    %v732 = vld [vmem:[#allocation7 + $0x6b0] sm:$0xff]
    %v733 = vld [vmem:[#allocation7 + $0x6b8] sm:$0xff]
    %v734 = vld [vmem:[#allocation7 + $0x6c0] sm:$0xff]
    %v735 = vld [vmem:[#allocation7 + $0x6c8] sm:$0xff]
    %v736 = vld [vmem:[#allocation7 + $0x6d0] sm:$0xff]
    %v737 = vld [vmem:[#allocation7 + $0x6d8] sm:$0xff]
    %v738 = vld [vmem:[#allocation7 + $0x6e0] sm:$0xff]
    %v739 = vld [vmem:[#allocation7 + $0x6e8] sm:$0xff]
    %v740 = vld [vmem:[#allocation7 + $0x6f0] sm:$0xff]
    %v741 = vld [vmem:[#allocation7 + $0x6f8] sm:$0xff]
    %v742 = vld [vmem:[#allocation7 + $0x700] sm:$0xff]
    %v743 = vld [vmem:[#allocation7 + $0x708] sm:$0xff]
    %v744 = vld [vmem:[#allocation7 + $0x710] sm:$0xff]
    %v745 = vld [vmem:[#allocation7 + $0x718] sm:$0xff]
    %v746 = vld [vmem:[#allocation7 + $0x720] sm:$0xff]
    %v747 = vld [vmem:[#allocation7 + $0x728] sm:$0xff]
    %v748 = vld [vmem:[#allocation7 + $0x730] sm:$0xff]
    %v749 = vld [vmem:[#allocation7 + $0x738] sm:$0xff]
    %v750 = vld [vmem:[#allocation7 + $0x740] sm:$0xff]
    %v751 = vld [vmem:[#allocation7 + $0x748] sm:$0xff]
    %v752 = vld [vmem:[#allocation7 + $0x750] sm:$0xff]
    %v753 = vld [vmem:[#allocation7 + $0x758] sm:$0xff]
    %v754 = vld [vmem:[#allocation7 + $0x760] sm:$0xff]
    %v755 = vld [vmem:[#allocation7 + $0x768] sm:$0xff]
    %v756 = vld [vmem:[#allocation7 + $0x770] sm:$0xff]
    %v757 = vld [vmem:[#allocation7 + $0x778] sm:$0xff]
    %v758 = vld [vmem:[#allocation7 + $0x780] sm:$0xff]
    %v759 = vld [vmem:[#allocation7 + $0x788] sm:$0xff]
    %v760 = vld [vmem:[#allocation7 + $0x790] sm:$0xff]
    %v761 = vld [vmem:[#allocation7 + $0x798] sm:$0xff]
    %v762 = vld [vmem:[#allocation7 + $0x7a0] sm:$0xff]
    %v763 = vld [vmem:[#allocation7 + $0x7a8] sm:$0xff]
    %v764 = vld [vmem:[#allocation7 + $0x7b0] sm:$0xff]
    %v765 = vld [vmem:[#allocation7 + $0x7b8] sm:$0xff]
    %v766 = vld [vmem:[#allocation7 + $0x7c0] sm:$0xff]
    %v767 = vld [vmem:[#allocation7 + $0x7c8] sm:$0xff]
    %v768 = vld [vmem:[#allocation7 + $0x7d0] sm:$0xff]
    %v769 = vld [vmem:[#allocation7 + $0x7d8] sm:$0xff]
    %v770 = vld [vmem:[#allocation7 + $0x7e0] sm:$0xff]
    %v771 = vld [vmem:[#allocation7 + $0x7e8] sm:$0xff]
    %v772 = vld [vmem:[#allocation7 + $0x7f0] sm:$0xff]
    %v773 = vld [vmem:[#allocation7 + $0x7f8] sm:$0xff]
    %v774 = vld [vmem:[#allocation7 + $0x800] sm:$0xff]
    %v775 = vld [vmem:[#allocation7 + $0x808] sm:$0xff]
    %v776 = vld [vmem:[#allocation7 + $0x810] sm:$0xff]
    %v777 = vld [vmem:[#allocation7 + $0x818] sm:$0xff]
    %v778 = vld [vmem:[#allocation7 + $0x820] sm:$0xff]
    %v779 = vld [vmem:[#allocation7 + $0x828] sm:$0xff]
    %v780 = vld [vmem:[#allocation7 + $0x830] sm:$0xff]
    %v781 = vld [vmem:[#allocation7 + $0x838] sm:$0xff]
    %v782 = vld [vmem:[#allocation7 + $0x840] sm:$0xff]
    %v783 = vld [vmem:[#allocation7 + $0x848] sm:$0xff]
    %v784 = vld [vmem:[#allocation7 + $0x850] sm:$0xff]
    %v785 = vld [vmem:[#allocation7 + $0x858] sm:$0xff]
    %v786 = vld [vmem:[#allocation7 + $0x860] sm:$0xff]
    %v787 = vld [vmem:[#allocation7 + $0x868] sm:$0xff]
    %v788 = vld [vmem:[#allocation7 + $0x870] sm:$0xff]
    %v789 = vld [vmem:[#allocation7 + $0x878] sm:$0xff]
    %v790 = vld [vmem:[#allocation7 + $0x880] sm:$0xff]
    %v791 = vld [vmem:[#allocation7 + $0x888] sm:$0xff]
    %v792 = vld [vmem:[#allocation7 + $0x890] sm:$0xff]
    %v793 = vld [vmem:[#allocation7 + $0x898] sm:$0xff]
    %v794 = vld [vmem:[#allocation7 + $0x8a0] sm:$0xff]
    %v795 = vld [vmem:[#allocation7 + $0x8a8] sm:$0xff]
    %v796 = vld [vmem:[#allocation7 + $0x8b0] sm:$0xff]
    %v797 = vld [vmem:[#allocation7 + $0x8b8] sm:$0xff]
    %v798 = vld [vmem:[#allocation7 + $0x8c0] sm:$0xff]
    %v799 = vld [vmem:[#allocation7 + $0x8c8] sm:$0xff]
    %v800 = vld [vmem:[#allocation7 + $0x8d0] sm:$0xff]
    %v801 = vld [vmem:[#allocation7 + $0x8d8] sm:$0xff]
    %v802 = vld [vmem:[#allocation7 + $0x8e0] sm:$0xff]
    %v803 = vld [vmem:[#allocation7 + $0x8e8] sm:$0xff]
    %v804 = vld [vmem:[#allocation7 + $0x8f0] sm:$0xff]
    %v805 = vld [vmem:[#allocation7 + $0x8f8] sm:$0xff]
    %v806 = vld [vmem:[#allocation7 + $0x900] sm:$0xff]
    %v807 = vld [vmem:[#allocation7 + $0x908] sm:$0xff]
    %v808 = vld [vmem:[#allocation7 + $0x910] sm:$0xff]
    %v809 = vld [vmem:[#allocation7 + $0x918] sm:$0xff]
    %v810 = vld [vmem:[#allocation7 + $0x920] sm:$0xff]
    %v811 = vld [vmem:[#allocation7 + $0x928] sm:$0xff]
    %v812 = vld [vmem:[#allocation7 + $0x930] sm:$0xff]
    %v813 = vld [vmem:[#allocation7 + $0x938] sm:$0xff]
    %v814 = vld [vmem:[#allocation7 + $0x940] sm:$0xff]
    %v815 = vld [vmem:[#allocation7 + $0x948] sm:$0xff]
    %v816 = vld [vmem:[#allocation7 + $0x950] sm:$0xff]
    %v817 = vld [vmem:[#allocation7 + $0x958] sm:$0xff]
    %v818 = vld [vmem:[#allocation7 + $0x960] sm:$0xff]
    %v819 = vld [vmem:[#allocation7 + $0x968] sm:$0xff]
    %v820 = vld [vmem:[#allocation7 + $0x970] sm:$0xff]
    %v821 = vld [vmem:[#allocation7 + $0x978] sm:$0xff]
    %v822 = vld [vmem:[#allocation7 + $0x980] sm:$0xff]
    %v823 = vld [vmem:[#allocation7 + $0x988] sm:$0xff]
    %v824 = vld [vmem:[#allocation7 + $0x990] sm:$0xff]
    %v825 = vld [vmem:[#allocation7 + $0x998] sm:$0xff]
    %v826 = vld [vmem:[#allocation7 + $0x9a0] sm:$0xff]
    %v827 = vld [vmem:[#allocation7 + $0x9a8] sm:$0xff]
    %v828 = vld [vmem:[#allocation7 + $0x9b0] sm:$0xff]
    %v829 = vld [vmem:[#allocation7 + $0x9b8] sm:$0xff]
    %v830 = vld [vmem:[#allocation7 + $0x9c0] sm:$0xff]
    %v831 = vld [vmem:[#allocation7 + $0x9c8] sm:$0xff]
    %v832 = vld [vmem:[#allocation7 + $0x9d0] sm:$0xff]
    %v833 = vld [vmem:[#allocation7 + $0x9d8] sm:$0xff]
    %v834 = vld [vmem:[#allocation7 + $0x9e0] sm:$0xff]
    %v835 = vld [vmem:[#allocation7 + $0x9e8] sm:$0xff]
    %v836 = vld [vmem:[#allocation7 + $0x9f0] sm:$0xff]
    %v837 = vld [vmem:[#allocation7 + $0x9f8] sm:$0xff]
    %v838 = vld [vmem:[#allocation7 + $0xa00] sm:$0xff]
    %v839 = vld [vmem:[#allocation7 + $0xa08] sm:$0xff]
    %v840 = vld [vmem:[#allocation7 + $0xa10] sm:$0xff]
    %v841 = vld [vmem:[#allocation7 + $0xa18] sm:$0xff]
    %v842 = vld [vmem:[#allocation7 + $0xa20] sm:$0xff]
    %v843 = vld [vmem:[#allocation7 + $0xa28] sm:$0xff]
    %v844 = vld [vmem:[#allocation7 + $0xa30] sm:$0xff]
    %v845 = vld [vmem:[#allocation7 + $0xa38] sm:$0xff]
    %v846 = vld [vmem:[#allocation7 + $0xa40] sm:$0xff]
    %v847 = vld [vmem:[#allocation7 + $0xa48] sm:$0xff]
    %v848 = vld [vmem:[#allocation7 + $0xa50] sm:$0xff]
    %v849 = vld [vmem:[#allocation7 + $0xa58] sm:$0xff]
    %v850 = vld [vmem:[#allocation7 + $0xa60] sm:$0xff]
    %v851 = vld [vmem:[#allocation7 + $0xa68] sm:$0xff]
    %v852 = vld [vmem:[#allocation7 + $0xa70] sm:$0xff]
    %v853 = vld [vmem:[#allocation7 + $0xa78] sm:$0xff]
    %v854 = vld [vmem:[#allocation7 + $0xa80] sm:$0xff]
    %v855 = vld [vmem:[#allocation7 + $0xa88] sm:$0xff]
    %v856 = vld [vmem:[#allocation7 + $0xa90] sm:$0xff]
    %v857 = vld [vmem:[#allocation7 + $0xa98] sm:$0xff]
    %v858 = vld [vmem:[#allocation7 + $0xaa0] sm:$0xff]
    %v859 = vld [vmem:[#allocation7 + $0xaa8] sm:$0xff]
    %v860 = vld [vmem:[#allocation7 + $0xab0] sm:$0xff]
    %v861 = vld [vmem:[#allocation7 + $0xab8] sm:$0xff]
    %v862 = vld [vmem:[#allocation7 + $0xac0] sm:$0xff]
    %v863 = vld [vmem:[#allocation7 + $0xac8] sm:$0xff]
    %v864 = vld [vmem:[#allocation7 + $0xad0] sm:$0xff]
    %v865 = vld [vmem:[#allocation7 + $0xad8] sm:$0xff]
    %v866 = vld [vmem:[#allocation7 + $0xae0] sm:$0xff]
    %v867 = vld [vmem:[#allocation7 + $0xae8] sm:$0xff]
    %v868 = vld [vmem:[#allocation7 + $0xaf0] sm:$0xff]
    %v869 = vld [vmem:[#allocation7 + $0xaf8] sm:$0xff]
    %v870 = vld [vmem:[#allocation7 + $0xb00] sm:$0xff]
    %v871 = vld [vmem:[#allocation7 + $0xb08] sm:$0xff]
    %v872 = vld [vmem:[#allocation7 + $0xb10] sm:$0xff]
    %v873 = vld [vmem:[#allocation7 + $0xb18] sm:$0xff]
    %v874 = vld [vmem:[#allocation7 + $0xb20] sm:$0xff]
    %v875 = vld [vmem:[#allocation7 + $0xb28] sm:$0xff]
    %v876 = vld [vmem:[#allocation7 + $0xb30] sm:$0xff]
    %v877 = vld [vmem:[#allocation7 + $0xb38] sm:$0xff]
    %v878 = vld [vmem:[#allocation7 + $0xb40] sm:$0xff]
    %v879 = vld [vmem:[#allocation7 + $0xb48] sm:$0xff]
    %v880 = vld [vmem:[#allocation7 + $0xb50] sm:$0xff]
    %v881 = vld [vmem:[#allocation7 + $0xb58] sm:$0xff]
    %v882 = vld [vmem:[#allocation7 + $0xb60] sm:$0xff]
    %v883 = vld [vmem:[#allocation7 + $0xb68] sm:$0xff]
    %v884 = vld [vmem:[#allocation7 + $0xb70] sm:$0xff]
    %v885 = vld [vmem:[#allocation7 + $0xb78] sm:$0xff]
    %v886 = vld [vmem:[#allocation7 + $0xb80] sm:$0xff]
    %v887 = vld [vmem:[#allocation7 + $0xb88] sm:$0xff]
    %v888 = vld [vmem:[#allocation7 + $0xb90] sm:$0xff]
    %v889 = vld [vmem:[#allocation7 + $0xb98] sm:$0xff]
    %v890 = vld [vmem:[#allocation7 + $0xba0] sm:$0xff]
    %v891 = vld [vmem:[#allocation7 + $0xba8] sm:$0xff]
    %v892 = vld [vmem:[#allocation7 + $0xbb0] sm:$0xff]
    %v893 = vld [vmem:[#allocation7 + $0xbb8] sm:$0xff]
    %v894 = vld [vmem:[#allocation7 + $0xbc0] sm:$0xff]
    %v895 = vld [vmem:[#allocation7 + $0xbc8] sm:$0xff]
    %v896 = vld [vmem:[#allocation7 + $0xbd0] sm:$0xff]
    %v897 = vld [vmem:[#allocation7 + $0xbd8] sm:$0xff]
    %v898 = vld [vmem:[#allocation7 + $0xbe0] sm:$0xff]
    %v899 = vld [vmem:[#allocation7 + $0xbe8] sm:$0xff]
    %v900 = vld [vmem:[#allocation7 + $0xbf0] sm:$0xff]
    %v901 = vld [vmem:[#allocation7 + $0xbf8] sm:$0xff]
    %v902 = vld [vmem:[#allocation7 + $0xc00] sm:$0xff]
    %v903 = vld [vmem:[#allocation7 + $0xc08] sm:$0xff]
    %v904 = vld [vmem:[#allocation7 + $0xc10] sm:$0xff]
    %v905 = vld [vmem:[#allocation7 + $0xc18] sm:$0xff]
    %v906 = vld [vmem:[#allocation7 + $0xc20] sm:$0xff]
    %v907 = vld [vmem:[#allocation7 + $0xc28] sm:$0xff]
    %v908 = vld [vmem:[#allocation7 + $0xc30] sm:$0xff]
    %v909 = vld [vmem:[#allocation7 + $0xc38] sm:$0xff]
    %v910 = vld [vmem:[#allocation7 + $0xc40] sm:$0xff]
    %v911 = vld [vmem:[#allocation7 + $0xc48] sm:$0xff]
    %v912 = vld [vmem:[#allocation7 + $0xc50] sm:$0xff]
    %v913 = vld [vmem:[#allocation7 + $0xc58] sm:$0xff]
    %v914 = vld [vmem:[#allocation7 + $0xc60] sm:$0xff]
    %v915 = vld [vmem:[#allocation7 + $0xc68] sm:$0xff]
    %v916 = vld [vmem:[#allocation7 + $0xc70] sm:$0xff]
    %v917 = vld [vmem:[#allocation7 + $0xc78] sm:$0xff]
    %v918 = vld [vmem:[#allocation7 + $0xc80] sm:$0xff]
    %v919 = vld [vmem:[#allocation7 + $0xc88] sm:$0xff]
    %v920 = vld [vmem:[#allocation7 + $0xc90] sm:$0xff]
    %v921 = vld [vmem:[#allocation7 + $0xc98] sm:$0xff]
    %v922 = vld [vmem:[#allocation7 + $0xca0] sm:$0xff]
    %v923 = vld [vmem:[#allocation7 + $0xca8] sm:$0xff]
    %v924 = vld [vmem:[#allocation7 + $0xcb0] sm:$0xff]
    %v925 = vld [vmem:[#allocation7 + $0xcb8] sm:$0xff]
    %v926 = vld [vmem:[#allocation7 + $0xcc0] sm:$0xff]
    %v927 = vld [vmem:[#allocation7 + $0xcc8] sm:$0xff]
    %v928 = vld [vmem:[#allocation7 + $0xcd0] sm:$0xff]
    %v929 = vld [vmem:[#allocation7 + $0xcd8] sm:$0xff]
    %v930 = vld [vmem:[#allocation7 + $0xce0] sm:$0xff]
    %v931 = vld [vmem:[#allocation7 + $0xce8] sm:$0xff]
    %v932 = vld [vmem:[#allocation7 + $0xcf0] sm:$0xff]
    %v933 = vld [vmem:[#allocation7 + $0xcf8] sm:$0xff]
    %v934 = vld [vmem:[#allocation7 + $0xd00] sm:$0xff]
    %v935 = vld [vmem:[#allocation7 + $0xd08] sm:$0xff]
    %v936 = vld [vmem:[#allocation7 + $0xd10] sm:$0xff]
    %v937 = vld [vmem:[#allocation7 + $0xd18] sm:$0xff]
    %v938 = vld [vmem:[#allocation7 + $0xd20] sm:$0xff]
    %v939 = vld [vmem:[#allocation7 + $0xd28] sm:$0xff]
    %v940 = vld [vmem:[#allocation7 + $0xd30] sm:$0xff]
    %v941 = vld [vmem:[#allocation7 + $0xd38] sm:$0xff]
    %v942 = vld [vmem:[#allocation7 + $0xd40] sm:$0xff]
    %v943 = vld [vmem:[#allocation7 + $0xd48] sm:$0xff]
    %v944 = vld [vmem:[#allocation7 + $0xd50] sm:$0xff]
    %v945 = vld [vmem:[#allocation7 + $0xd58] sm:$0xff]
    %v946 = vld [vmem:[#allocation7 + $0xd60] sm:$0xff]
    %v947 = vld [vmem:[#allocation7 + $0xd68] sm:$0xff]
    %v948 = vld [vmem:[#allocation7 + $0xd70] sm:$0xff]
    %v949 = vld [vmem:[#allocation7 + $0xd78] sm:$0xff]
    %v950 = vld [vmem:[#allocation7 + $0xd80] sm:$0xff]
    %v951 = vld [vmem:[#allocation7 + $0xd88] sm:$0xff]
    %v952 = vld [vmem:[#allocation7 + $0xd90] sm:$0xff]
    %v953 = vld [vmem:[#allocation7 + $0xd98] sm:$0xff]
    %v954 = vld [vmem:[#allocation7 + $0xda0] sm:$0xff]
    %v955 = vld [vmem:[#allocation7 + $0xda8] sm:$0xff]
    %v956 = vld [vmem:[#allocation7 + $0xdb0] sm:$0xff]
    %v957 = vld [vmem:[#allocation7 + $0xdb8] sm:$0xff]
    %v958 = vld [vmem:[#allocation7 + $0xdc0] sm:$0xff]
    %v959 = vld [vmem:[#allocation7 + $0xdc8] sm:$0xff]
    %v960 = vld [vmem:[#allocation7 + $0xdd0] sm:$0xff]
    %v961 = vld [vmem:[#allocation7 + $0xdd8] sm:$0xff]
    %v962 = vld [vmem:[#allocation7 + $0xde0] sm:$0xff]
    %v963 = vld [vmem:[#allocation7 + $0xde8] sm:$0xff]
    %v964 = vld [vmem:[#allocation7 + $0xdf0] sm:$0xff]
    %v965 = vld [vmem:[#allocation7 + $0xdf8] sm:$0xff]
    %v966 = vld [vmem:[#allocation7 + $0xe00] sm:$0xff]
    %v967 = vld [vmem:[#allocation7 + $0xe08] sm:$0xff]
    %v968 = vld [vmem:[#allocation7 + $0xe10] sm:$0xff]
    %v969 = vld [vmem:[#allocation7 + $0xe18] sm:$0xff]
    %v970 = vld [vmem:[#allocation7 + $0xe20] sm:$0xff]
    %v971 = vld [vmem:[#allocation7 + $0xe28] sm:$0xff]
    %v972 = vld [vmem:[#allocation7 + $0xe30] sm:$0xff]
    %v973 = vld [vmem:[#allocation7 + $0xe38] sm:$0xff]
    %v974 = vld [vmem:[#allocation7 + $0xe40] sm:$0xff]
    %v975 = vld [vmem:[#allocation7 + $0xe48] sm:$0xff]
    %v976 = vld [vmem:[#allocation7 + $0xe50] sm:$0xff]
    %v977 = vld [vmem:[#allocation7 + $0xe58] sm:$0xff]
    %v978 = vld [vmem:[#allocation7 + $0xe60] sm:$0xff]
    %v979 = vld [vmem:[#allocation7 + $0xe68] sm:$0xff]
    %v980 = vld [vmem:[#allocation7 + $0xe70] sm:$0xff]
    %v981 = vld [vmem:[#allocation7 + $0xe78] sm:$0xff]
    %v982 = vld [vmem:[#allocation7 + $0xe80] sm:$0xff]
    %v983 = vld [vmem:[#allocation7 + $0xe88] sm:$0xff]
    %v984 = vld [vmem:[#allocation7 + $0xe90] sm:$0xff]
    %v985 = vld [vmem:[#allocation7 + $0xe98] sm:$0xff]
    %v986 = vld [vmem:[#allocation7 + $0xea0] sm:$0xff]
    %v987 = vld [vmem:[#allocation7 + $0xea8] sm:$0xff]
    %v988 = vld [vmem:[#allocation7 + $0xeb0] sm:$0xff]
    %v989 = vld [vmem:[#allocation7 + $0xeb8] sm:$0xff]
    %v990 = vld [vmem:[#allocation7 + $0xec0] sm:$0xff]
    %v991 = vld [vmem:[#allocation7 + $0xec8] sm:$0xff]
    %v992 = vld [vmem:[#allocation7 + $0xed0] sm:$0xff]
    %v993 = vld [vmem:[#allocation7 + $0xed8] sm:$0xff]
    %v994 = vld [vmem:[#allocation7 + $0xee0] sm:$0xff]
    %v995 = vld [vmem:[#allocation7 + $0xee8] sm:$0xff]
    %v996 = vld [vmem:[#allocation7 + $0xef0] sm:$0xff]
    %v997 = vld [vmem:[#allocation7 + $0xef8] sm:$0xff]
    %v998 = vld [vmem:[#allocation7 + $0xf00] sm:$0xff]
    %v999 = vld [vmem:[#allocation7 + $0xf08] sm:$0xff]
    %v1000 = vld [vmem:[#allocation7 + $0xf10] sm:$0xff]
    %v1001 = vld [vmem:[#allocation7 + $0xf18] sm:$0xff]
    %v1002 = vld [vmem:[#allocation7 + $0xf20] sm:$0xff]
    %v1003 = vld [vmem:[#allocation7 + $0xf28] sm:$0xff]
    %v1004 = vld [vmem:[#allocation7 + $0xf30] sm:$0xff]
    %v1005 = vld [vmem:[#allocation7 + $0xf38] sm:$0xff]
    %v1006 = vld [vmem:[#allocation7 + $0xf40] sm:$0xff]
    %v1007 = vld [vmem:[#allocation7 + $0xf48] sm:$0xff]
    %v1008 = vld [vmem:[#allocation7 + $0xf50] sm:$0xff]
    %v1009 = vld [vmem:[#allocation7 + $0xf58] sm:$0xff]
    %v1010 = vld [vmem:[#allocation7 + $0xf60] sm:$0xff]
    %v1011 = vld [vmem:[#allocation7 + $0xf68] sm:$0xff]
    %v1012 = vld [vmem:[#allocation7 + $0xf70] sm:$0xff]
    %v1013 = vld [vmem:[#allocation7 + $0xf78] sm:$0xff]
    %v1014 = vld [vmem:[#allocation7 + $0xf80] sm:$0xff]
    %v1015 = vld [vmem:[#allocation7 + $0xf88] sm:$0xff]
    %v1016 = vld [vmem:[#allocation7 + $0xf90] sm:$0xff]
    %v1017 = vld [vmem:[#allocation7 + $0xf98] sm:$0xff]
    %v1018 = vld [vmem:[#allocation7 + $0xfa0] sm:$0xff]
    %v1019 = vld [vmem:[#allocation7 + $0xfa8] sm:$0xff]
    %v1020 = vld [vmem:[#allocation7 + $0xfb0] sm:$0xff]
    %v1021 = vld [vmem:[#allocation7 + $0xfb8] sm:$0xff]
    %v1022 = vld [vmem:[#allocation7 + $0xfc0] sm:$0xff]
    %v1023 = vld [vmem:[#allocation7 + $0xfc8] sm:$0xff]
    %v1024 = vld [vmem:[#allocation7 + $0xfd0] sm:$0xff]
    %v1025 = vld [vmem:[#allocation7 + $0xfd8] sm:$0xff]
    %v1026 = vld [vmem:[#allocation7 + $0xfe0] sm:$0xff]
    %v1027 = vld [vmem:[#allocation7 + $0xfe8] sm:$0xff]
    %v1028 = vld [vmem:[#allocation7 + $0xff0] sm:$0xff]
    %v1029 = vld [vmem:[#allocation7 + $0xff8] sm:$0xff]
    %v1030 = vld [vmem:[#allocation7 + $0x1000] sm:$0xff]
    %v1031 = vld [vmem:[#allocation7 + $0x1008] sm:$0xff]
    %v1032 = vld [vmem:[#allocation7 + $0x1010] sm:$0xff]
    %v1033 = vld [vmem:[#allocation7 + $0x1018] sm:$0xff]
    %v1034 = vld [vmem:[#allocation7 + $0x1020] sm:$0xff]
    %v1035 = vld [vmem:[#allocation7 + $0x1028] sm:$0xff]
    %v1036 = vld [vmem:[#allocation7 + $0x1030] sm:$0xff]
    %v1037 = vld [vmem:[#allocation7 + $0x1038] sm:$0xff]
    %v1038 = vld [vmem:[#allocation7 + $0x1040] sm:$0xff]
    %v1039 = vld [vmem:[#allocation7 + $0x1048] sm:$0xff]
    %v1040 = vld [vmem:[#allocation7 + $0x1050] sm:$0xff]
    %v1041 = vld [vmem:[#allocation7 + $0x1058] sm:$0xff]
    %v1042 = vld [vmem:[#allocation7 + $0x1060] sm:$0xff]
    %v1043 = vld [vmem:[#allocation7 + $0x1068] sm:$0xff]
    %v1044 = vld [vmem:[#allocation7 + $0x1070] sm:$0xff]
    %v1045 = vld [vmem:[#allocation7 + $0x1078] sm:$0xff]
    %v1046 = vld [vmem:[#allocation7 + $0x1080] sm:$0xff]
    %v1047 = vld [vmem:[#allocation7 + $0x1088] sm:$0xff]
    %v1048 = vld [vmem:[#allocation7 + $0x1090] sm:$0xff]
    %v1049 = vld [vmem:[#allocation7 + $0x1098] sm:$0xff]
    %v1050 = vld [vmem:[#allocation7 + $0x10a0] sm:$0xff]
    %v1051 = vld [vmem:[#allocation7 + $0x10a8] sm:$0xff]
    %v1052 = vld [vmem:[#allocation7 + $0x10b0] sm:$0xff]
    %v1053 = vld [vmem:[#allocation7 + $0x10b8] sm:$0xff]
    %v1054 = vld [vmem:[#allocation7 + $0x10c0] sm:$0xff]
    %v1055 = vld [vmem:[#allocation7 + $0x10c8] sm:$0xff]
    %v1056 = vld [vmem:[#allocation7 + $0x10d0] sm:$0xff]
    %v1057 = vld [vmem:[#allocation7 + $0x10d8] sm:$0xff]
    %v1058 = vld [vmem:[#allocation7 + $0x10e0] sm:$0xff]
    %v1059 = vld [vmem:[#allocation7 + $0x10e8] sm:$0xff]
    %v1060 = vld [vmem:[#allocation7 + $0x10f0] sm:$0xff]
    %v1061 = vld [vmem:[#allocation7 + $0x10f8] sm:$0xff]
    %v1062 = vld [vmem:[#allocation7 + $0x1100] sm:$0xff]
    %v1063 = vld [vmem:[#allocation7 + $0x1108] sm:$0xff]
    %v1064 = vld [vmem:[#allocation7 + $0x1110] sm:$0xff]
    %v1065 = vld [vmem:[#allocation7 + $0x1118] sm:$0xff]
    %v1066 = vld [vmem:[#allocation7 + $0x1120] sm:$0xff]
    %v1067 = vld [vmem:[#allocation7 + $0x1128] sm:$0xff]
    %v1068 = vld [vmem:[#allocation7 + $0x1130] sm:$0xff]
    %v1069 = vld [vmem:[#allocation7 + $0x1138] sm:$0xff]
    %v1070 = vld [vmem:[#allocation7 + $0x1140] sm:$0xff]
    %v1071 = vld [vmem:[#allocation7 + $0x1148] sm:$0xff]
    %v1072 = vld [vmem:[#allocation7 + $0x1150] sm:$0xff]
    %v1073 = vld [vmem:[#allocation7 + $0x1158] sm:$0xff]
    %v1074 = vld [vmem:[#allocation7 + $0x1160] sm:$0xff]
    %v1075 = vld [vmem:[#allocation7 + $0x1168] sm:$0xff]
    %v1076 = vld [vmem:[#allocation7 + $0x1170] sm:$0xff]
    %v1077 = vld [vmem:[#allocation7 + $0x1178] sm:$0xff]
    %v1078 = vld [vmem:[#allocation7 + $0x1180] sm:$0xff]
    %v1079 = vld [vmem:[#allocation7 + $0x1188] sm:$0xff]
    %v1080 = vld [vmem:[#allocation7 + $0x1190] sm:$0xff]
    %v1081 = vld [vmem:[#allocation7 + $0x1198] sm:$0xff]
    %v1082 = vld [vmem:[#allocation7 + $0x11a0] sm:$0xff]
    %v1083 = vld [vmem:[#allocation7 + $0x11a8] sm:$0xff]
    %v1084 = vld [vmem:[#allocation7 + $0x11b0] sm:$0xff]
    %v1085 = vld [vmem:[#allocation7 + $0x11b8] sm:$0xff]
    %v1086 = vld [vmem:[#allocation7 + $0x11c0] sm:$0xff]
    %v1087 = vld [vmem:[#allocation7 + $0x11c8] sm:$0xff]
    %v1088 = vld [vmem:[#allocation7 + $0x11d0] sm:$0xff]
    %v1089 = vld [vmem:[#allocation7 + $0x11d8] sm:$0xff]
    %v1090 = vld [vmem:[#allocation7 + $0x11e0] sm:$0xff]
    %v1091 = vld [vmem:[#allocation7 + $0x11e8] sm:$0xff]
    %v1092 = vld [vmem:[#allocation7 + $0x11f0] sm:$0xff]
    %v1093 = vld [vmem:[#allocation7 + $0x11f8] sm:$0xff]
    %v1094 = vld [vmem:[#allocation7 + $0x1200] sm:$0xff]
    %v1095 = vld [vmem:[#allocation7 + $0x1208] sm:$0xff]
    %v1096 = vld [vmem:[#allocation7 + $0x1210] sm:$0xff]
    %v1097 = vld [vmem:[#allocation7 + $0x1218] sm:$0xff]
    %v1098 = vld [vmem:[#allocation7 + $0x1220] sm:$0xff]
    %v1099 = vld [vmem:[#allocation7 + $0x1228] sm:$0xff]
    %v1100 = vld [vmem:[#allocation7 + $0x1230] sm:$0xff]
    %v1101 = vld [vmem:[#allocation7 + $0x1238] sm:$0xff]
    %v1102 = vld [vmem:[#allocation7 + $0x1240] sm:$0xff]
    %v1103 = vld [vmem:[#allocation7 + $0x1248] sm:$0xff]
    %v1104 = vld [vmem:[#allocation7 + $0x1250] sm:$0xff]
    %v1105 = vld [vmem:[#allocation7 + $0x1258] sm:$0xff]
    %v1106 = vld [vmem:[#allocation7 + $0x1260] sm:$0xff]
    %v1107 = vld [vmem:[#allocation7 + $0x1268] sm:$0xff]
    %v1108 = vld [vmem:[#allocation7 + $0x1270] sm:$0xff]
    %v1109 = vld [vmem:[#allocation7 + $0x1278] sm:$0xff]
    %v1110 = vld [vmem:[#allocation7 + $0x1280] sm:$0xff]
    %v1111 = vld [vmem:[#allocation7 + $0x1288] sm:$0xff]
    %v1112 = vld [vmem:[#allocation7 + $0x1290] sm:$0xff]
    %v1113 = vld [vmem:[#allocation7 + $0x1298] sm:$0xff]
    %v1114 = vld [vmem:[#allocation7 + $0x12a0] sm:$0xff]
    %v1115 = vld [vmem:[#allocation7 + $0x12a8] sm:$0xff]
    %v1116 = vld [vmem:[#allocation7 + $0x12b0] sm:$0xff]
    %v1117 = vld [vmem:[#allocation7 + $0x12b8] sm:$0xff]
    %v1118 = vld [vmem:[#allocation7 + $0x12c0] sm:$0xff]
    %v1119 = vld [vmem:[#allocation7 + $0x12c8] sm:$0xff]
    %v1120 = vld [vmem:[#allocation7 + $0x12d0] sm:$0xff]
    %v1121 = vld [vmem:[#allocation7 + $0x12d8] sm:$0xff]
    %v1122 = vld [vmem:[#allocation7 + $0x12e0] sm:$0xff]
    %v1123 = vld [vmem:[#allocation7 + $0x12e8] sm:$0xff]
    %v1124 = vld [vmem:[#allocation7 + $0x12f0] sm:$0xff]
    %v1125 = vld [vmem:[#allocation7 + $0x12f8] sm:$0xff]
    %v1126 = vld [vmem:[#allocation7 + $0x1300] sm:$0xff]
    %v1127 = vld [vmem:[#allocation7 + $0x1308] sm:$0xff]
    %v1128 = vld [vmem:[#allocation7 + $0x1310] sm:$0xff]
    %v1129 = vld [vmem:[#allocation7 + $0x1318] sm:$0xff]
    %v1130 = vld [vmem:[#allocation7 + $0x1320] sm:$0xff]
    %v1131 = vld [vmem:[#allocation7 + $0x1328] sm:$0xff]
    %v1132 = vld [vmem:[#allocation7 + $0x1330] sm:$0xff]
    %v1133 = vld [vmem:[#allocation7 + $0x1338] sm:$0xff]
    %v1134 = vld [vmem:[#allocation7 + $0x1340] sm:$0xff]
    %v1135 = vld [vmem:[#allocation7 + $0x1348] sm:$0xff]
    %v1136 = vld [vmem:[#allocation7 + $0x1350] sm:$0xff]
    %v1137 = vld [vmem:[#allocation7 + $0x1358] sm:$0xff]
    %v1138 = vld [vmem:[#allocation7 + $0x1360] sm:$0xff]
    %v1139 = vld [vmem:[#allocation7 + $0x1368] sm:$0xff]
    %v1140 = vld [vmem:[#allocation7 + $0x1370] sm:$0xff]
    %v1141 = vld [vmem:[#allocation7 + $0x1378] sm:$0xff]
    %v1142 = vld [vmem:[#allocation7 + $0x1380] sm:$0xff]
    %v1143 = vld [vmem:[#allocation7 + $0x1388] sm:$0xff]
    %v1144 = vld [vmem:[#allocation7 + $0x1390] sm:$0xff]
    %v1145 = vld [vmem:[#allocation7 + $0x1398] sm:$0xff]
    %v1146 = vld [vmem:[#allocation7 + $0x13a0] sm:$0xff]
    %v1147 = vld [vmem:[#allocation7 + $0x13a8] sm:$0xff]
    %v1148 = vld [vmem:[#allocation7 + $0x13b0] sm:$0xff]
    %v1149 = vld [vmem:[#allocation7 + $0x13b8] sm:$0xff]
    %v1150 = vld [vmem:[#allocation7 + $0x13c0] sm:$0xff]
    %v1151 = vld [vmem:[#allocation7 + $0x13c8] sm:$0xff]
    %v1152 = vld [vmem:[#allocation7 + $0x13d0] sm:$0xff]
    %v1153 = vld [vmem:[#allocation7 + $0x13d8] sm:$0xff]
    %v1154 = vld [vmem:[#allocation7 + $0x13e0] sm:$0xff]
    %v1155 = vld [vmem:[#allocation7 + $0x13e8] sm:$0xff]
    %v1156 = vld [vmem:[#allocation7 + $0x13f0] sm:$0xff]
    %v1157 = vld [vmem:[#allocation7 + $0x13f8] sm:$0xff]
    %v1158 = vld [vmem:[#allocation7 + $0x1400] sm:$0xff]
    %v1159 = vld [vmem:[#allocation7 + $0x1408] sm:$0xff]
    %v1160 = vld [vmem:[#allocation7 + $0x1410] sm:$0xff]
    %v1161 = vld [vmem:[#allocation7 + $0x1418] sm:$0xff]
    %v1162 = vld [vmem:[#allocation7 + $0x1420] sm:$0xff]
    %v1163 = vld [vmem:[#allocation7 + $0x1428] sm:$0xff]
    %v1164 = vld [vmem:[#allocation7 + $0x1430] sm:$0xff]
    %v1165 = vld [vmem:[#allocation7 + $0x1438] sm:$0xff]
    %v1166 = vld [vmem:[#allocation7 + $0x1440] sm:$0xff]
    %v1167 = vld [vmem:[#allocation7 + $0x1448] sm:$0xff]
    %v1168 = vld [vmem:[#allocation7 + $0x1450] sm:$0xff]
    %v1169 = vld [vmem:[#allocation7 + $0x1458] sm:$0xff]
    %v1170 = vld [vmem:[#allocation7 + $0x1460] sm:$0xff]
    %v1171 = vld [vmem:[#allocation7 + $0x1468] sm:$0xff]
    %v1172 = vld [vmem:[#allocation7 + $0x1470] sm:$0xff]
    %v1173 = vld [vmem:[#allocation7 + $0x1478] sm:$0xff]
    %v1174 = vld [vmem:[#allocation7 + $0x1480] sm:$0xff]
    %v1175 = vld [vmem:[#allocation7 + $0x1488] sm:$0xff]
    %v1176 = vld [vmem:[#allocation7 + $0x1490] sm:$0xff]
    %v1177 = vld [vmem:[#allocation7 + $0x1498] sm:$0xff]
    %v1178 = vld [vmem:[#allocation7 + $0x14a0] sm:$0xff]
    %v1179 = vld [vmem:[#allocation7 + $0x14a8] sm:$0xff]
    %v1180 = vld [vmem:[#allocation7 + $0x14b0] sm:$0xff]
    %v1181 = vld [vmem:[#allocation7 + $0x14b8] sm:$0xff]
    %v1182 = vld [vmem:[#allocation7 + $0x14c0] sm:$0xff]
    %v1183 = vld [vmem:[#allocation7 + $0x14c8] sm:$0xff]
    %v1184 = vld [vmem:[#allocation7 + $0x14d0] sm:$0xff]
    %v1185 = vld [vmem:[#allocation7 + $0x14d8] sm:$0xff]
    %v1186 = vld [vmem:[#allocation7 + $0x14e0] sm:$0xff]
    %v1187 = vld [vmem:[#allocation7 + $0x14e8] sm:$0xff]
    %v1188 = vld [vmem:[#allocation7 + $0x14f0] sm:$0xff]
    %v1189 = vld [vmem:[#allocation7 + $0x14f8] sm:$0xff]
    %v1190 = vld [vmem:[#allocation7 + $0x1500] sm:$0xff]
    %v1191 = vld [vmem:[#allocation7 + $0x1508] sm:$0xff]
    %v1192 = vld [vmem:[#allocation7 + $0x1510] sm:$0xff]
    %v1193 = vld [vmem:[#allocation7 + $0x1518] sm:$0xff]
    %v1194 = vld [vmem:[#allocation7 + $0x1520] sm:$0xff]
    %v1195 = vld [vmem:[#allocation7 + $0x1528] sm:$0xff]
    %v1196 = vld [vmem:[#allocation7 + $0x1530] sm:$0xff]
    %v1197 = vld [vmem:[#allocation7 + $0x1538] sm:$0xff]
    %v1198 = vld [vmem:[#allocation7 + $0x1540] sm:$0xff]
    %v1199 = vld [vmem:[#allocation7 + $0x1548] sm:$0xff]
    %v1200 = vld [vmem:[#allocation7 + $0x1550] sm:$0xff]
    %v1201 = vld [vmem:[#allocation7 + $0x1558] sm:$0xff]
    %v1202 = vld [vmem:[#allocation7 + $0x1560] sm:$0xff]
    %v1203 = vld [vmem:[#allocation7 + $0x1568] sm:$0xff]
    %v1204 = vld [vmem:[#allocation7 + $0x1570] sm:$0xff]
    %v1205 = vld [vmem:[#allocation7 + $0x1578] sm:$0xff]
    %v1206 = vld [vmem:[#allocation7 + $0x1580] sm:$0xff]
    %v1207 = vld [vmem:[#allocation7 + $0x1588] sm:$0xff]
    %v1208 = vld [vmem:[#allocation7 + $0x1590] sm:$0xff]
    %v1209 = vld [vmem:[#allocation7 + $0x1598] sm:$0xff]
    %v1210 = vld [vmem:[#allocation7 + $0x15a0] sm:$0xff]
    %v1211 = vld [vmem:[#allocation7 + $0x15a8] sm:$0xff]
    %v1212 = vld [vmem:[#allocation7 + $0x15b0] sm:$0xff]
    %v1213 = vld [vmem:[#allocation7 + $0x15b8] sm:$0xff]
    %v1214 = vld [vmem:[#allocation7 + $0x15c0] sm:$0xff]
    %v1215 = vld [vmem:[#allocation7 + $0x15c8] sm:$0xff]
    %v1216 = vld [vmem:[#allocation7 + $0x15d0] sm:$0xff]
    %v1217 = vld [vmem:[#allocation7 + $0x15d8] sm:$0xff]
    %v1218 = vld [vmem:[#allocation9] sm:$0x7f]
    %v1220 = vperm.slane %v1218, 0
    %v1221 = vperm.slane %v1218, 1
    %v1222 = vperm.slane %v1218, 2
    %v1223 = vperm.slane %v1218, 3
    %v1224 = vperm.slane %v1218, 4
    %v1225 = vperm.slane %v1218, 5
    %v1226 = vperm.slane %v1218, 6
    %vm1234 = vcmask 261120
    %v1236 = vsel %vm1234, %v517, 0
    %1238 = vmatpush.msra.mxu0 %v623
    %1239 = vmatpush.msra.mxu0 %v616
    %1240 = vmatpush.msra.mxu0 %v609
    %1241 = vmatpush.msra.mxu0 %v602
    %1242 = vmatpush.msra.mxu0 %v595
    %1243 = vmatpush.msra.mxu0 %v588
    %1244 = vmatpush.msra.mxu0 %v581
    %1245 = vmatpush.msra.mxu0 %v574
    %1246 = vmatpush.msra.mxu0 %v567
    %1247 = vmatpush.msra.mxu0 %v560
    %1248 = vmatpush.msra.mxu0 %v553
    %1249 = vmatpush.msra.mxu0 %v546
    %1250 = vmatpush.msra.mxu0 %v539
    %1251 = vmatpush.msra.mxu0 %v532
    %1252 = vmatpush.msra.mxu0 %v525
    %1253 = vmatpush.msra.mxu0 %v518
    %1254 = vmatmul.f32.gmra.mxu0 %v511
    %v1255 = vpop.f32.mrf.mxu0
    %v1256 = vadd.f32 %v1220, %v1255
    %1257 = vdwg.mxu0
    %1258 = vmatpush.msra.mxu0 %v735
    %1259 = vmatpush.msra.mxu0 %v728
    %1260 = vmatpush.msra.mxu0 %v721
    %1261 = vmatpush.msra.mxu0 %v714
    %1262 = vmatpush.msra.mxu0 %v707
    %1263 = vmatpush.msra.mxu0 %v700
    %1264 = vmatpush.msra.mxu0 %v693
    %1265 = vmatpush.msra.mxu0 %v686
    %1266 = vmatpush.msra.mxu0 %v679
    %1267 = vmatpush.msra.mxu0 %v672
    %1268 = vmatpush.msra.mxu0 %v665
    %1269 = vmatpush.msra.mxu0 %v658
    %1270 = vmatpush.msra.mxu0 %v651
    %1271 = vmatpush.msra.mxu0 %v644
    %1272 = vmatpush.msra.mxu0 %v637
    %1273 = vmatpush.msra.mxu0 %v630
    %1274 = vmatmul.f32.gmra.mxu0 %v512
    %v1275 = vpop.f32.mrf.mxu0
    %v1276 = vadd.f32 %v1256, %v1275
    %1277 = vdwg.mxu0
    %1278 = vmatpush.msra.mxu0 %v847
    %1279 = vmatpush.msra.mxu0 %v840
    %1280 = vmatpush.msra.mxu0 %v833
    %1281 = vmatpush.msra.mxu0 %v826
    %1282 = vmatpush.msra.mxu0 %v819
    %1283 = vmatpush.msra.mxu0 %v812
    %1284 = vmatpush.msra.mxu0 %v805
    %1285 = vmatpush.msra.mxu0 %v798
    %1286 = vmatpush.msra.mxu0 %v791
    %1287 = vmatpush.msra.mxu0 %v784
    %1288 = vmatpush.msra.mxu0 %v777
    %1289 = vmatpush.msra.mxu0 %v770
    %1290 = vmatpush.msra.mxu0 %v763
    %1291 = vmatpush.msra.mxu0 %v756
    %1292 = vmatpush.msra.mxu0 %v749
    %1293 = vmatpush.msra.mxu0 %v742
    %1294 = vmatmul.f32.gmra.mxu0 %v513
    %v1295 = vpop.f32.mrf.mxu0
    %v1296 = vadd.f32 %v1276, %v1295
    %1297 = vdwg.mxu0
    %1298 = vmatpush.msra.mxu0 %v959
    %1299 = vmatpush.msra.mxu0 %v952
    %1300 = vmatpush.msra.mxu0 %v945
    %1301 = vmatpush.msra.mxu0 %v938
    %1302 = vmatpush.msra.mxu0 %v931
    %1303 = vmatpush.msra.mxu0 %v924
    %1304 = vmatpush.msra.mxu0 %v917
    %1305 = vmatpush.msra.mxu0 %v910
    %1306 = vmatpush.msra.mxu0 %v903
    %1307 = vmatpush.msra.mxu0 %v896
    %1308 = vmatpush.msra.mxu0 %v889
    %1309 = vmatpush.msra.mxu0 %v882
    %1310 = vmatpush.msra.mxu0 %v875
    %1311 = vmatpush.msra.mxu0 %v868
    %1312 = vmatpush.msra.mxu0 %v861
    %1313 = vmatpush.msra.mxu0 %v854
    %1314 = vmatmul.f32.gmra.mxu0 %v514
    %v1315 = vpop.f32.mrf.mxu0
    %v1316 = vadd.f32 %v1296, %v1315
    %1317 = vdwg.mxu0
    %1318 = vmatpush.msra.mxu0 %v1071
    %1319 = vmatpush.msra.mxu0 %v1064
    %1320 = vmatpush.msra.mxu0 %v1057
    %1321 = vmatpush.msra.mxu0 %v1050
    %1322 = vmatpush.msra.mxu0 %v1043
    %1323 = vmatpush.msra.mxu0 %v1036
    %1324 = vmatpush.msra.mxu0 %v1029
    %1325 = vmatpush.msra.mxu0 %v1022
    %1326 = vmatpush.msra.mxu0 %v1015
    %1327 = vmatpush.msra.mxu0 %v1008
    %1328 = vmatpush.msra.mxu0 %v1001
    %1329 = vmatpush.msra.mxu0 %v994
    %1330 = vmatpush.msra.mxu0 %v987
    %1331 = vmatpush.msra.mxu0 %v980
    %1332 = vmatpush.msra.mxu0 %v973
    %1333 = vmatpush.msra.mxu0 %v966
    %1334 = vmatmul.f32.gmra.mxu0 %v515
    %v1335 = vpop.f32.mrf.mxu0
    %v1336 = vadd.f32 %v1316, %v1335
    %1337 = vdwg.mxu0
    %1338 = vmatpush.msra.mxu0 %v1183
    %1339 = vmatpush.msra.mxu0 %v1176
    %1340 = vmatpush.msra.mxu0 %v1169
    %1341 = vmatpush.msra.mxu0 %v1162
    %1342 = vmatpush.msra.mxu0 %v1155
    %1343 = vmatpush.msra.mxu0 %v1148
    %1344 = vmatpush.msra.mxu0 %v1141
    %1345 = vmatpush.msra.mxu0 %v1134
    %1346 = vmatpush.msra.mxu0 %v1127
    %1347 = vmatpush.msra.mxu0 %v1120
    %1348 = vmatpush.msra.mxu0 %v1113
    %1349 = vmatpush.msra.mxu0 %v1106
    %1350 = vmatpush.msra.mxu0 %v1099
    %1351 = vmatpush.msra.mxu0 %v1092
    %1352 = vmatpush.msra.mxu0 %v1085
    %1353 = vmatpush.msra.mxu0 %v1078
    %1354 = vmatmul.f32.gmra.mxu0 %v516
    %v1355 = vpop.f32.mrf.mxu0
    %v1356 = vadd.f32 %v1336, %v1355
    %1357 = vdwg.mxu0
    %1358 = vmatpush.msra.mxu0 0.0
    %1359 = vmatpush.msra.mxu0 0.0
    %1360 = vmatpush.msra.mxu0 0.0
    %1361 = vmatpush.msra.mxu0 0.0
    %1362 = vmatpush.msra.mxu0 0.0
    %1363 = vmatpush.msra.mxu0 0.0
    %1364 = vmatpush.msra.mxu0 0.0
    %1365 = vmatpush.msra.mxu0 0.0
    %1366 = vmatpush.msra.mxu0 0.0
    %1367 = vmatpush.msra.mxu0 0.0
    %1368 = vmatpush.msra.mxu0 0.0
    %1369 = vmatpush.msra.mxu0 0.0
    %1370 = vmatpush.msra.mxu0 %v1211
    %1371 = vmatpush.msra.mxu0 %v1204
    %1372 = vmatpush.msra.mxu0 %v1197
    %1373 = vmatpush.msra.mxu0 %v1190
    %1374 = vmatmul.f32.gmra.mxu0 %v1236
    %v1375 = vpop.f32.mrf.mxu0
    %v1376 = vadd.f32 %v1356, %v1375
    %1377 = vdwg.mxu0
    %1378 = vmatpush.msra.mxu0 %v624
    %1379 = vmatpush.msra.mxu0 %v617
    %1380 = vmatpush.msra.mxu0 %v610
    %1381 = vmatpush.msra.mxu0 %v603
    %1382 = vmatpush.msra.mxu0 %v596
    %1383 = vmatpush.msra.mxu0 %v589
    %1384 = vmatpush.msra.mxu0 %v582
    %1385 = vmatpush.msra.mxu0 %v575
    %1386 = vmatpush.msra.mxu0 %v568
    %1387 = vmatpush.msra.mxu0 %v561
    %1388 = vmatpush.msra.mxu0 %v554
    %1389 = vmatpush.msra.mxu0 %v547
    %1390 = vmatpush.msra.mxu0 %v540
    %1391 = vmatpush.msra.mxu0 %v533
    %1392 = vmatpush.msra.mxu0 %v526
    %1393 = vmatpush.msra.mxu0 %v519
    %1394 = vmatmul.f32.gmra.mxu0 %v511
    %v1395 = vpop.f32.mrf.mxu0
    %v1396 = vadd.f32 %v1221, %v1395
    %1397 = vdwg.mxu0
    %1398 = vmatpush.msra.mxu0 %v736
    %1399 = vmatpush.msra.mxu0 %v729
    %1400 = vmatpush.msra.mxu0 %v722
    %1401 = vmatpush.msra.mxu0 %v715
    %1402 = vmatpush.msra.mxu0 %v708
    %1403 = vmatpush.msra.mxu0 %v701
    %1404 = vmatpush.msra.mxu0 %v694
    %1405 = vmatpush.msra.mxu0 %v687
    %1406 = vmatpush.msra.mxu0 %v680
    %1407 = vmatpush.msra.mxu0 %v673
    %1408 = vmatpush.msra.mxu0 %v666
    %1409 = vmatpush.msra.mxu0 %v659
    %1410 = vmatpush.msra.mxu0 %v652
    %1411 = vmatpush.msra.mxu0 %v645
    %1412 = vmatpush.msra.mxu0 %v638
    %1413 = vmatpush.msra.mxu0 %v631
    %1414 = vmatmul.f32.gmra.mxu0 %v512
    %v1415 = vpop.f32.mrf.mxu0
    %v1416 = vadd.f32 %v1396, %v1415
    %1417 = vdwg.mxu0
    %1418 = vmatpush.msra.mxu0 %v848
    %1419 = vmatpush.msra.mxu0 %v841
    %1420 = vmatpush.msra.mxu0 %v834
    %1421 = vmatpush.msra.mxu0 %v827
    %1422 = vmatpush.msra.mxu0 %v820
    %1423 = vmatpush.msra.mxu0 %v813
    %1424 = vmatpush.msra.mxu0 %v806
    %1425 = vmatpush.msra.mxu0 %v799
    %1426 = vmatpush.msra.mxu0 %v792
    %1427 = vmatpush.msra.mxu0 %v785
    %1428 = vmatpush.msra.mxu0 %v778
    %1429 = vmatpush.msra.mxu0 %v771
    %1430 = vmatpush.msra.mxu0 %v764
    %1431 = vmatpush.msra.mxu0 %v757
    %1432 = vmatpush.msra.mxu0 %v750
    %1433 = vmatpush.msra.mxu0 %v743
    %1434 = vmatmul.f32.gmra.mxu0 %v513
    %v1435 = vpop.f32.mrf.mxu0
    %v1436 = vadd.f32 %v1416, %v1435
    %1437 = vdwg.mxu0
    %1438 = vmatpush.msra.mxu0 %v960
    %1439 = vmatpush.msra.mxu0 %v953
    %1440 = vmatpush.msra.mxu0 %v946
    %1441 = vmatpush.msra.mxu0 %v939
    %1442 = vmatpush.msra.mxu0 %v932
    %1443 = vmatpush.msra.mxu0 %v925
    %1444 = vmatpush.msra.mxu0 %v918
    %1445 = vmatpush.msra.mxu0 %v911
    %1446 = vmatpush.msra.mxu0 %v904
    %1447 = vmatpush.msra.mxu0 %v897
    %1448 = vmatpush.msra.mxu0 %v890
    %1449 = vmatpush.msra.mxu0 %v883
    %1450 = vmatpush.msra.mxu0 %v876
    %1451 = vmatpush.msra.mxu0 %v869
    %1452 = vmatpush.msra.mxu0 %v862
    %1453 = vmatpush.msra.mxu0 %v855
    %1454 = vmatmul.f32.gmra.mxu0 %v514
    %v1455 = vpop.f32.mrf.mxu0
    %v1456 = vadd.f32 %v1436, %v1455
    %1457 = vdwg.mxu0
    %1458 = vmatpush.msra.mxu0 %v1072
    %1459 = vmatpush.msra.mxu0 %v1065
    %1460 = vmatpush.msra.mxu0 %v1058
    %1461 = vmatpush.msra.mxu0 %v1051
    %1462 = vmatpush.msra.mxu0 %v1044
    %1463 = vmatpush.msra.mxu0 %v1037
    %1464 = vmatpush.msra.mxu0 %v1030
    %1465 = vmatpush.msra.mxu0 %v1023
    %1466 = vmatpush.msra.mxu0 %v1016
    %1467 = vmatpush.msra.mxu0 %v1009
    %1468 = vmatpush.msra.mxu0 %v1002
    %1469 = vmatpush.msra.mxu0 %v995
    %1470 = vmatpush.msra.mxu0 %v988
    %1471 = vmatpush.msra.mxu0 %v981
    %1472 = vmatpush.msra.mxu0 %v974
    %1473 = vmatpush.msra.mxu0 %v967
    %1474 = vmatmul.f32.gmra.mxu0 %v515
    %v1475 = vpop.f32.mrf.mxu0
    %v1476 = vadd.f32 %v1456, %v1475
    %1477 = vdwg.mxu0
    %1478 = vmatpush.msra.mxu0 %v1184
    %1479 = vmatpush.msra.mxu0 %v1177
    %1480 = vmatpush.msra.mxu0 %v1170
    %1481 = vmatpush.msra.mxu0 %v1163
    %1482 = vmatpush.msra.mxu0 %v1156
    %1483 = vmatpush.msra.mxu0 %v1149
    %1484 = vmatpush.msra.mxu0 %v1142
    %1485 = vmatpush.msra.mxu0 %v1135
    %1486 = vmatpush.msra.mxu0 %v1128
    %1487 = vmatpush.msra.mxu0 %v1121
    %1488 = vmatpush.msra.mxu0 %v1114
    %1489 = vmatpush.msra.mxu0 %v1107
    %1490 = vmatpush.msra.mxu0 %v1100
    %1491 = vmatpush.msra.mxu0 %v1093
    %1492 = vmatpush.msra.mxu0 %v1086
    %1493 = vmatpush.msra.mxu0 %v1079
    %1494 = vmatmul.f32.gmra.mxu0 %v516
    %v1495 = vpop.f32.mrf.mxu0
    %v1496 = vadd.f32 %v1476, %v1495
    %1497 = vdwg.mxu0
    %1498 = vmatpush.msra.mxu0 0.0
    %1499 = vmatpush.msra.mxu0 0.0
    %1500 = vmatpush.msra.mxu0 0.0
    %1501 = vmatpush.msra.mxu0 0.0
    %1502 = vmatpush.msra.mxu0 0.0
    %1503 = vmatpush.msra.mxu0 0.0
    %1504 = vmatpush.msra.mxu0 0.0
    %1505 = vmatpush.msra.mxu0 0.0
    %1506 = vmatpush.msra.mxu0 0.0
    %1507 = vmatpush.msra.mxu0 0.0
    %1508 = vmatpush.msra.mxu0 0.0
    %1509 = vmatpush.msra.mxu0 0.0
    %1510 = vmatpush.msra.mxu0 %v1212
    %1511 = vmatpush.msra.mxu0 %v1205
    %1512 = vmatpush.msra.mxu0 %v1198
    %1513 = vmatpush.msra.mxu0 %v1191
    %1514 = vmatmul.f32.gmra.mxu0 %v1236
    %v1515 = vpop.f32.mrf.mxu0
    %v1516 = vadd.f32 %v1496, %v1515
    %1517 = vdwg.mxu0
    %1518 = vmatpush.msra.mxu0 %v625
    %1519 = vmatpush.msra.mxu0 %v618
    %1520 = vmatpush.msra.mxu0 %v611
    %1521 = vmatpush.msra.mxu0 %v604
    %1522 = vmatpush.msra.mxu0 %v597
    %1523 = vmatpush.msra.mxu0 %v590
    %1524 = vmatpush.msra.mxu0 %v583
    %1525 = vmatpush.msra.mxu0 %v576
    %1526 = vmatpush.msra.mxu0 %v569
    %1527 = vmatpush.msra.mxu0 %v562
    %1528 = vmatpush.msra.mxu0 %v555
    %1529 = vmatpush.msra.mxu0 %v548
    %1530 = vmatpush.msra.mxu0 %v541
    %1531 = vmatpush.msra.mxu0 %v534
    %1532 = vmatpush.msra.mxu0 %v527
    %1533 = vmatpush.msra.mxu0 %v520
    %1534 = vmatmul.f32.gmra.mxu0 %v511
    %v1535 = vpop.f32.mrf.mxu0
    %v1536 = vadd.f32 %v1222, %v1535
    %1537 = vdwg.mxu0
    %1538 = vmatpush.msra.mxu0 %v737
    %1539 = vmatpush.msra.mxu0 %v730
    %1540 = vmatpush.msra.mxu0 %v723
    %1541 = vmatpush.msra.mxu0 %v716
    %1542 = vmatpush.msra.mxu0 %v709
    %1543 = vmatpush.msra.mxu0 %v702
    %1544 = vmatpush.msra.mxu0 %v695
    %1545 = vmatpush.msra.mxu0 %v688
    %1546 = vmatpush.msra.mxu0 %v681
    %1547 = vmatpush.msra.mxu0 %v674
    %1548 = vmatpush.msra.mxu0 %v667
    %1549 = vmatpush.msra.mxu0 %v660
    %1550 = vmatpush.msra.mxu0 %v653
    %1551 = vmatpush.msra.mxu0 %v646
    %1552 = vmatpush.msra.mxu0 %v639
    %1553 = vmatpush.msra.mxu0 %v632
    %1554 = vmatmul.f32.gmra.mxu0 %v512
    %v1555 = vpop.f32.mrf.mxu0
    %v1556 = vadd.f32 %v1536, %v1555
    %1557 = vdwg.mxu0
    %1558 = vmatpush.msra.mxu0 %v849
    %1559 = vmatpush.msra.mxu0 %v842
    %1560 = vmatpush.msra.mxu0 %v835
    %1561 = vmatpush.msra.mxu0 %v828
    %1562 = vmatpush.msra.mxu0 %v821
    %1563 = vmatpush.msra.mxu0 %v814
    %1564 = vmatpush.msra.mxu0 %v807
    %1565 = vmatpush.msra.mxu0 %v800
    %1566 = vmatpush.msra.mxu0 %v793
    %1567 = vmatpush.msra.mxu0 %v786
    %1568 = vmatpush.msra.mxu0 %v779
    %1569 = vmatpush.msra.mxu0 %v772
    %1570 = vmatpush.msra.mxu0 %v765
    %1571 = vmatpush.msra.mxu0 %v758
    %1572 = vmatpush.msra.mxu0 %v751
    %1573 = vmatpush.msra.mxu0 %v744
    %1574 = vmatmul.f32.gmra.mxu0 %v513
    %v1575 = vpop.f32.mrf.mxu0
    %v1576 = vadd.f32 %v1556, %v1575
    %1577 = vdwg.mxu0
    %1578 = vmatpush.msra.mxu0 %v961
    %1579 = vmatpush.msra.mxu0 %v954
    %1580 = vmatpush.msra.mxu0 %v947
    %1581 = vmatpush.msra.mxu0 %v940
    %1582 = vmatpush.msra.mxu0 %v933
    %1583 = vmatpush.msra.mxu0 %v926
    %1584 = vmatpush.msra.mxu0 %v919
    %1585 = vmatpush.msra.mxu0 %v912
    %1586 = vmatpush.msra.mxu0 %v905
    %1587 = vmatpush.msra.mxu0 %v898
    %1588 = vmatpush.msra.mxu0 %v891
    %1589 = vmatpush.msra.mxu0 %v884
    %1590 = vmatpush.msra.mxu0 %v877
    %1591 = vmatpush.msra.mxu0 %v870
    %1592 = vmatpush.msra.mxu0 %v863
    %1593 = vmatpush.msra.mxu0 %v856
    %1594 = vmatmul.f32.gmra.mxu0 %v514
    %v1595 = vpop.f32.mrf.mxu0
    %v1596 = vadd.f32 %v1576, %v1595
    %1597 = vdwg.mxu0
    %1598 = vmatpush.msra.mxu0 %v1073
    %1599 = vmatpush.msra.mxu0 %v1066
    %1600 = vmatpush.msra.mxu0 %v1059
    %1601 = vmatpush.msra.mxu0 %v1052
    %1602 = vmatpush.msra.mxu0 %v1045
    %1603 = vmatpush.msra.mxu0 %v1038
    %1604 = vmatpush.msra.mxu0 %v1031
    %1605 = vmatpush.msra.mxu0 %v1024
    %1606 = vmatpush.msra.mxu0 %v1017
    %1607 = vmatpush.msra.mxu0 %v1010
    %1608 = vmatpush.msra.mxu0 %v1003
    %1609 = vmatpush.msra.mxu0 %v996
    %1610 = vmatpush.msra.mxu0 %v989
    %1611 = vmatpush.msra.mxu0 %v982
    %1612 = vmatpush.msra.mxu0 %v975
    %1613 = vmatpush.msra.mxu0 %v968
    %1614 = vmatmul.f32.gmra.mxu0 %v515
    %v1615 = vpop.f32.mrf.mxu0
    %v1616 = vadd.f32 %v1596, %v1615
    %1617 = vdwg.mxu0
    %1618 = vmatpush.msra.mxu0 %v1185
    %1619 = vmatpush.msra.mxu0 %v1178
    %1620 = vmatpush.msra.mxu0 %v1171
    %1621 = vmatpush.msra.mxu0 %v1164
    %1622 = vmatpush.msra.mxu0 %v1157
    %1623 = vmatpush.msra.mxu0 %v1150
    %1624 = vmatpush.msra.mxu0 %v1143
    %1625 = vmatpush.msra.mxu0 %v1136
    %1626 = vmatpush.msra.mxu0 %v1129
    %1627 = vmatpush.msra.mxu0 %v1122
    %1628 = vmatpush.msra.mxu0 %v1115
    %1629 = vmatpush.msra.mxu0 %v1108
    %1630 = vmatpush.msra.mxu0 %v1101
    %1631 = vmatpush.msra.mxu0 %v1094
    %1632 = vmatpush.msra.mxu0 %v1087
    %1633 = vmatpush.msra.mxu0 %v1080
    %1634 = vmatmul.f32.gmra.mxu0 %v516
    %v1635 = vpop.f32.mrf.mxu0
    %v1636 = vadd.f32 %v1616, %v1635
    %1637 = vdwg.mxu0
    %1638 = vmatpush.msra.mxu0 0.0
    %1639 = vmatpush.msra.mxu0 0.0
    %1640 = vmatpush.msra.mxu0 0.0
    %1641 = vmatpush.msra.mxu0 0.0
    %1642 = vmatpush.msra.mxu0 0.0
    %1643 = vmatpush.msra.mxu0 0.0
    %1644 = vmatpush.msra.mxu0 0.0
    %1645 = vmatpush.msra.mxu0 0.0
    %1646 = vmatpush.msra.mxu0 0.0
    %1647 = vmatpush.msra.mxu0 0.0
    %1648 = vmatpush.msra.mxu0 0.0
    %1649 = vmatpush.msra.mxu0 0.0
    %1650 = vmatpush.msra.mxu0 %v1213
    %1651 = vmatpush.msra.mxu0 %v1206
    %1652 = vmatpush.msra.mxu0 %v1199
    %1653 = vmatpush.msra.mxu0 %v1192
    %1654 = vmatmul.f32.gmra.mxu0 %v1236
    %v1655 = vpop.f32.mrf.mxu0
    %v1656 = vadd.f32 %v1636, %v1655
    %1657 = vdwg.mxu0
    %1658 = vmatpush.msra.mxu0 %v626
    %1659 = vmatpush.msra.mxu0 %v619
    %1660 = vmatpush.msra.mxu0 %v612
    %1661 = vmatpush.msra.mxu0 %v605
    %1662 = vmatpush.msra.mxu0 %v598
    %1663 = vmatpush.msra.mxu0 %v591
    %1664 = vmatpush.msra.mxu0 %v584
    %1665 = vmatpush.msra.mxu0 %v577
    %1666 = vmatpush.msra.mxu0 %v570
    %1667 = vmatpush.msra.mxu0 %v563
    %1668 = vmatpush.msra.mxu0 %v556
    %1669 = vmatpush.msra.mxu0 %v549
    %1670 = vmatpush.msra.mxu0 %v542
    %1671 = vmatpush.msra.mxu0 %v535
    %1672 = vmatpush.msra.mxu0 %v528
    %1673 = vmatpush.msra.mxu0 %v521
    %1674 = vmatmul.f32.gmra.mxu0 %v511
    %v1675 = vpop.f32.mrf.mxu0
    %v1676 = vadd.f32 %v1223, %v1675
    %1677 = vdwg.mxu0
    %1678 = vmatpush.msra.mxu0 %v738
    %1679 = vmatpush.msra.mxu0 %v731
    %1680 = vmatpush.msra.mxu0 %v724
    %1681 = vmatpush.msra.mxu0 %v717
    %1682 = vmatpush.msra.mxu0 %v710
    %1683 = vmatpush.msra.mxu0 %v703
    %1684 = vmatpush.msra.mxu0 %v696
    %1685 = vmatpush.msra.mxu0 %v689
    %1686 = vmatpush.msra.mxu0 %v682
    %1687 = vmatpush.msra.mxu0 %v675
    %1688 = vmatpush.msra.mxu0 %v668
    %1689 = vmatpush.msra.mxu0 %v661
    %1690 = vmatpush.msra.mxu0 %v654
    %1691 = vmatpush.msra.mxu0 %v647
    %1692 = vmatpush.msra.mxu0 %v640
    %1693 = vmatpush.msra.mxu0 %v633
    %1694 = vmatmul.f32.gmra.mxu0 %v512
    %v1695 = vpop.f32.mrf.mxu0
    %v1696 = vadd.f32 %v1676, %v1695
    %1697 = vdwg.mxu0
    %1698 = vmatpush.msra.mxu0 %v850
    %1699 = vmatpush.msra.mxu0 %v843
    %1700 = vmatpush.msra.mxu0 %v836
    %1701 = vmatpush.msra.mxu0 %v829
    %1702 = vmatpush.msra.mxu0 %v822
    %1703 = vmatpush.msra.mxu0 %v815
    %1704 = vmatpush.msra.mxu0 %v808
    %1705 = vmatpush.msra.mxu0 %v801
    %1706 = vmatpush.msra.mxu0 %v794
    %1707 = vmatpush.msra.mxu0 %v787
    %1708 = vmatpush.msra.mxu0 %v780
    %1709 = vmatpush.msra.mxu0 %v773
    %1710 = vmatpush.msra.mxu0 %v766
    %1711 = vmatpush.msra.mxu0 %v759
    %1712 = vmatpush.msra.mxu0 %v752
    %1713 = vmatpush.msra.mxu0 %v745
    %1714 = vmatmul.f32.gmra.mxu0 %v513
    %v1715 = vpop.f32.mrf.mxu0
    %v1716 = vadd.f32 %v1696, %v1715
    %1717 = vdwg.mxu0
    %1718 = vmatpush.msra.mxu0 %v962
    %1719 = vmatpush.msra.mxu0 %v955
    %1720 = vmatpush.msra.mxu0 %v948
    %1721 = vmatpush.msra.mxu0 %v941
    %1722 = vmatpush.msra.mxu0 %v934
    %1723 = vmatpush.msra.mxu0 %v927
    %1724 = vmatpush.msra.mxu0 %v920
    %1725 = vmatpush.msra.mxu0 %v913
    %1726 = vmatpush.msra.mxu0 %v906
    %1727 = vmatpush.msra.mxu0 %v899
    %1728 = vmatpush.msra.mxu0 %v892
    %1729 = vmatpush.msra.mxu0 %v885
    %1730 = vmatpush.msra.mxu0 %v878
    %1731 = vmatpush.msra.mxu0 %v871
    %1732 = vmatpush.msra.mxu0 %v864
    %1733 = vmatpush.msra.mxu0 %v857
    %1734 = vmatmul.f32.gmra.mxu0 %v514
    %v1735 = vpop.f32.mrf.mxu0
    %v1736 = vadd.f32 %v1716, %v1735
    %1737 = vdwg.mxu0
    %1738 = vmatpush.msra.mxu0 %v1074
    %1739 = vmatpush.msra.mxu0 %v1067
    %1740 = vmatpush.msra.mxu0 %v1060
    %1741 = vmatpush.msra.mxu0 %v1053
    %1742 = vmatpush.msra.mxu0 %v1046
    %1743 = vmatpush.msra.mxu0 %v1039
    %1744 = vmatpush.msra.mxu0 %v1032
    %1745 = vmatpush.msra.mxu0 %v1025
    %1746 = vmatpush.msra.mxu0 %v1018
    %1747 = vmatpush.msra.mxu0 %v1011
    %1748 = vmatpush.msra.mxu0 %v1004
    %1749 = vmatpush.msra.mxu0 %v997
    %1750 = vmatpush.msra.mxu0 %v990
    %1751 = vmatpush.msra.mxu0 %v983
    %1752 = vmatpush.msra.mxu0 %v976
    %1753 = vmatpush.msra.mxu0 %v969
    %1754 = vmatmul.f32.gmra.mxu0 %v515
    %v1755 = vpop.f32.mrf.mxu0
    %v1756 = vadd.f32 %v1736, %v1755
    %1757 = vdwg.mxu0
    %1758 = vmatpush.msra.mxu0 %v1186
    %1759 = vmatpush.msra.mxu0 %v1179
    %1760 = vmatpush.msra.mxu0 %v1172
    %1761 = vmatpush.msra.mxu0 %v1165
    %1762 = vmatpush.msra.mxu0 %v1158
    %1763 = vmatpush.msra.mxu0 %v1151
    %1764 = vmatpush.msra.mxu0 %v1144
    %1765 = vmatpush.msra.mxu0 %v1137
    %1766 = vmatpush.msra.mxu0 %v1130
    %1767 = vmatpush.msra.mxu0 %v1123
    %1768 = vmatpush.msra.mxu0 %v1116
    %1769 = vmatpush.msra.mxu0 %v1109
    %1770 = vmatpush.msra.mxu0 %v1102
    %1771 = vmatpush.msra.mxu0 %v1095
    %1772 = vmatpush.msra.mxu0 %v1088
    %1773 = vmatpush.msra.mxu0 %v1081
    %1774 = vmatmul.f32.gmra.mxu0 %v516
    %v1775 = vpop.f32.mrf.mxu0
    %v1776 = vadd.f32 %v1756, %v1775
    %1777 = vdwg.mxu0
    %1778 = vmatpush.msra.mxu0 0.0
    %1779 = vmatpush.msra.mxu0 0.0
    %1780 = vmatpush.msra.mxu0 0.0
    %1781 = vmatpush.msra.mxu0 0.0
    %1782 = vmatpush.msra.mxu0 0.0
    %1783 = vmatpush.msra.mxu0 0.0
    %1784 = vmatpush.msra.mxu0 0.0
    %1785 = vmatpush.msra.mxu0 0.0
    %1786 = vmatpush.msra.mxu0 0.0
    %1787 = vmatpush.msra.mxu0 0.0
    %1788 = vmatpush.msra.mxu0 0.0
    %1789 = vmatpush.msra.mxu0 0.0
    %1790 = vmatpush.msra.mxu0 %v1214
    %1791 = vmatpush.msra.mxu0 %v1207
    %1792 = vmatpush.msra.mxu0 %v1200
    %1793 = vmatpush.msra.mxu0 %v1193
    %1794 = vmatmul.f32.gmra.mxu0 %v1236
    %v1795 = vpop.f32.mrf.mxu0
    %v1796 = vadd.f32 %v1776, %v1795
    %1797 = vdwg.mxu0
    %1798 = vmatpush.msra.mxu0 %v627
    %1799 = vmatpush.msra.mxu0 %v620
    %1800 = vmatpush.msra.mxu0 %v613
    %1801 = vmatpush.msra.mxu0 %v606
    %1802 = vmatpush.msra.mxu0 %v599
    %1803 = vmatpush.msra.mxu0 %v592
    %1804 = vmatpush.msra.mxu0 %v585
    %1805 = vmatpush.msra.mxu0 %v578
    %1806 = vmatpush.msra.mxu0 %v571
    %1807 = vmatpush.msra.mxu0 %v564
    %1808 = vmatpush.msra.mxu0 %v557
    %1809 = vmatpush.msra.mxu0 %v550
    %1810 = vmatpush.msra.mxu0 %v543
    %1811 = vmatpush.msra.mxu0 %v536
    %1812 = vmatpush.msra.mxu0 %v529
    %1813 = vmatpush.msra.mxu0 %v522
    %1814 = vmatmul.f32.gmra.mxu0 %v511
    %v1815 = vpop.f32.mrf.mxu0
    %v1816 = vadd.f32 %v1224, %v1815
    %1817 = vdwg.mxu0
    %1818 = vmatpush.msra.mxu0 %v739
    %1819 = vmatpush.msra.mxu0 %v732
    %1820 = vmatpush.msra.mxu0 %v725
    %1821 = vmatpush.msra.mxu0 %v718
    %1822 = vmatpush.msra.mxu0 %v711
    %1823 = vmatpush.msra.mxu0 %v704
    %1824 = vmatpush.msra.mxu0 %v697
    %1825 = vmatpush.msra.mxu0 %v690
    %1826 = vmatpush.msra.mxu0 %v683
    %1827 = vmatpush.msra.mxu0 %v676
    %1828 = vmatpush.msra.mxu0 %v669
    %1829 = vmatpush.msra.mxu0 %v662
    %1830 = vmatpush.msra.mxu0 %v655
    %1831 = vmatpush.msra.mxu0 %v648
    %1832 = vmatpush.msra.mxu0 %v641
    %1833 = vmatpush.msra.mxu0 %v634
    %1834 = vmatmul.f32.gmra.mxu0 %v512
    %v1835 = vpop.f32.mrf.mxu0
    %v1836 = vadd.f32 %v1816, %v1835
    %1837 = vdwg.mxu0
    %1838 = vmatpush.msra.mxu0 %v851
    %1839 = vmatpush.msra.mxu0 %v844
    %1840 = vmatpush.msra.mxu0 %v837
    %1841 = vmatpush.msra.mxu0 %v830
    %1842 = vmatpush.msra.mxu0 %v823
    %1843 = vmatpush.msra.mxu0 %v816
    %1844 = vmatpush.msra.mxu0 %v809
    %1845 = vmatpush.msra.mxu0 %v802
    %1846 = vmatpush.msra.mxu0 %v795
    %1847 = vmatpush.msra.mxu0 %v788
    %1848 = vmatpush.msra.mxu0 %v781
    %1849 = vmatpush.msra.mxu0 %v774
    %1850 = vmatpush.msra.mxu0 %v767
    %1851 = vmatpush.msra.mxu0 %v760
    %1852 = vmatpush.msra.mxu0 %v753
    %1853 = vmatpush.msra.mxu0 %v746
    %1854 = vmatmul.f32.gmra.mxu0 %v513
    %v1855 = vpop.f32.mrf.mxu0
    %v1856 = vadd.f32 %v1836, %v1855
    %1857 = vdwg.mxu0
    %1858 = vmatpush.msra.mxu0 %v963
    %1859 = vmatpush.msra.mxu0 %v956
    %1860 = vmatpush.msra.mxu0 %v949
    %1861 = vmatpush.msra.mxu0 %v942
    %1862 = vmatpush.msra.mxu0 %v935
    %1863 = vmatpush.msra.mxu0 %v928
    %1864 = vmatpush.msra.mxu0 %v921
    %1865 = vmatpush.msra.mxu0 %v914
    %1866 = vmatpush.msra.mxu0 %v907
    %1867 = vmatpush.msra.mxu0 %v900
    %1868 = vmatpush.msra.mxu0 %v893
    %1869 = vmatpush.msra.mxu0 %v886
    %1870 = vmatpush.msra.mxu0 %v879
    %1871 = vmatpush.msra.mxu0 %v872
    %1872 = vmatpush.msra.mxu0 %v865
    %1873 = vmatpush.msra.mxu0 %v858
    %1874 = vmatmul.f32.gmra.mxu0 %v514
    %v1875 = vpop.f32.mrf.mxu0
    %v1876 = vadd.f32 %v1856, %v1875
    %1877 = vdwg.mxu0
    %1878 = vmatpush.msra.mxu0 %v1075
    %1879 = vmatpush.msra.mxu0 %v1068
    %1880 = vmatpush.msra.mxu0 %v1061
    %1881 = vmatpush.msra.mxu0 %v1054
    %1882 = vmatpush.msra.mxu0 %v1047
    %1883 = vmatpush.msra.mxu0 %v1040
    %1884 = vmatpush.msra.mxu0 %v1033
    %1885 = vmatpush.msra.mxu0 %v1026
    %1886 = vmatpush.msra.mxu0 %v1019
    %1887 = vmatpush.msra.mxu0 %v1012
    %1888 = vmatpush.msra.mxu0 %v1005
    %1889 = vmatpush.msra.mxu0 %v998
    %1890 = vmatpush.msra.mxu0 %v991
    %1891 = vmatpush.msra.mxu0 %v984
    %1892 = vmatpush.msra.mxu0 %v977
    %1893 = vmatpush.msra.mxu0 %v970
    %1894 = vmatmul.f32.gmra.mxu0 %v515
    %v1895 = vpop.f32.mrf.mxu0
    %v1896 = vadd.f32 %v1876, %v1895
    %1897 = vdwg.mxu0
    %1898 = vmatpush.msra.mxu0 %v1187
    %1899 = vmatpush.msra.mxu0 %v1180
    %1900 = vmatpush.msra.mxu0 %v1173
    %1901 = vmatpush.msra.mxu0 %v1166
    %1902 = vmatpush.msra.mxu0 %v1159
    %1903 = vmatpush.msra.mxu0 %v1152
    %1904 = vmatpush.msra.mxu0 %v1145
    %1905 = vmatpush.msra.mxu0 %v1138
    %1906 = vmatpush.msra.mxu0 %v1131
    %1907 = vmatpush.msra.mxu0 %v1124
    %1908 = vmatpush.msra.mxu0 %v1117
    %1909 = vmatpush.msra.mxu0 %v1110
    %1910 = vmatpush.msra.mxu0 %v1103
    %1911 = vmatpush.msra.mxu0 %v1096
    %1912 = vmatpush.msra.mxu0 %v1089
    %1913 = vmatpush.msra.mxu0 %v1082
    %1914 = vmatmul.f32.gmra.mxu0 %v516
    %v1915 = vpop.f32.mrf.mxu0
    %v1916 = vadd.f32 %v1896, %v1915
    %1917 = vdwg.mxu0
    %1918 = vmatpush.msra.mxu0 0.0
    %1919 = vmatpush.msra.mxu0 0.0
    %1920 = vmatpush.msra.mxu0 0.0
    %1921 = vmatpush.msra.mxu0 0.0
    %1922 = vmatpush.msra.mxu0 0.0
    %1923 = vmatpush.msra.mxu0 0.0
    %1924 = vmatpush.msra.mxu0 0.0
    %1925 = vmatpush.msra.mxu0 0.0
    %1926 = vmatpush.msra.mxu0 0.0
    %1927 = vmatpush.msra.mxu0 0.0
    %1928 = vmatpush.msra.mxu0 0.0
    %1929 = vmatpush.msra.mxu0 0.0
    %1930 = vmatpush.msra.mxu0 %v1215
    %1931 = vmatpush.msra.mxu0 %v1208
    %1932 = vmatpush.msra.mxu0 %v1201
    %1933 = vmatpush.msra.mxu0 %v1194
    %1934 = vmatmul.f32.gmra.mxu0 %v1236
    %v1935 = vpop.f32.mrf.mxu0
    %v1936 = vadd.f32 %v1916, %v1935
    %1937 = vdwg.mxu0
    %1938 = vmatpush.msra.mxu0 %v628
    %1939 = vmatpush.msra.mxu0 %v621
    %1940 = vmatpush.msra.mxu0 %v614
    %1941 = vmatpush.msra.mxu0 %v607
    %1942 = vmatpush.msra.mxu0 %v600
    %1943 = vmatpush.msra.mxu0 %v593
    %1944 = vmatpush.msra.mxu0 %v586
    %1945 = vmatpush.msra.mxu0 %v579
    %1946 = vmatpush.msra.mxu0 %v572
    %1947 = vmatpush.msra.mxu0 %v565
    %1948 = vmatpush.msra.mxu0 %v558
    %1949 = vmatpush.msra.mxu0 %v551
    %1950 = vmatpush.msra.mxu0 %v544
    %1951 = vmatpush.msra.mxu0 %v537
    %1952 = vmatpush.msra.mxu0 %v530
    %1953 = vmatpush.msra.mxu0 %v523
    %1954 = vmatmul.f32.gmra.mxu0 %v511
    %v1955 = vpop.f32.mrf.mxu0
    %v1956 = vadd.f32 %v1225, %v1955
    %1957 = vdwg.mxu0
    %1958 = vmatpush.msra.mxu0 %v740
    %1959 = vmatpush.msra.mxu0 %v733
    %1960 = vmatpush.msra.mxu0 %v726
    %1961 = vmatpush.msra.mxu0 %v719
    %1962 = vmatpush.msra.mxu0 %v712
    %1963 = vmatpush.msra.mxu0 %v705
    %1964 = vmatpush.msra.mxu0 %v698
    %1965 = vmatpush.msra.mxu0 %v691
    %1966 = vmatpush.msra.mxu0 %v684
    %1967 = vmatpush.msra.mxu0 %v677
    %1968 = vmatpush.msra.mxu0 %v670
    %1969 = vmatpush.msra.mxu0 %v663
    %1970 = vmatpush.msra.mxu0 %v656
    %1971 = vmatpush.msra.mxu0 %v649
    %1972 = vmatpush.msra.mxu0 %v642
    %1973 = vmatpush.msra.mxu0 %v635
    %1974 = vmatmul.f32.gmra.mxu0 %v512
    %v1975 = vpop.f32.mrf.mxu0
    %v1976 = vadd.f32 %v1956, %v1975
    %1977 = vdwg.mxu0
    %1978 = vmatpush.msra.mxu0 %v852
    %1979 = vmatpush.msra.mxu0 %v845
    %1980 = vmatpush.msra.mxu0 %v838
    %1981 = vmatpush.msra.mxu0 %v831
    %1982 = vmatpush.msra.mxu0 %v824
    %1983 = vmatpush.msra.mxu0 %v817
    %1984 = vmatpush.msra.mxu0 %v810
    %1985 = vmatpush.msra.mxu0 %v803
    %1986 = vmatpush.msra.mxu0 %v796
    %1987 = vmatpush.msra.mxu0 %v789
    %1988 = vmatpush.msra.mxu0 %v782
    %1989 = vmatpush.msra.mxu0 %v775
    %1990 = vmatpush.msra.mxu0 %v768
    %1991 = vmatpush.msra.mxu0 %v761
    %1992 = vmatpush.msra.mxu0 %v754
    %1993 = vmatpush.msra.mxu0 %v747
    %1994 = vmatmul.f32.gmra.mxu0 %v513
    %v1995 = vpop.f32.mrf.mxu0
    %v1996 = vadd.f32 %v1976, %v1995
    %1997 = vdwg.mxu0
    %1998 = vmatpush.msra.mxu0 %v964
    %1999 = vmatpush.msra.mxu0 %v957
    %2000 = vmatpush.msra.mxu0 %v950
    %2001 = vmatpush.msra.mxu0 %v943
    %2002 = vmatpush.msra.mxu0 %v936
    %2003 = vmatpush.msra.mxu0 %v929
    %2004 = vmatpush.msra.mxu0 %v922
    %2005 = vmatpush.msra.mxu0 %v915
    %2006 = vmatpush.msra.mxu0 %v908
    %2007 = vmatpush.msra.mxu0 %v901
    %2008 = vmatpush.msra.mxu0 %v894
    %2009 = vmatpush.msra.mxu0 %v887
    %2010 = vmatpush.msra.mxu0 %v880
    %2011 = vmatpush.msra.mxu0 %v873
    %2012 = vmatpush.msra.mxu0 %v866
    %2013 = vmatpush.msra.mxu0 %v859
    %2014 = vmatmul.f32.gmra.mxu0 %v514
    %v2015 = vpop.f32.mrf.mxu0
    %v2016 = vadd.f32 %v1996, %v2015
    %2017 = vdwg.mxu0
    %2018 = vmatpush.msra.mxu0 %v1076
    %2019 = vmatpush.msra.mxu0 %v1069
    %2020 = vmatpush.msra.mxu0 %v1062
    %2021 = vmatpush.msra.mxu0 %v1055
    %2022 = vmatpush.msra.mxu0 %v1048
    %2023 = vmatpush.msra.mxu0 %v1041
    %2024 = vmatpush.msra.mxu0 %v1034
    %2025 = vmatpush.msra.mxu0 %v1027
    %2026 = vmatpush.msra.mxu0 %v1020
    %2027 = vmatpush.msra.mxu0 %v1013
    %2028 = vmatpush.msra.mxu0 %v1006
    %2029 = vmatpush.msra.mxu0 %v999
    %2030 = vmatpush.msra.mxu0 %v992
    %2031 = vmatpush.msra.mxu0 %v985
    %2032 = vmatpush.msra.mxu0 %v978
    %2033 = vmatpush.msra.mxu0 %v971
    %2034 = vmatmul.f32.gmra.mxu0 %v515
    %v2035 = vpop.f32.mrf.mxu0
    %v2036 = vadd.f32 %v2016, %v2035
    %2037 = vdwg.mxu0
    %2038 = vmatpush.msra.mxu0 %v1188
    %2039 = vmatpush.msra.mxu0 %v1181
    %2040 = vmatpush.msra.mxu0 %v1174
    %2041 = vmatpush.msra.mxu0 %v1167
    %2042 = vmatpush.msra.mxu0 %v1160
    %2043 = vmatpush.msra.mxu0 %v1153
    %2044 = vmatpush.msra.mxu0 %v1146
    %2045 = vmatpush.msra.mxu0 %v1139
    %2046 = vmatpush.msra.mxu0 %v1132
    %2047 = vmatpush.msra.mxu0 %v1125
    %2048 = vmatpush.msra.mxu0 %v1118
    %2049 = vmatpush.msra.mxu0 %v1111
    %2050 = vmatpush.msra.mxu0 %v1104
    %2051 = vmatpush.msra.mxu0 %v1097
    %2052 = vmatpush.msra.mxu0 %v1090
    %2053 = vmatpush.msra.mxu0 %v1083
    %2054 = vmatmul.f32.gmra.mxu0 %v516
    %v2055 = vpop.f32.mrf.mxu0
    %v2056 = vadd.f32 %v2036, %v2055
    %2057 = vdwg.mxu0
    %2058 = vmatpush.msra.mxu0 0.0
    %2059 = vmatpush.msra.mxu0 0.0
    %2060 = vmatpush.msra.mxu0 0.0
    %2061 = vmatpush.msra.mxu0 0.0
    %2062 = vmatpush.msra.mxu0 0.0
    %2063 = vmatpush.msra.mxu0 0.0
    %2064 = vmatpush.msra.mxu0 0.0
    %2065 = vmatpush.msra.mxu0 0.0
    %2066 = vmatpush.msra.mxu0 0.0
    %2067 = vmatpush.msra.mxu0 0.0
    %2068 = vmatpush.msra.mxu0 0.0
    %2069 = vmatpush.msra.mxu0 0.0
    %2070 = vmatpush.msra.mxu0 %v1216
    %2071 = vmatpush.msra.mxu0 %v1209
    %2072 = vmatpush.msra.mxu0 %v1202
    %2073 = vmatpush.msra.mxu0 %v1195
    %2074 = vmatmul.f32.gmra.mxu0 %v1236
    %v2075 = vpop.f32.mrf.mxu0
    %v2076 = vadd.f32 %v2056, %v2075
    %2077 = vdwg.mxu0
    %2078 = vmatpush.msra.mxu0 %v629
    %2079 = vmatpush.msra.mxu0 %v622
    %2080 = vmatpush.msra.mxu0 %v615
    %2081 = vmatpush.msra.mxu0 %v608
    %2082 = vmatpush.msra.mxu0 %v601
    %2083 = vmatpush.msra.mxu0 %v594
    %2084 = vmatpush.msra.mxu0 %v587
    %2085 = vmatpush.msra.mxu0 %v580
    %2086 = vmatpush.msra.mxu0 %v573
    %2087 = vmatpush.msra.mxu0 %v566
    %2088 = vmatpush.msra.mxu0 %v559
    %2089 = vmatpush.msra.mxu0 %v552
    %2090 = vmatpush.msra.mxu0 %v545
    %2091 = vmatpush.msra.mxu0 %v538
    %2092 = vmatpush.msra.mxu0 %v531
    %2093 = vmatpush.msra.mxu0 %v524
    %2094 = vmatmul.f32.gmra.mxu0 %v511
    %v2095 = vpop.f32.mrf.mxu0
    %v2096 = vadd.f32 %v1226, %v2095
    %2097 = vdwg.mxu0
    %2098 = vmatpush.msra.mxu0 %v741
    %2099 = vmatpush.msra.mxu0 %v734
    %2100 = vmatpush.msra.mxu0 %v727
    %2101 = vmatpush.msra.mxu0 %v720
    %2102 = vmatpush.msra.mxu0 %v713
    %2103 = vmatpush.msra.mxu0 %v706
    %2104 = vmatpush.msra.mxu0 %v699
    %2105 = vmatpush.msra.mxu0 %v692
    %2106 = vmatpush.msra.mxu0 %v685
    %2107 = vmatpush.msra.mxu0 %v678
    %2108 = vmatpush.msra.mxu0 %v671
    %2109 = vmatpush.msra.mxu0 %v664
    %2110 = vmatpush.msra.mxu0 %v657
    %2111 = vmatpush.msra.mxu0 %v650
    %2112 = vmatpush.msra.mxu0 %v643
    %2113 = vmatpush.msra.mxu0 %v636
    %2114 = vmatmul.f32.gmra.mxu0 %v512
    %v2115 = vpop.f32.mrf.mxu0
    %v2116 = vadd.f32 %v2096, %v2115
    %2117 = vdwg.mxu0
    %2118 = vmatpush.msra.mxu0 %v853
    %2119 = vmatpush.msra.mxu0 %v846
    %2120 = vmatpush.msra.mxu0 %v839
    %2121 = vmatpush.msra.mxu0 %v832
    %2122 = vmatpush.msra.mxu0 %v825
    %2123 = vmatpush.msra.mxu0 %v818
    %2124 = vmatpush.msra.mxu0 %v811
    %2125 = vmatpush.msra.mxu0 %v804
    %2126 = vmatpush.msra.mxu0 %v797
    %2127 = vmatpush.msra.mxu0 %v790
    %2128 = vmatpush.msra.mxu0 %v783
    %2129 = vmatpush.msra.mxu0 %v776
    %2130 = vmatpush.msra.mxu0 %v769
    %2131 = vmatpush.msra.mxu0 %v762
    %2132 = vmatpush.msra.mxu0 %v755
    %2133 = vmatpush.msra.mxu0 %v748
    %2134 = vmatmul.f32.gmra.mxu0 %v513
    %v2135 = vpop.f32.mrf.mxu0
    %v2136 = vadd.f32 %v2116, %v2135
    %2137 = vdwg.mxu0
    %2138 = vmatpush.msra.mxu0 %v965
    %2139 = vmatpush.msra.mxu0 %v958
    %2140 = vmatpush.msra.mxu0 %v951
    %2141 = vmatpush.msra.mxu0 %v944
    %2142 = vmatpush.msra.mxu0 %v937
    %2143 = vmatpush.msra.mxu0 %v930
    %2144 = vmatpush.msra.mxu0 %v923
    %2145 = vmatpush.msra.mxu0 %v916
    %2146 = vmatpush.msra.mxu0 %v909
    %2147 = vmatpush.msra.mxu0 %v902
    %2148 = vmatpush.msra.mxu0 %v895
    %2149 = vmatpush.msra.mxu0 %v888
    %2150 = vmatpush.msra.mxu0 %v881
    %2151 = vmatpush.msra.mxu0 %v874
    %2152 = vmatpush.msra.mxu0 %v867
    %2153 = vmatpush.msra.mxu0 %v860
    %2154 = vmatmul.f32.gmra.mxu0 %v514
    %v2155 = vpop.f32.mrf.mxu0
    %v2156 = vadd.f32 %v2136, %v2155
    %2157 = vdwg.mxu0
    %2158 = vmatpush.msra.mxu0 %v1077
    %2159 = vmatpush.msra.mxu0 %v1070
    %2160 = vmatpush.msra.mxu0 %v1063
    %2161 = vmatpush.msra.mxu0 %v1056
    %2162 = vmatpush.msra.mxu0 %v1049
    %2163 = vmatpush.msra.mxu0 %v1042
    %2164 = vmatpush.msra.mxu0 %v1035
    %2165 = vmatpush.msra.mxu0 %v1028
    %2166 = vmatpush.msra.mxu0 %v1021
    %2167 = vmatpush.msra.mxu0 %v1014
    %2168 = vmatpush.msra.mxu0 %v1007
    %2169 = vmatpush.msra.mxu0 %v1000
    %2170 = vmatpush.msra.mxu0 %v993
    %2171 = vmatpush.msra.mxu0 %v986
    %2172 = vmatpush.msra.mxu0 %v979
    %2173 = vmatpush.msra.mxu0 %v972
    %2174 = vmatmul.f32.gmra.mxu0 %v515
    %v2175 = vpop.f32.mrf.mxu0
    %v2176 = vadd.f32 %v2156, %v2175
    %2177 = vdwg.mxu0
    %2178 = vmatpush.msra.mxu0 %v1189
    %2179 = vmatpush.msra.mxu0 %v1182
    %2180 = vmatpush.msra.mxu0 %v1175
    %2181 = vmatpush.msra.mxu0 %v1168
    %2182 = vmatpush.msra.mxu0 %v1161
    %2183 = vmatpush.msra.mxu0 %v1154
    %2184 = vmatpush.msra.mxu0 %v1147
    %2185 = vmatpush.msra.mxu0 %v1140
    %2186 = vmatpush.msra.mxu0 %v1133
    %2187 = vmatpush.msra.mxu0 %v1126
    %2188 = vmatpush.msra.mxu0 %v1119
    %2189 = vmatpush.msra.mxu0 %v1112
    %2190 = vmatpush.msra.mxu0 %v1105
    %2191 = vmatpush.msra.mxu0 %v1098
    %2192 = vmatpush.msra.mxu0 %v1091
    %2193 = vmatpush.msra.mxu0 %v1084
    %2194 = vmatmul.f32.gmra.mxu0 %v516
    %v2195 = vpop.f32.mrf.mxu0
    %v2196 = vadd.f32 %v2176, %v2195
    %2197 = vdwg.mxu0
    %2198 = vmatpush.msra.mxu0 0.0
    %2199 = vmatpush.msra.mxu0 0.0
    %2200 = vmatpush.msra.mxu0 0.0
    %2201 = vmatpush.msra.mxu0 0.0
    %2202 = vmatpush.msra.mxu0 0.0
    %2203 = vmatpush.msra.mxu0 0.0
    %2204 = vmatpush.msra.mxu0 0.0
    %2205 = vmatpush.msra.mxu0 0.0
    %2206 = vmatpush.msra.mxu0 0.0
    %2207 = vmatpush.msra.mxu0 0.0
    %2208 = vmatpush.msra.mxu0 0.0
    %2209 = vmatpush.msra.mxu0 0.0
    %2210 = vmatpush.msra.mxu0 %v1217
    %2211 = vmatpush.msra.mxu0 %v1210
    %2212 = vmatpush.msra.mxu0 %v1203
    %2213 = vmatpush.msra.mxu0 %v1196
    %2214 = vmatmul.f32.gmra.mxu0 %v1236
    %v2215 = vpop.f32.mrf.mxu0
    %v2216 = vadd.f32 %v2196, %v2215
    %2217 = vdwg.mxu0
    %v2218 = vmax.f32 %v1376, 0.0
    %v2219 = vmax.f32 %v1516, 0.0
    %v2220 = vmax.f32 %v1656, 0.0
    %v2221 = vmax.f32 %v1796, 0.0
    %v2222 = vmax.f32 %v1936, 0.0
    %v2223 = vmax.f32 %v2076, 0.0
    %v2224 = vmax.f32 %v2216, 0.0
    %v2225 = vld [vmem:[%s6] sm:$0xff]
    %v2226 = vld [vmem:[%s6 + $0x8] sm:$0xff]
    %v2227 = vld [vmem:[%s6 + $0x10] sm:$0xff]
    %v2228 = vld [vmem:[%s6 + $0x18] sm:$0xff]
    %v2229 = vld [vmem:[%s6 + $0x20] sm:$0xff]
    %v2230 = vld [vmem:[%s6 + $0x28] sm:$0xff]
    %v2231 = vld [vmem:[%s6 + $0x30] sm:$0xff]
    %v2232 = vld [vmem:[%s6 + $0x38] sm:$0xff]
    %v2233 = vld [vmem:[%s6 + $0x40] sm:$0xff]
    %v2234 = vld [vmem:[%s6 + $0x48] sm:$0xff]
    %v2235 = vld [vmem:[%s6 + $0x50] sm:$0xff]
    %v2236 = vld [vmem:[%s6 + $0x58] sm:$0xff]
    %v2237 = vld [vmem:[%s6 + $0x60] sm:$0xff]
    %v2238 = vld [vmem:[%s6 + $0x68] sm:$0xff]
    %v2239 = vld [vmem:[%s6 + $0x70] sm:$0xff]
    %v2240 = vld [vmem:[%s6 + $0x78] sm:$0xff]
    %v2241 = vld [vmem:[%s6 + $0x80] sm:$0xff]
    %v2242 = vld [vmem:[%s6 + $0x88] sm:$0xff]
    %v2243 = vld [vmem:[%s6 + $0x90] sm:$0xff]
    %v2244 = vld [vmem:[%s6 + $0x98] sm:$0xff]
    %v2245 = vld [vmem:[%s6 + $0xa0] sm:$0xff]
    %v2246 = vld [vmem:[%s6 + $0xa8] sm:$0xff]
    %v2247 = vld [vmem:[%s6 + $0xb0] sm:$0xff]
    %v2248 = vld [vmem:[%s6 + $0xb8] sm:$0xff]
    %v2249 = vld [vmem:[%s6 + $0xc0] sm:$0xff]
    %v2250 = vld [vmem:[%s6 + $0xc8] sm:$0xff]
    %v2251 = vld [vmem:[%s6 + $0xd0] sm:$0xff]
    %v2252 = vld [vmem:[%s6 + $0xd8] sm:$0xff]
    %v2253 = vld [vmem:[%s6 + $0xe0] sm:$0xff]
    %v2254 = vld [vmem:[%s6 + $0xe8] sm:$0xff]
    %v2255 = vld [vmem:[%s6 + $0xf0] sm:$0xff]
    %v2256 = vld [vmem:[%s6 + $0xf8] sm:$0xff]
    %v2257 = vld [vmem:[%s6 + $0x100] sm:$0xff]
    %v2258 = vld [vmem:[%s6 + $0x108] sm:$0xff]
    %v2259 = vld [vmem:[%s6 + $0x110] sm:$0xff]
    %v2260 = vld [vmem:[%s6 + $0x118] sm:$0xff]
    %v2261 = vld [vmem:[%s6 + $0x120] sm:$0xff]
    %v2262 = vld [vmem:[%s6 + $0x128] sm:$0xff]
    %v2263 = vld [vmem:[%s6 + $0x130] sm:$0xff]
    %v2264 = vld [vmem:[%s6 + $0x138] sm:$0xff]
    %v2265 = vld [vmem:[%s6 + $0x140] sm:$0xff]
    %v2266 = vld [vmem:[%s6 + $0x148] sm:$0xff]
    %v2267 = vld [vmem:[%s6 + $0x150] sm:$0xff]
    %v2268 = vld [vmem:[%s6 + $0x158] sm:$0xff]
    %v2269 = vld [vmem:[%s6 + $0x160] sm:$0xff]
    %v2270 = vld [vmem:[%s6 + $0x168] sm:$0xff]
    %v2271 = vld [vmem:[%s6 + $0x170] sm:$0xff]
    %v2272 = vld [vmem:[%s6 + $0x178] sm:$0xff]
    %v2273 = vld [vmem:[%s6 + $0x180] sm:$0xff]
    %v2274 = vld [vmem:[%s6 + $0x188] sm:$0xff]
    %v2275 = vld [vmem:[%s6 + $0x190] sm:$0xff]
    %v2276 = vld [vmem:[%s6 + $0x198] sm:$0xff]
    %v2277 = vld [vmem:[%s6 + $0x1a0] sm:$0xff]
    %v2278 = vld [vmem:[%s6 + $0x1a8] sm:$0xff]
    %v2279 = vld [vmem:[%s6 + $0x1b0] sm:$0xff]
    %v2280 = vld [vmem:[%s6 + $0x1b8] sm:$0xff]
    %v2281 = vld [vmem:[%s6 + $0x1c0] sm:$0xff]
    %v2282 = vld [vmem:[%s6 + $0x1c8] sm:$0xff]
    %v2283 = vld [vmem:[%s6 + $0x1d0] sm:$0xff]
    %v2284 = vld [vmem:[%s6 + $0x1d8] sm:$0xff]
    %v2285 = vld [vmem:[%s6 + $0x1e0] sm:$0xff]
    %v2286 = vld [vmem:[%s6 + $0x1e8] sm:$0xff]
    %v2287 = vld [vmem:[%s6 + $0x1f0] sm:$0xff]
    %v2288 = vld [vmem:[%s6 + $0x1f8] sm:$0xff]
    %v2289 = vld [vmem:[%s6 + $0x200] sm:$0xff]
    %v2290 = vld [vmem:[%s6 + $0x208] sm:$0xff]
    %v2291 = vld [vmem:[%s6 + $0x210] sm:$0xff]
    %v2292 = vld [vmem:[%s6 + $0x218] sm:$0xff]
    %v2293 = vld [vmem:[%s6 + $0x220] sm:$0xff]
    %v2294 = vld [vmem:[%s6 + $0x228] sm:$0xff]
    %v2295 = vld [vmem:[%s6 + $0x230] sm:$0xff]
    %v2296 = vld [vmem:[%s6 + $0x238] sm:$0xff]
    %v2297 = vld [vmem:[%s6 + $0x240] sm:$0xff]
    %v2298 = vld [vmem:[%s6 + $0x248] sm:$0xff]
    %v2299 = vld [vmem:[%s6 + $0x250] sm:$0xff]
    %v2300 = vld [vmem:[%s6 + $0x258] sm:$0xff]
    %v2301 = vld [vmem:[%s6 + $0x260] sm:$0xff]
    %v2302 = vld [vmem:[%s6 + $0x268] sm:$0xff]
    %v2303 = vld [vmem:[%s6 + $0x270] sm:$0xff]
    %v2304 = vld [vmem:[%s6 + $0x278] sm:$0xff]
    %v2305 = vld [vmem:[%s6 + $0x280] sm:$0xff]
    %v2306 = vld [vmem:[%s6 + $0x288] sm:$0xff]
    %v2307 = vld [vmem:[%s6 + $0x290] sm:$0xff]
    %v2308 = vld [vmem:[%s6 + $0x298] sm:$0xff]
    %v2309 = vld [vmem:[%s6 + $0x2a0] sm:$0xff]
    %v2310 = vld [vmem:[%s6 + $0x2a8] sm:$0xff]
    %v2311 = vld [vmem:[%s6 + $0x2b0] sm:$0xff]
    %v2312 = vld [vmem:[%s6 + $0x2b8] sm:$0xff]
    %v2313 = vld [vmem:[%s6 + $0x2c0] sm:$0xff]
    %v2314 = vld [vmem:[%s6 + $0x2c8] sm:$0xff]
    %v2315 = vld [vmem:[%s6 + $0x2d0] sm:$0xff]
    %v2316 = vld [vmem:[%s6 + $0x2d8] sm:$0xff]
    %v2317 = vld [vmem:[%s6 + $0x2e0] sm:$0xff]
    %v2318 = vld [vmem:[%s6 + $0x2e8] sm:$0xff]
    %v2319 = vld [vmem:[%s6 + $0x2f0] sm:$0xff]
    %v2320 = vld [vmem:[%s6 + $0x2f8] sm:$0xff]
    %v2321 = vld [vmem:[%s6 + $0x300] sm:$0xff]
    %v2322 = vld [vmem:[%s6 + $0x308] sm:$0xff]
    %v2323 = vld [vmem:[%s6 + $0x310] sm:$0xff]
    %v2324 = vld [vmem:[%s6 + $0x318] sm:$0xff]
    %v2325 = vld [vmem:[#allocation10] sm:$0x1]
    %v2327 = vperm.slane %v2325, 0
    %v2330 = vsel %vm1234, %v2224, 0
    %2332 = vmatpush.msra.mxu0 %v2240
    %2333 = vmatpush.msra.mxu0 %v2239
    %2334 = vmatpush.msra.mxu0 %v2238
    %2335 = vmatpush.msra.mxu0 %v2237
    %2336 = vmatpush.msra.mxu0 %v2236
    %2337 = vmatpush.msra.mxu0 %v2235
    %2338 = vmatpush.msra.mxu0 %v2234
    %2339 = vmatpush.msra.mxu0 %v2233
    %2340 = vmatpush.msra.mxu0 %v2232
    %2341 = vmatpush.msra.mxu0 %v2231
    %2342 = vmatpush.msra.mxu0 %v2230
    %2343 = vmatpush.msra.mxu0 %v2229
    %2344 = vmatpush.msra.mxu0 %v2228
    %2345 = vmatpush.msra.mxu0 %v2227
    %2346 = vmatpush.msra.mxu0 %v2226
    %2347 = vmatpush.msra.mxu0 %v2225
    %2348 = vmatmul.f32.gmra.mxu0 %v2218
    %v2349 = vpop.f32.mrf.mxu0
    %v2350 = vadd.f32 %v2327, %v2349
    %2351 = vdwg.mxu0
    %2352 = vmatpush.msra.mxu0 %v2256
    %2353 = vmatpush.msra.mxu0 %v2255
    %2354 = vmatpush.msra.mxu0 %v2254
    %2355 = vmatpush.msra.mxu0 %v2253
    %2356 = vmatpush.msra.mxu0 %v2252
    %2357 = vmatpush.msra.mxu0 %v2251
    %2358 = vmatpush.msra.mxu0 %v2250
    %2359 = vmatpush.msra.mxu0 %v2249
    %2360 = vmatpush.msra.mxu0 %v2248
    %2361 = vmatpush.msra.mxu0 %v2247
    %2362 = vmatpush.msra.mxu0 %v2246
    %2363 = vmatpush.msra.mxu0 %v2245
    %2364 = vmatpush.msra.mxu0 %v2244
    %2365 = vmatpush.msra.mxu0 %v2243
    %2366 = vmatpush.msra.mxu0 %v2242
    %2367 = vmatpush.msra.mxu0 %v2241
    %2368 = vmatmul.f32.gmra.mxu0 %v2219
    %v2369 = vpop.f32.mrf.mxu0
    %v2370 = vadd.f32 %v2350, %v2369
    %2371 = vdwg.mxu0
    %2372 = vmatpush.msra.mxu0 %v2272
    %2373 = vmatpush.msra.mxu0 %v2271
    %2374 = vmatpush.msra.mxu0 %v2270
    %2375 = vmatpush.msra.mxu0 %v2269
    %2376 = vmatpush.msra.mxu0 %v2268
    %2377 = vmatpush.msra.mxu0 %v2267
    %2378 = vmatpush.msra.mxu0 %v2266
    %2379 = vmatpush.msra.mxu0 %v2265
    %2380 = vmatpush.msra.mxu0 %v2264
    %2381 = vmatpush.msra.mxu0 %v2263
    %2382 = vmatpush.msra.mxu0 %v2262
    %2383 = vmatpush.msra.mxu0 %v2261
    %2384 = vmatpush.msra.mxu0 %v2260
    %2385 = vmatpush.msra.mxu0 %v2259
    %2386 = vmatpush.msra.mxu0 %v2258
    %2387 = vmatpush.msra.mxu0 %v2257
    %2388 = vmatmul.f32.gmra.mxu0 %v2220
    %v2389 = vpop.f32.mrf.mxu0
    %v2390 = vadd.f32 %v2370, %v2389
    %2391 = vdwg.mxu0
    %2392 = vmatpush.msra.mxu0 %v2288
    %2393 = vmatpush.msra.mxu0 %v2287
    %2394 = vmatpush.msra.mxu0 %v2286
    %2395 = vmatpush.msra.mxu0 %v2285
    %2396 = vmatpush.msra.mxu0 %v2284
    %2397 = vmatpush.msra.mxu0 %v2283
    %2398 = vmatpush.msra.mxu0 %v2282
    %2399 = vmatpush.msra.mxu0 %v2281
    %2400 = vmatpush.msra.mxu0 %v2280
    %2401 = vmatpush.msra.mxu0 %v2279
    %2402 = vmatpush.msra.mxu0 %v2278
    %2403 = vmatpush.msra.mxu0 %v2277
    %2404 = vmatpush.msra.mxu0 %v2276
    %2405 = vmatpush.msra.mxu0 %v2275
    %2406 = vmatpush.msra.mxu0 %v2274
    %2407 = vmatpush.msra.mxu0 %v2273
    %2408 = vmatmul.f32.gmra.mxu0 %v2221
    %v2409 = vpop.f32.mrf.mxu0
    %v2410 = vadd.f32 %v2390, %v2409
    %2411 = vdwg.mxu0
    %2412 = vmatpush.msra.mxu0 %v2304
    %2413 = vmatpush.msra.mxu0 %v2303
    %2414 = vmatpush.msra.mxu0 %v2302
    %2415 = vmatpush.msra.mxu0 %v2301
    %2416 = vmatpush.msra.mxu0 %v2300
    %2417 = vmatpush.msra.mxu0 %v2299
    %2418 = vmatpush.msra.mxu0 %v2298
    %2419 = vmatpush.msra.mxu0 %v2297
    %2420 = vmatpush.msra.mxu0 %v2296
    %2421 = vmatpush.msra.mxu0 %v2295
    %2422 = vmatpush.msra.mxu0 %v2294
    %2423 = vmatpush.msra.mxu0 %v2293
    %2424 = vmatpush.msra.mxu0 %v2292
    %2425 = vmatpush.msra.mxu0 %v2291
    %2426 = vmatpush.msra.mxu0 %v2290
    %2427 = vmatpush.msra.mxu0 %v2289
    %2428 = vmatmul.f32.gmra.mxu0 %v2222
    %v2429 = vpop.f32.mrf.mxu0
    %v2430 = vadd.f32 %v2410, %v2429
    %2431 = vdwg.mxu0
    %2432 = vmatpush.msra.mxu0 %v2320
    %2433 = vmatpush.msra.mxu0 %v2319
    %2434 = vmatpush.msra.mxu0 %v2318
    %2435 = vmatpush.msra.mxu0 %v2317
    %2436 = vmatpush.msra.mxu0 %v2316
    %2437 = vmatpush.msra.mxu0 %v2315
    %2438 = vmatpush.msra.mxu0 %v2314
    %2439 = vmatpush.msra.mxu0 %v2313
    %2440 = vmatpush.msra.mxu0 %v2312
    %2441 = vmatpush.msra.mxu0 %v2311
    %2442 = vmatpush.msra.mxu0 %v2310
    %2443 = vmatpush.msra.mxu0 %v2309
    %2444 = vmatpush.msra.mxu0 %v2308
    %2445 = vmatpush.msra.mxu0 %v2307
    %2446 = vmatpush.msra.mxu0 %v2306
    %2447 = vmatpush.msra.mxu0 %v2305
    %2448 = vmatmul.f32.gmra.mxu0 %v2223
    %v2449 = vpop.f32.mrf.mxu0
    %v2450 = vadd.f32 %v2430, %v2449
    %2451 = vdwg.mxu0
    %2452 = vmatpush.msra.mxu0 0.0
    %2453 = vmatpush.msra.mxu0 0.0
    %2454 = vmatpush.msra.mxu0 0.0
    %2455 = vmatpush.msra.mxu0 0.0
    %2456 = vmatpush.msra.mxu0 0.0
    %2457 = vmatpush.msra.mxu0 0.0
    %2458 = vmatpush.msra.mxu0 0.0
    %2459 = vmatpush.msra.mxu0 0.0
    %2460 = vmatpush.msra.mxu0 0.0
    %2461 = vmatpush.msra.mxu0 0.0
    %2462 = vmatpush.msra.mxu0 0.0
    %2463 = vmatpush.msra.mxu0 0.0
    %2464 = vmatpush.msra.mxu0 %v2324
    %2465 = vmatpush.msra.mxu0 %v2323
    %2466 = vmatpush.msra.mxu0 %v2322
    %2467 = vmatpush.msra.mxu0 %v2321
    %2468 = vmatmul.f32.gmra.mxu0 %v2330
    %v2469 = vpop.f32.mrf.mxu0
    %v2470 = vadd.f32 %v2450, %v2469
    %2471 = vdwg.mxu0
    %v2472 = vld [vmem:[%s8] sm:$0xff]
    %v2473 = vld [vmem:[%s8 + $0x8] sm:$0xff]
    %v2474 = vld [vmem:[%s8 + $0x10] sm:$0xff]
    %v2475 = vld [vmem:[%s8 + $0x18] sm:$0xff]
    %v2476 = vld [vmem:[%s8 + $0x20] sm:$0xff]
    %v2477 = vld [vmem:[%s8 + $0x28] sm:$0xff]
    %v2478 = vld [vmem:[%s8 + $0x30] sm:$0xff]
    %v2479 = vld [vmem:[%s8 + $0x38] sm:$0xff]
    %v2480 = vld [vmem:[%s8 + $0x40] sm:$0xff]
    %v2481 = vld [vmem:[%s8 + $0x48] sm:$0xff]
    %v2482 = vld [vmem:[%s8 + $0x50] sm:$0xff]
    %v2483 = vld [vmem:[%s8 + $0x58] sm:$0xff]
    %v2484 = vld [vmem:[%s8 + $0x60] sm:$0xff]
    %v2485 = vld [vmem:[%s8 + $0x68] sm:$0xff]
    %v2486 = vld [vmem:[%s8 + $0x70] sm:$0xff]
    %v2487 = vld [vmem:[%s8 + $0x78] sm:$0xff]
    %v2488 = vld [vmem:[%s8 + $0x80] sm:$0xff]
    %v2489 = vld [vmem:[%s8 + $0x88] sm:$0xff]
    %v2490 = vld [vmem:[%s8 + $0x90] sm:$0xff]
    %v2491 = vld [vmem:[%s8 + $0x98] sm:$0xff]
    %v2492 = vld [vmem:[%s8 + $0xa0] sm:$0xff]
    %v2493 = vld [vmem:[%s8 + $0xa8] sm:$0xff]
    %v2494 = vld [vmem:[%s8 + $0xb0] sm:$0xff]
    %v2495 = vld [vmem:[%s8 + $0xb8] sm:$0xff]
    %v2496 = vld [vmem:[%s8 + $0xc0] sm:$0xff]
    %v2497 = vld [vmem:[%s8 + $0xc8] sm:$0xff]
    %v2498 = vld [vmem:[%s8 + $0xd0] sm:$0xff]
    %v2499 = vld [vmem:[%s8 + $0xd8] sm:$0xff]
    %v2500 = vld [vmem:[%s8 + $0xe0] sm:$0xff]
    %v2501 = vld [vmem:[%s8 + $0xe8] sm:$0xff]
    %v2502 = vld [vmem:[%s8 + $0xf0] sm:$0xff]
    %v2503 = vld [vmem:[%s8 + $0xf8] sm:$0xff]
    %v2504 = vld [vmem:[%s8 + $0x100] sm:$0xff]
    %v2505 = vld [vmem:[%s8 + $0x108] sm:$0xff]
    %v2506 = vld [vmem:[%s8 + $0x110] sm:$0xff]
    %v2507 = vld [vmem:[%s8 + $0x118] sm:$0xff]
    %v2508 = vld [vmem:[%s8 + $0x120] sm:$0xff]
    %v2509 = vld [vmem:[%s8 + $0x128] sm:$0xff]
    %v2510 = vld [vmem:[%s8 + $0x130] sm:$0xff]
    %v2511 = vld [vmem:[%s8 + $0x138] sm:$0xff]
    %v2512 = vld [vmem:[%s8 + $0x140] sm:$0xff]
    %v2513 = vld [vmem:[%s8 + $0x148] sm:$0xff]
    %v2514 = vld [vmem:[%s8 + $0x150] sm:$0xff]
    %v2515 = vld [vmem:[%s8 + $0x158] sm:$0xff]
    %v2516 = vld [vmem:[%s8 + $0x160] sm:$0xff]
    %v2517 = vld [vmem:[%s8 + $0x168] sm:$0xff]
    %v2518 = vld [vmem:[%s8 + $0x170] sm:$0xff]
    %v2519 = vld [vmem:[%s8 + $0x178] sm:$0xff]
    %v2520 = vld [vmem:[%s8 + $0x180] sm:$0xff]
    %v2521 = vld [vmem:[%s8 + $0x188] sm:$0xff]
    %v2522 = vld [vmem:[%s8 + $0x190] sm:$0xff]
    %v2523 = vld [vmem:[%s8 + $0x198] sm:$0xff]
    %v2524 = vld [vmem:[%s8 + $0x1a0] sm:$0xff]
    %v2525 = vld [vmem:[%s8 + $0x1a8] sm:$0xff]
    %v2526 = vld [vmem:[%s8 + $0x1b0] sm:$0xff]
    %v2527 = vld [vmem:[%s8 + $0x1b8] sm:$0xff]
    %v2528 = vld [vmem:[%s8 + $0x1c0] sm:$0xff]
    %v2529 = vld [vmem:[%s8 + $0x1c8] sm:$0xff]
    %v2530 = vld [vmem:[%s8 + $0x1d0] sm:$0xff]
    %v2531 = vld [vmem:[%s8 + $0x1d8] sm:$0xff]
    %v2532 = vld [vmem:[%s8 + $0x1e0] sm:$0xff]
    %v2533 = vld [vmem:[%s8 + $0x1e8] sm:$0xff]
    %v2534 = vld [vmem:[%s8 + $0x1f0] sm:$0xff]
    %v2535 = vld [vmem:[%s8 + $0x1f8] sm:$0xff]
    %v2536 = vld [vmem:[%s8 + $0x200] sm:$0xff]
    %v2537 = vld [vmem:[%s8 + $0x208] sm:$0xff]
    %v2538 = vld [vmem:[%s8 + $0x210] sm:$0xff]
    %v2539 = vld [vmem:[%s8 + $0x218] sm:$0xff]
    %v2540 = vld [vmem:[%s8 + $0x220] sm:$0xff]
    %v2541 = vld [vmem:[%s8 + $0x228] sm:$0xff]
    %v2542 = vld [vmem:[%s8 + $0x230] sm:$0xff]
    %v2543 = vld [vmem:[%s8 + $0x238] sm:$0xff]
    %v2544 = vld [vmem:[%s8 + $0x240] sm:$0xff]
    %v2545 = vld [vmem:[%s8 + $0x248] sm:$0xff]
    %v2546 = vld [vmem:[%s8 + $0x250] sm:$0xff]
    %v2547 = vld [vmem:[%s8 + $0x258] sm:$0xff]
    %v2548 = vld [vmem:[%s8 + $0x260] sm:$0xff]
    %v2549 = vld [vmem:[%s8 + $0x268] sm:$0xff]
    %v2550 = vld [vmem:[%s8 + $0x270] sm:$0xff]
    %v2551 = vld [vmem:[%s8 + $0x278] sm:$0xff]
    %v2552 = vld [vmem:[%s8 + $0x280] sm:$0xff]
    %v2553 = vld [vmem:[%s8 + $0x288] sm:$0xff]
    %v2554 = vld [vmem:[%s8 + $0x290] sm:$0xff]
    %v2555 = vld [vmem:[%s8 + $0x298] sm:$0xff]
    %v2556 = vld [vmem:[%s8 + $0x2a0] sm:$0xff]
    %v2557 = vld [vmem:[%s8 + $0x2a8] sm:$0xff]
    %v2558 = vld [vmem:[%s8 + $0x2b0] sm:$0xff]
    %v2559 = vld [vmem:[%s8 + $0x2b8] sm:$0xff]
    %v2560 = vld [vmem:[%s8 + $0x2c0] sm:$0xff]
    %v2561 = vld [vmem:[%s8 + $0x2c8] sm:$0xff]
    %v2562 = vld [vmem:[%s8 + $0x2d0] sm:$0xff]
    %v2563 = vld [vmem:[%s8 + $0x2d8] sm:$0xff]
    %v2564 = vld [vmem:[%s8 + $0x2e0] sm:$0xff]
    %v2565 = vld [vmem:[%s8 + $0x2e8] sm:$0xff]
    %v2566 = vld [vmem:[%s8 + $0x2f0] sm:$0xff]
    %v2567 = vld [vmem:[%s8 + $0x2f8] sm:$0xff]
    %v2568 = vld [vmem:[%s8 + $0x300] sm:$0xff]
    %v2569 = vld [vmem:[%s8 + $0x308] sm:$0xff]
    %v2570 = vld [vmem:[%s8 + $0x310] sm:$0xff]
    %v2571 = vld [vmem:[%s8 + $0x318] sm:$0xff]
    %v2572 = vld [vmem:[#allocation12] sm:$0x1]
    %v2574 = vperm.slane %v2572, 0
    %2576 = vmatpush.msra.mxu0 %v2487
    %2577 = vmatpush.msra.mxu0 %v2486
    %2578 = vmatpush.msra.mxu0 %v2485
    %2579 = vmatpush.msra.mxu0 %v2484
    %2580 = vmatpush.msra.mxu0 %v2483
    %2581 = vmatpush.msra.mxu0 %v2482
    %2582 = vmatpush.msra.mxu0 %v2481
    %2583 = vmatpush.msra.mxu0 %v2480
    %2584 = vmatpush.msra.mxu0 %v2479
    %2585 = vmatpush.msra.mxu0 %v2478
    %2586 = vmatpush.msra.mxu0 %v2477
    %2587 = vmatpush.msra.mxu0 %v2476
    %2588 = vmatpush.msra.mxu0 %v2475
    %2589 = vmatpush.msra.mxu0 %v2474
    %2590 = vmatpush.msra.mxu0 %v2473
    %2591 = vmatpush.msra.mxu0 %v2472
    %2592 = vmatmul.f32.gmra.mxu0 %v2218
    %v2593 = vpop.f32.mrf.mxu0
    %v2594 = vadd.f32 %v2574, %v2593
    %2595 = vdwg.mxu0
    %2596 = vmatpush.msra.mxu0 %v2503
    %2597 = vmatpush.msra.mxu0 %v2502
    %2598 = vmatpush.msra.mxu0 %v2501
    %2599 = vmatpush.msra.mxu0 %v2500
    %2600 = vmatpush.msra.mxu0 %v2499
    %2601 = vmatpush.msra.mxu0 %v2498
    %2602 = vmatpush.msra.mxu0 %v2497
    %2603 = vmatpush.msra.mxu0 %v2496
    %2604 = vmatpush.msra.mxu0 %v2495
    %2605 = vmatpush.msra.mxu0 %v2494
    %2606 = vmatpush.msra.mxu0 %v2493
    %2607 = vmatpush.msra.mxu0 %v2492
    %2608 = vmatpush.msra.mxu0 %v2491
    %2609 = vmatpush.msra.mxu0 %v2490
    %2610 = vmatpush.msra.mxu0 %v2489
    %2611 = vmatpush.msra.mxu0 %v2488
    %2612 = vmatmul.f32.gmra.mxu0 %v2219
    %v2613 = vpop.f32.mrf.mxu0
    %v2614 = vadd.f32 %v2594, %v2613
    %2615 = vdwg.mxu0
    %2616 = vmatpush.msra.mxu0 %v2519
    %2617 = vmatpush.msra.mxu0 %v2518
    %2618 = vmatpush.msra.mxu0 %v2517
    %2619 = vmatpush.msra.mxu0 %v2516
    %2620 = vmatpush.msra.mxu0 %v2515
    %2621 = vmatpush.msra.mxu0 %v2514
    %2622 = vmatpush.msra.mxu0 %v2513
    %2623 = vmatpush.msra.mxu0 %v2512
    %2624 = vmatpush.msra.mxu0 %v2511
    %2625 = vmatpush.msra.mxu0 %v2510
    %2626 = vmatpush.msra.mxu0 %v2509
    %2627 = vmatpush.msra.mxu0 %v2508
    %2628 = vmatpush.msra.mxu0 %v2507
    %2629 = vmatpush.msra.mxu0 %v2506
    %2630 = vmatpush.msra.mxu0 %v2505
    %2631 = vmatpush.msra.mxu0 %v2504
    %2632 = vmatmul.f32.gmra.mxu0 %v2220
    %v2633 = vpop.f32.mrf.mxu0
    %v2634 = vadd.f32 %v2614, %v2633
    %2635 = vdwg.mxu0
    %2636 = vmatpush.msra.mxu0 %v2535
    %2637 = vmatpush.msra.mxu0 %v2534
    %2638 = vmatpush.msra.mxu0 %v2533
    %2639 = vmatpush.msra.mxu0 %v2532
    %2640 = vmatpush.msra.mxu0 %v2531
    %2641 = vmatpush.msra.mxu0 %v2530
    %2642 = vmatpush.msra.mxu0 %v2529
    %2643 = vmatpush.msra.mxu0 %v2528
    %2644 = vmatpush.msra.mxu0 %v2527
    %2645 = vmatpush.msra.mxu0 %v2526
    %2646 = vmatpush.msra.mxu0 %v2525
    %2647 = vmatpush.msra.mxu0 %v2524
    %2648 = vmatpush.msra.mxu0 %v2523
    %2649 = vmatpush.msra.mxu0 %v2522
    %2650 = vmatpush.msra.mxu0 %v2521
    %2651 = vmatpush.msra.mxu0 %v2520
    %2652 = vmatmul.f32.gmra.mxu0 %v2221
    %v2653 = vpop.f32.mrf.mxu0
    %v2654 = vadd.f32 %v2634, %v2653
    %2655 = vdwg.mxu0
    %2656 = vmatpush.msra.mxu0 %v2551
    %2657 = vmatpush.msra.mxu0 %v2550
    %2658 = vmatpush.msra.mxu0 %v2549
    %2659 = vmatpush.msra.mxu0 %v2548
    %2660 = vmatpush.msra.mxu0 %v2547
    %2661 = vmatpush.msra.mxu0 %v2546
    %2662 = vmatpush.msra.mxu0 %v2545
    %2663 = vmatpush.msra.mxu0 %v2544
    %2664 = vmatpush.msra.mxu0 %v2543
    %2665 = vmatpush.msra.mxu0 %v2542
    %2666 = vmatpush.msra.mxu0 %v2541
    %2667 = vmatpush.msra.mxu0 %v2540
    %2668 = vmatpush.msra.mxu0 %v2539
    %2669 = vmatpush.msra.mxu0 %v2538
    %2670 = vmatpush.msra.mxu0 %v2537
    %2671 = vmatpush.msra.mxu0 %v2536
    %2672 = vmatmul.f32.gmra.mxu0 %v2222
    %v2673 = vpop.f32.mrf.mxu0
    %v2674 = vadd.f32 %v2654, %v2673
    %2675 = vdwg.mxu0
    %2676 = vmatpush.msra.mxu0 %v2567
    %2677 = vmatpush.msra.mxu0 %v2566
    %2678 = vmatpush.msra.mxu0 %v2565
    %2679 = vmatpush.msra.mxu0 %v2564
    %2680 = vmatpush.msra.mxu0 %v2563
    %2681 = vmatpush.msra.mxu0 %v2562
    %2682 = vmatpush.msra.mxu0 %v2561
    %2683 = vmatpush.msra.mxu0 %v2560
    %2684 = vmatpush.msra.mxu0 %v2559
    %2685 = vmatpush.msra.mxu0 %v2558
    %2686 = vmatpush.msra.mxu0 %v2557
    %2687 = vmatpush.msra.mxu0 %v2556
    %2688 = vmatpush.msra.mxu0 %v2555
    %2689 = vmatpush.msra.mxu0 %v2554
    %2690 = vmatpush.msra.mxu0 %v2553
    %2691 = vmatpush.msra.mxu0 %v2552
    %2692 = vmatmul.f32.gmra.mxu0 %v2223
    %v2693 = vpop.f32.mrf.mxu0
    %v2694 = vadd.f32 %v2674, %v2693
    %2695 = vdwg.mxu0
    %2696 = vmatpush.msra.mxu0 0.0
    %2697 = vmatpush.msra.mxu0 0.0
    %2698 = vmatpush.msra.mxu0 0.0
    %2699 = vmatpush.msra.mxu0 0.0
    %2700 = vmatpush.msra.mxu0 0.0
    %2701 = vmatpush.msra.mxu0 0.0
    %2702 = vmatpush.msra.mxu0 0.0
    %2703 = vmatpush.msra.mxu0 0.0
    %2704 = vmatpush.msra.mxu0 0.0
    %2705 = vmatpush.msra.mxu0 0.0
    %2706 = vmatpush.msra.mxu0 0.0
    %2707 = vmatpush.msra.mxu0 0.0
    %2708 = vmatpush.msra.mxu0 %v2571
    %2709 = vmatpush.msra.mxu0 %v2570
    %2710 = vmatpush.msra.mxu0 %v2569
    %2711 = vmatpush.msra.mxu0 %v2568
    %2712 = vmatmul.f32.gmra.mxu0 %v2330
    %v2713 = vpop.f32.mrf.mxu0
    %v2714 = vadd.f32 %v2694, %v2713
    %2715 = vdwg.mxu0
    %vm2716 = vcmp.gt.f32.partialorder %v2714, 20.0
    %v2717 = vmin.f32 %v2714, 20.0
    %v2718 = vmul.f32 %v2717, 1.442695
    %v2719 = vpow.pop %v2718
    %v2720 = vadd.f32 %v2719, 1.0
    %v2721 = vlog2.pop %v2720
    %v2722 = vmul.f32 %v2721, 0.6931472
    %v2723 = vmul.f32 -0.5, %v2719
    %v2724 = vadd.f32 %v2723, 1.0
    %v2725 = vmul.f32 %v2724, %v2719
    %v2726 = vand.u32 2147483647, %v2719
    %vm2727 = vcmp.lt.f32.partialorder %v2726, 0.0004427343
    %v2728 = vsel %vm2727, %v2725, %v2722
    %v2729 = vsel %vm2716, %v2714, %v2728
    %v2730 = vld [vmem:[%s1] sm:$0xff]
    %v2731 = vld [vmem:[%s1 + $0x8] sm:$0xff]
    %v2732 = vld [vmem:[%s1 + $0x10] sm:$0xff]
    %v2733 = vld [vmem:[%s1 + $0x18] sm:$0xff]
    %v2734 = vld [vmem:[%s1 + $0x20] sm:$0xff]
    %v2735 = vld [vmem:[%s1 + $0x28] sm:$0xff]
    %v2736 = vld [vmem:[%s1 + $0x30] sm:$0xff]
    %v2737 = vld [vmem:[%s1 + $0x38] sm:$0xff]
    %v2738 = vld [vmem:[%s1 + $0x40] sm:$0xff]
    %v2739 = vld [vmem:[%s1 + $0x48] sm:$0xff]
    %v2740 = vmul.f32 %v2729, %v2730
    %v2741 = vmul.f32 %v2729, %v2731
    %v2742 = vmul.f32 %v2729, %v2732
    %v2743 = vmul.f32 %v2729, %v2733
    %v2744 = vmul.f32 %v2729, %v2734
    %v2745 = vmul.f32 %v2729, %v2735
    %v2746 = vmul.f32 %v2729, %v2736
    %v2747 = vmul.f32 %v2729, %v2737
    %v2748 = vmul.f32 %v2729, %v2738
    %v2749 = vmul.f32 %v2729, %v2739
    %v2750 = vadd.f32 %v2470, %v2740
    %v2751 = vadd.f32 %v2470, %v2741
    %v2752 = vadd.f32 %v2470, %v2742
    %v2753 = vadd.f32 %v2470, %v2743
    %v2754 = vadd.f32 %v2470, %v2744
    %v2755 = vadd.f32 %v2470, %v2745
    %v2756 = vadd.f32 %v2470, %v2746
    %v2757 = vadd.f32 %v2470, %v2747
    %v2758 = vadd.f32 %v2470, %v2748
    %v2759 = vadd.f32 %v2470, %v2749
    %v2760 = vld [vmem:[#allocation13] sm:$0xff]
    %v2761 = vld [vmem:[#allocation13 + $0x8] sm:$0xff]
    %v2762 = vld [vmem:[#allocation15] sm:$0x1]
    %v2764 = vperm.slane %v2762, 0
    %vm2766 = vcmask 130048
    %v2768 = vsel %vm2766, %v2750, 0
    %v2771 = vsel %vm2766, %v2751, 0
    %v2774 = vsel %vm2766, %v2752, 0
    %v2777 = vsel %vm2766, %v2753, 0
    %v2780 = vsel %vm2766, %v2754, 0
    %v2783 = vsel %vm2766, %v2755, 0
    %v2786 = vsel %vm2766, %v2756, 0
    %v2789 = vsel %vm2766, %v2757, 0
    %v2792 = vsel %vm2766, %v2758, 0
    %v2795 = vsel %vm2766, %v2759, 0
    %2797 = vmatpush.msra.mxu0 0.0
    %2798 = vmatpush.msra.mxu0 0.0
    %2799 = vmatpush.msra.mxu0 0.0
    %2800 = vmatpush.msra.mxu0 0.0
    %2801 = vmatpush.msra.mxu0 0.0
    %2802 = vmatpush.msra.mxu0 0.0
    %2803 = vmatpush.msra.mxu0 0.0
    %2804 = vmatpush.msra.mxu0 0.0
    %2805 = vmatpush.msra.mxu0 0.0
    %2806 = vmatpush.msra.mxu0 0.0
    %2807 = vmatpush.msra.mxu0 0.0
    %2808 = vmatpush.msra.mxu0 0.0
    %2809 = vmatpush.msra.mxu0 0.0
    %2810 = vmatpush.msra.mxu0 0.0
    %2811 = vmatpush.msra.mxu0 %v2761
    %2812 = vmatpush.msra.mxu0 %v2760
    %2813 = vmatmul.f32.gmra.mxu0 %v2768
    %v2814 = vpop.f32.mrf.mxu0
    %v2815 = vadd.f32 %v2764, %v2814
    %2816 = vmatmul.f32.gmra.mxu0 %v2771
    %v2817 = vpop.f32.mrf.mxu0
    %v2818 = vadd.f32 %v2764, %v2817
    %2819 = vmatmul.f32.gmra.mxu0 %v2774
    %v2820 = vpop.f32.mrf.mxu0
    %v2821 = vadd.f32 %v2764, %v2820
    %2822 = vmatmul.f32.gmra.mxu0 %v2777
    %v2823 = vpop.f32.mrf.mxu0
    %v2824 = vadd.f32 %v2764, %v2823
    %2825 = vmatmul.f32.gmra.mxu0 %v2780
    %v2826 = vpop.f32.mrf.mxu0
    %v2827 = vadd.f32 %v2764, %v2826
    %2828 = vmatmul.f32.gmra.mxu0 %v2783
    %v2829 = vpop.f32.mrf.mxu0
    %v2830 = vadd.f32 %v2764, %v2829
    %2831 = vmatmul.f32.gmra.mxu0 %v2786
    %v2832 = vpop.f32.mrf.mxu0
    %v2833 = vadd.f32 %v2764, %v2832
    %2834 = vmatmul.f32.gmra.mxu0 %v2789
    %v2835 = vpop.f32.mrf.mxu0
    %v2836 = vadd.f32 %v2764, %v2835
    %2837 = vmatmul.f32.gmra.mxu0 %v2792
    %v2838 = vpop.f32.mrf.mxu0
    %v2839 = vadd.f32 %v2764, %v2838
    %2840 = vmatmul.f32.gmra.mxu0 %v2795
    %v2841 = vpop.f32.mrf.mxu0
    %v2842 = vadd.f32 %v2764, %v2841
    %2843 = vdwg.mxu0
    %v2844 = vmax.f32 %v2815, 0.0
    %v2845 = vmax.f32 %v2818, 0.0
    %v2846 = vmax.f32 %v2821, 0.0
    %v2847 = vmax.f32 %v2824, 0.0
    %v2848 = vmax.f32 %v2827, 0.0
    %v2849 = vmax.f32 %v2830, 0.0
    %v2850 = vmax.f32 %v2833, 0.0
    %v2851 = vmax.f32 %v2836, 0.0
    %v2852 = vmax.f32 %v2839, 0.0
    %v2853 = vmax.f32 %v2842, 0.0
    %v2854 = vld [vmem:[#allocation16] sm:$0xff]
    %v2855 = vld [vmem:[#allocation16 + $0x8] sm:$0x3]
    %v2856 = vld [vmem:[#allocation18] sm:$0x1]
    %v2858 = vperm.slane %v2856, 0
    %vm2860 = vcmask 80896
    %v2862 = vsel %vm2860, %v2844, 0
    %v2865 = vsel %vm2860, %v2845, 0
    %v2868 = vsel %vm2860, %v2846, 0
    %v2871 = vsel %vm2860, %v2847, 0
    %v2874 = vsel %vm2860, %v2848, 0
    %v2877 = vsel %vm2860, %v2849, 0
    %v2880 = vsel %vm2860, %v2850, 0
    %v2883 = vsel %vm2860, %v2851, 0
    %v2886 = vsel %vm2860, %v2852, 0
    %v2889 = vsel %vm2860, %v2853, 0
    %vm2891 = vcmask 1041408
    %v2893 = vsel %vm2891, %v2855, 0
    %2895 = vmatpush.msra.mxu0 0.0
    %2896 = vmatpush.msra.mxu0 0.0
    %2897 = vmatpush.msra.mxu0 0.0
    %2898 = vmatpush.msra.mxu0 0.0
    %2899 = vmatpush.msra.mxu0 0.0
    %2900 = vmatpush.msra.mxu0 0.0
    %2901 = vmatpush.msra.mxu0 0.0
    %2902 = vmatpush.msra.mxu0 0.0
    %2903 = vmatpush.msra.mxu0 0.0
    %2904 = vmatpush.msra.mxu0 0.0
    %2905 = vmatpush.msra.mxu0 0.0
    %2906 = vmatpush.msra.mxu0 0.0
    %2907 = vmatpush.msra.mxu0 0.0
    %2908 = vmatpush.msra.mxu0 0.0
    %2909 = vmatpush.msra.mxu0 %v2893
    %2910 = vmatpush.msra.mxu0 %v2854
    %2911 = vmatmul.f32.gmra.mxu0 %v2862
    %v2912 = vpop.f32.mrf.mxu0
    %v2913 = vadd.f32 %v2858, %v2912
    %2914 = vmatmul.f32.gmra.mxu0 %v2865
    %v2915 = vpop.f32.mrf.mxu0
    %v2916 = vadd.f32 %v2858, %v2915
    %2917 = vmatmul.f32.gmra.mxu0 %v2868
    %v2918 = vpop.f32.mrf.mxu0
    %v2919 = vadd.f32 %v2858, %v2918
    %2920 = vmatmul.f32.gmra.mxu0 %v2871
    %v2921 = vpop.f32.mrf.mxu0
    %v2922 = vadd.f32 %v2858, %v2921
    %2923 = vmatmul.f32.gmra.mxu0 %v2874
    %v2924 = vpop.f32.mrf.mxu0
    %v2925 = vadd.f32 %v2858, %v2924
    %2926 = vmatmul.f32.gmra.mxu0 %v2877
    %v2927 = vpop.f32.mrf.mxu0
    %v2928 = vadd.f32 %v2858, %v2927
    %2929 = vmatmul.f32.gmra.mxu0 %v2880
    %v2930 = vpop.f32.mrf.mxu0
    %v2931 = vadd.f32 %v2858, %v2930
    %2932 = vmatmul.f32.gmra.mxu0 %v2883
    %v2933 = vpop.f32.mrf.mxu0
    %v2934 = vadd.f32 %v2858, %v2933
    %2935 = vmatmul.f32.gmra.mxu0 %v2886
    %v2936 = vpop.f32.mrf.mxu0
    %v2937 = vadd.f32 %v2858, %v2936
    %2938 = vmatmul.f32.gmra.mxu0 %v2889
    %v2939 = vpop.f32.mrf.mxu0
    %v2940 = vadd.f32 %v2858, %v2939
    %2941 = vdwg.mxu0
    %v2942 = vmax.f32 %v2913, 0.0
    %v2943 = vmax.f32 %v2916, 0.0
    %v2944 = vmax.f32 %v2919, 0.0
    %v2945 = vmax.f32 %v2922, 0.0
    %v2946 = vmax.f32 %v2925, 0.0
    %v2947 = vmax.f32 %v2928, 0.0
    %v2948 = vmax.f32 %v2931, 0.0
    %v2949 = vmax.f32 %v2934, 0.0
    %v2950 = vmax.f32 %v2937, 0.0
    %v2951 = vmax.f32 %v2940, 0.0
    %v2952 = vld [vmem:[#allocation19] sm:$0xff]
    %v2953 = vld [vmem:[#allocation19 + $0x8] sm:$0x3]
    %v2954 = vld [vmem:[#allocation21] sm:$0x1]
    %v2956 = vperm.slane %v2954, 0
    %v2959 = vsel %vm2860, %v2942, 0
    %v2962 = vsel %vm2860, %v2943, 0
    %v2965 = vsel %vm2860, %v2944, 0
    %v2968 = vsel %vm2860, %v2945, 0
    %v2971 = vsel %vm2860, %v2946, 0
    %v2974 = vsel %vm2860, %v2947, 0
    %v2977 = vsel %vm2860, %v2948, 0
    %v2980 = vsel %vm2860, %v2949, 0
    %v2983 = vsel %vm2860, %v2950, 0
    %v2986 = vsel %vm2860, %v2951, 0
    %v2989 = vsel %vm2891, %v2953, 0
    %2991 = vmatpush.msra.mxu0 0.0
    %2992 = vmatpush.msra.mxu0 0.0
    %2993 = vmatpush.msra.mxu0 0.0
    %2994 = vmatpush.msra.mxu0 0.0
    %2995 = vmatpush.msra.mxu0 0.0
    %2996 = vmatpush.msra.mxu0 0.0
    %2997 = vmatpush.msra.mxu0 0.0
    %2998 = vmatpush.msra.mxu0 0.0
    %2999 = vmatpush.msra.mxu0 0.0
    %3000 = vmatpush.msra.mxu0 0.0
    %3001 = vmatpush.msra.mxu0 0.0
    %3002 = vmatpush.msra.mxu0 0.0
    %3003 = vmatpush.msra.mxu0 0.0
    %3004 = vmatpush.msra.mxu0 0.0
    %3005 = vmatpush.msra.mxu0 %v2989
    %3006 = vmatpush.msra.mxu0 %v2952
    %3007 = vmatmul.f32.gmra.mxu0 %v2959
    %v3008 = vpop.f32.mrf.mxu0
    %v3009 = vadd.f32 %v2956, %v3008
    %3010 = vmatmul.f32.gmra.mxu0 %v2962
    %v3011 = vpop.f32.mrf.mxu0
    %v3012 = vadd.f32 %v2956, %v3011
    %3013 = vmatmul.f32.gmra.mxu0 %v2965
    %v3014 = vpop.f32.mrf.mxu0
    %v3015 = vadd.f32 %v2956, %v3014
    %3016 = vmatmul.f32.gmra.mxu0 %v2968
    %v3017 = vpop.f32.mrf.mxu0
    %v3018 = vadd.f32 %v2956, %v3017
    %3019 = vmatmul.f32.gmra.mxu0 %v2971
    %v3020 = vpop.f32.mrf.mxu0
    %v3021 = vadd.f32 %v2956, %v3020
    %3022 = vmatmul.f32.gmra.mxu0 %v2974
    %v3023 = vpop.f32.mrf.mxu0
    %v3024 = vadd.f32 %v2956, %v3023
    %3025 = vmatmul.f32.gmra.mxu0 %v2977
    %v3026 = vpop.f32.mrf.mxu0
    %v3027 = vadd.f32 %v2956, %v3026
    %3028 = vmatmul.f32.gmra.mxu0 %v2980
    %v3029 = vpop.f32.mrf.mxu0
    %v3030 = vadd.f32 %v2956, %v3029
    %3031 = vmatmul.f32.gmra.mxu0 %v2983
    %v3032 = vpop.f32.mrf.mxu0
    %v3033 = vadd.f32 %v2956, %v3032
    %3034 = vmatmul.f32.gmra.mxu0 %v2986
    %v3035 = vpop.f32.mrf.mxu0
    %v3036 = vadd.f32 %v2956, %v3035
    %3037 = vdwg.mxu0
    %v3038 = vxor.u32 %v3009, 2147483648
    %v3039 = vxor.u32 %v3012, 2147483648
    %v3040 = vxor.u32 %v3015, 2147483648
    %v3041 = vxor.u32 %v3018, 2147483648
    %v3042 = vxor.u32 %v3021, 2147483648
    %v3043 = vxor.u32 %v3024, 2147483648
    %v3044 = vxor.u32 %v3027, 2147483648
    %v3045 = vxor.u32 %v3030, 2147483648
    %v3046 = vxor.u32 %v3033, 2147483648
    %v3047 = vxor.u32 %v3036, 2147483648
    %v3048 = vmul.f32 %v3038, 1.442695
    %v3049 = vpow.pop %v3048
    %v3050 = vmul.f32 %v3039, 1.442695
    %v3051 = vpow.pop %v3050
    %v3052 = vmul.f32 %v3040, 1.442695
    %v3053 = vpow.pop %v3052
    %v3054 = vmul.f32 %v3041, 1.442695
    %v3055 = vpow.pop %v3054
    %v3056 = vmul.f32 %v3042, 1.442695
    %v3057 = vpow.pop %v3056
    %v3058 = vmul.f32 %v3043, 1.442695
    %v3059 = vpow.pop %v3058
    %v3060 = vmul.f32 %v3044, 1.442695
    %v3061 = vpow.pop %v3060
    %v3062 = vmul.f32 %v3045, 1.442695
    %v3063 = vpow.pop %v3062
    %v3064 = vmul.f32 %v3046, 1.442695
    %v3065 = vpow.pop %v3064
    %v3066 = vmul.f32 %v3047, 1.442695
    %v3067 = vpow.pop %v3066
    %v3068 = vadd.f32 %v3049, 1.0
    %v3069 = vadd.f32 %v3051, 1.0
    %v3070 = vadd.f32 %v3053, 1.0
    %v3071 = vadd.f32 %v3055, 1.0
    %v3072 = vadd.f32 %v3057, 1.0
    %v3073 = vadd.f32 %v3059, 1.0
    %v3074 = vadd.f32 %v3061, 1.0
    %v3075 = vadd.f32 %v3063, 1.0
    %v3076 = vadd.f32 %v3065, 1.0
    %v3077 = vadd.f32 %v3067, 1.0
    %v3078 = vrcp.pop %v3068
    %v3079 = vmul.f32 %v3068, %v3078
    %v3080 = vsub.f32 1.0, %v3079
    %v3081 = vmul.f32 %v3078, %v3080
    %v3082 = vadd.f32 %v3078, %v3081
    %vm3083 = vweird.f32 %v3068
    %vm3084 = vweird.f32 %v3078
    %vm3085 = vmor %vm3083, %vm3084
    %v3086 = vsel %vm3085, %v3078, %v3082
    %v3087 = vand.u32 2147483647, %v3068
    %vm3088 = vcmp.eq.f32.partialorder %v3087, 8.507059e+37
    %v3089 = vand.u32 %v3068, 2147483648
    %v3090 = vor.u32 1.1754944e-38, %v3089
    %v3091 = vsel %vm3088, %v3090, %v3086
    %v3092 = vmul.f32 1.0, %v3091
    %v3093 = vrcp.pop %v3069
    %v3094 = vmul.f32 %v3069, %v3093
    %v3095 = vsub.f32 1.0, %v3094
    %v3096 = vmul.f32 %v3093, %v3095
    %v3097 = vadd.f32 %v3093, %v3096
    %vm3098 = vweird.f32 %v3069
    %vm3099 = vweird.f32 %v3093
    %vm3100 = vmor %vm3098, %vm3099
    %v3101 = vsel %vm3100, %v3093, %v3097
    %v3102 = vand.u32 2147483647, %v3069
    %vm3103 = vcmp.eq.f32.partialorder %v3102, 8.507059e+37
    %v3104 = vand.u32 %v3069, 2147483648
    %v3105 = vor.u32 1.1754944e-38, %v3104
    %v3106 = vsel %vm3103, %v3105, %v3101
    %v3107 = vmul.f32 1.0, %v3106
    %v3108 = vrcp.pop %v3070
    %v3109 = vmul.f32 %v3070, %v3108
    %v3110 = vsub.f32 1.0, %v3109
    %v3111 = vmul.f32 %v3108, %v3110
    %v3112 = vadd.f32 %v3108, %v3111
    %vm3113 = vweird.f32 %v3070
    %vm3114 = vweird.f32 %v3108
    %vm3115 = vmor %vm3113, %vm3114
    %v3116 = vsel %vm3115, %v3108, %v3112
    %v3117 = vand.u32 2147483647, %v3070
    %vm3118 = vcmp.eq.f32.partialorder %v3117, 8.507059e+37
    %v3119 = vand.u32 %v3070, 2147483648
    %v3120 = vor.u32 1.1754944e-38, %v3119
    %v3121 = vsel %vm3118, %v3120, %v3116
    %v3122 = vmul.f32 1.0, %v3121
    %v3123 = vrcp.pop %v3071
    %v3124 = vmul.f32 %v3071, %v3123
    %v3125 = vsub.f32 1.0, %v3124
    %v3126 = vmul.f32 %v3123, %v3125
    %v3127 = vadd.f32 %v3123, %v3126
    %vm3128 = vweird.f32 %v3071
    %vm3129 = vweird.f32 %v3123
    %vm3130 = vmor %vm3128, %vm3129
    %v3131 = vsel %vm3130, %v3123, %v3127
    %v3132 = vand.u32 2147483647, %v3071
    %vm3133 = vcmp.eq.f32.partialorder %v3132, 8.507059e+37
    %v3134 = vand.u32 %v3071, 2147483648
    %v3135 = vor.u32 1.1754944e-38, %v3134
    %v3136 = vsel %vm3133, %v3135, %v3131
    %v3137 = vmul.f32 1.0, %v3136
    %v3138 = vrcp.pop %v3072
    %v3139 = vmul.f32 %v3072, %v3138
    %v3140 = vsub.f32 1.0, %v3139
    %v3141 = vmul.f32 %v3138, %v3140
    %v3142 = vadd.f32 %v3138, %v3141
    %vm3143 = vweird.f32 %v3072
    %vm3144 = vweird.f32 %v3138
    %vm3145 = vmor %vm3143, %vm3144
    %v3146 = vsel %vm3145, %v3138, %v3142
    %v3147 = vand.u32 2147483647, %v3072
    %vm3148 = vcmp.eq.f32.partialorder %v3147, 8.507059e+37
    %v3149 = vand.u32 %v3072, 2147483648
    %v3150 = vor.u32 1.1754944e-38, %v3149
    %v3151 = vsel %vm3148, %v3150, %v3146
    %v3152 = vmul.f32 1.0, %v3151
    %v3153 = vrcp.pop %v3073
    %v3154 = vmul.f32 %v3073, %v3153
    %v3155 = vsub.f32 1.0, %v3154
    %v3156 = vmul.f32 %v3153, %v3155
    %v3157 = vadd.f32 %v3153, %v3156
    %vm3158 = vweird.f32 %v3073
    %vm3159 = vweird.f32 %v3153
    %vm3160 = vmor %vm3158, %vm3159
    %v3161 = vsel %vm3160, %v3153, %v3157
    %v3162 = vand.u32 2147483647, %v3073
    %vm3163 = vcmp.eq.f32.partialorder %v3162, 8.507059e+37
    %v3164 = vand.u32 %v3073, 2147483648
    %v3165 = vor.u32 1.1754944e-38, %v3164
    %v3166 = vsel %vm3163, %v3165, %v3161
    %v3167 = vmul.f32 1.0, %v3166
    %v3168 = vrcp.pop %v3074
    %v3169 = vmul.f32 %v3074, %v3168
    %v3170 = vsub.f32 1.0, %v3169
    %v3171 = vmul.f32 %v3168, %v3170
    %v3172 = vadd.f32 %v3168, %v3171
    %vm3173 = vweird.f32 %v3074
    %vm3174 = vweird.f32 %v3168
    %vm3175 = vmor %vm3173, %vm3174
    %v3176 = vsel %vm3175, %v3168, %v3172
    %v3177 = vand.u32 2147483647, %v3074
    %vm3178 = vcmp.eq.f32.partialorder %v3177, 8.507059e+37
    %v3179 = vand.u32 %v3074, 2147483648
    %v3180 = vor.u32 1.1754944e-38, %v3179
    %v3181 = vsel %vm3178, %v3180, %v3176
    %v3182 = vmul.f32 1.0, %v3181
    %v3183 = vrcp.pop %v3075
    %v3184 = vmul.f32 %v3075, %v3183
    %v3185 = vsub.f32 1.0, %v3184
    %v3186 = vmul.f32 %v3183, %v3185
    %v3187 = vadd.f32 %v3183, %v3186
    %vm3188 = vweird.f32 %v3075
    %vm3189 = vweird.f32 %v3183
    %vm3190 = vmor %vm3188, %vm3189
    %v3191 = vsel %vm3190, %v3183, %v3187
    %v3192 = vand.u32 2147483647, %v3075
    %vm3193 = vcmp.eq.f32.partialorder %v3192, 8.507059e+37
    %v3194 = vand.u32 %v3075, 2147483648
    %v3195 = vor.u32 1.1754944e-38, %v3194
    %v3196 = vsel %vm3193, %v3195, %v3191
    %v3197 = vmul.f32 1.0, %v3196
    %v3198 = vrcp.pop %v3076
    %v3199 = vmul.f32 %v3076, %v3198
    %v3200 = vsub.f32 1.0, %v3199
    %v3201 = vmul.f32 %v3198, %v3200
    %v3202 = vadd.f32 %v3198, %v3201
    %vm3203 = vweird.f32 %v3076
    %vm3204 = vweird.f32 %v3198
    %vm3205 = vmor %vm3203, %vm3204
    %v3206 = vsel %vm3205, %v3198, %v3202
    %v3207 = vand.u32 2147483647, %v3076
    %vm3208 = vcmp.eq.f32.partialorder %v3207, 8.507059e+37
    %v3209 = vand.u32 %v3076, 2147483648
    %v3210 = vor.u32 1.1754944e-38, %v3209
    %v3211 = vsel %vm3208, %v3210, %v3206
    %v3212 = vmul.f32 1.0, %v3211
    %v3213 = vrcp.pop %v3077
    %v3214 = vmul.f32 %v3077, %v3213
    %v3215 = vsub.f32 1.0, %v3214
    %v3216 = vmul.f32 %v3213, %v3215
    %v3217 = vadd.f32 %v3213, %v3216
    %vm3218 = vweird.f32 %v3077
    %vm3219 = vweird.f32 %v3213
    %vm3220 = vmor %vm3218, %vm3219
    %v3221 = vsel %vm3220, %v3213, %v3217
    %v3222 = vand.u32 2147483647, %v3077
    %vm3223 = vcmp.eq.f32.partialorder %v3222, 8.507059e+37
    %v3224 = vand.u32 %v3077, 2147483648
    %v3225 = vor.u32 1.1754944e-38, %v3224
    %v3226 = vsel %vm3223, %v3225, %v3221
    %v3227 = vmul.f32 1.0, %v3226
    %v3228 = vmul.f32 %v2750, %v3092
    %v3229 = vmul.f32 %v2751, %v3107
    %v3230 = vmul.f32 %v2752, %v3122
    %v3231 = vmul.f32 %v2753, %v3137
    %v3232 = vmul.f32 %v2754, %v3152
    %v3233 = vmul.f32 %v2755, %v3167
    %v3234 = vmul.f32 %v2756, %v3182
    %v3235 = vmul.f32 %v2757, %v3197
    %v3236 = vmul.f32 %v2758, %v3212
    %v3237 = vmul.f32 %v2759, %v3227
    %v3238 = vld [vmem:[#allocation22] sm:$0xff]
    %v3239 = vld [vmem:[#allocation22 + $0x8] sm:$0xff]
    %v3240 = vld [vmem:[#allocation22 + $0x10] sm:$0xff]
    %v3241 = vld [vmem:[#allocation22 + $0x18] sm:$0xff]
    %v3242 = vld [vmem:[#allocation22 + $0x20] sm:$0xff]
    %v3243 = vld [vmem:[#allocation22 + $0x28] sm:$0xff]
    %v3244 = vld [vmem:[#allocation22 + $0x30] sm:$0xff]
    %v3245 = vld [vmem:[#allocation22 + $0x38] sm:$0xff]
    %v3246 = vld [vmem:[#allocation22 + $0x40] sm:$0xff]
    %v3247 = vld [vmem:[#allocation22 + $0x48] sm:$0xff]
    %v3248 = vld [vmem:[#allocation22 + $0x50] sm:$0xff]
    %v3249 = vld [vmem:[#allocation22 + $0x58] sm:$0xff]
    %v3250 = vld [vmem:[#allocation22 + $0x60] sm:$0xff]
    %v3251 = vld [vmem:[#allocation22 + $0x68] sm:$0xff]
    %v3252 = vld [vmem:[#allocation24] sm:$0x7f]
    %v3254 = vperm.slane %v3252, 0
    %v3255 = vperm.slane %v3252, 1
    %v3256 = vperm.slane %v3252, 2
    %v3257 = vperm.slane %v3252, 3
    %v3258 = vperm.slane %v3252, 4
    %v3259 = vperm.slane %v3252, 5
    %v3260 = vperm.slane %v3252, 6
    %v3269 = vsel %vm2766, %v3228, 0
    %v3272 = vsel %vm2766, %v3229, 0
    %v3275 = vsel %vm2766, %v3230, 0
    %v3278 = vsel %vm2766, %v3231, 0
    %v3281 = vsel %vm2766, %v3232, 0
    %v3284 = vsel %vm2766, %v3233, 0
    %v3287 = vsel %vm2766, %v3234, 0
    %v3290 = vsel %vm2766, %v3235, 0
    %v3293 = vsel %vm2766, %v3236, 0
    %v3296 = vsel %vm2766, %v3237, 0
    %3298 = vmatpush.msra.mxu0 0.0
    %3299 = vmatpush.msra.mxu0 0.0
    %3300 = vmatpush.msra.mxu0 0.0
    %3301 = vmatpush.msra.mxu0 0.0
    %3302 = vmatpush.msra.mxu0 0.0
    %3303 = vmatpush.msra.mxu0 0.0
    %3304 = vmatpush.msra.mxu0 0.0
    %3305 = vmatpush.msra.mxu0 0.0
    %3306 = vmatpush.msra.mxu0 0.0
    %3307 = vmatpush.msra.mxu0 0.0
    %3308 = vmatpush.msra.mxu0 0.0
    %3309 = vmatpush.msra.mxu0 0.0
    %3310 = vmatpush.msra.mxu0 0.0
    %3311 = vmatpush.msra.mxu0 0.0
    %3312 = vmatpush.msra.mxu0 %v3245
    %3313 = vmatpush.msra.mxu0 %v3238
    %3314 = vmatmul.f32.gmra.mxu0 %v3269
    %v3315 = vpop.f32.mrf.mxu0
    %v3316 = vadd.f32 %v3254, %v3315
    %3317 = vmatmul.f32.gmra.mxu0 %v3272
    %v3318 = vpop.f32.mrf.mxu0
    %v3319 = vadd.f32 %v3254, %v3318
    %3320 = vmatmul.f32.gmra.mxu0 %v3275
    %v3321 = vpop.f32.mrf.mxu0
    %v3322 = vadd.f32 %v3254, %v3321
    %3323 = vmatmul.f32.gmra.mxu0 %v3278
    %v3324 = vpop.f32.mrf.mxu0
    %v3325 = vadd.f32 %v3254, %v3324
    %3326 = vmatmul.f32.gmra.mxu0 %v3281
    %v3327 = vpop.f32.mrf.mxu0
    %v3328 = vadd.f32 %v3254, %v3327
    %3329 = vmatmul.f32.gmra.mxu0 %v3284
    %v3330 = vpop.f32.mrf.mxu0
    %v3331 = vadd.f32 %v3254, %v3330
    %3332 = vmatmul.f32.gmra.mxu0 %v3287
    %v3333 = vpop.f32.mrf.mxu0
    %v3334 = vadd.f32 %v3254, %v3333
    %3335 = vmatmul.f32.gmra.mxu0 %v3290
    %v3336 = vpop.f32.mrf.mxu0
    %v3337 = vadd.f32 %v3254, %v3336
    %3338 = vmatmul.f32.gmra.mxu0 %v3293
    %v3339 = vpop.f32.mrf.mxu0
    %v3340 = vadd.f32 %v3254, %v3339
    %3341 = vmatmul.f32.gmra.mxu0 %v3296
    %v3342 = vpop.f32.mrf.mxu0
    %v3343 = vadd.f32 %v3254, %v3342
    %3344 = vdwg.mxu0
    %3345 = vmatpush.msra.mxu0 0.0
    %3346 = vmatpush.msra.mxu0 0.0
    %3347 = vmatpush.msra.mxu0 0.0
    %3348 = vmatpush.msra.mxu0 0.0
    %3349 = vmatpush.msra.mxu0 0.0
    %3350 = vmatpush.msra.mxu0 0.0
    %3351 = vmatpush.msra.mxu0 0.0
    %3352 = vmatpush.msra.mxu0 0.0
    %3353 = vmatpush.msra.mxu0 0.0
    %3354 = vmatpush.msra.mxu0 0.0
    %3355 = vmatpush.msra.mxu0 0.0
    %3356 = vmatpush.msra.mxu0 0.0
    %3357 = vmatpush.msra.mxu0 0.0
    %3358 = vmatpush.msra.mxu0 0.0
    %3359 = vmatpush.msra.mxu0 %v3246
    %3360 = vmatpush.msra.mxu0 %v3239
    %3361 = vmatmul.f32.gmra.mxu0 %v3269
    %v3362 = vpop.f32.mrf.mxu0
    %v3363 = vadd.f32 %v3255, %v3362
    %3364 = vmatmul.f32.gmra.mxu0 %v3272
    %v3365 = vpop.f32.mrf.mxu0
    %v3366 = vadd.f32 %v3255, %v3365
    %3367 = vmatmul.f32.gmra.mxu0 %v3275
    %v3368 = vpop.f32.mrf.mxu0
    %v3369 = vadd.f32 %v3255, %v3368
    %3370 = vmatmul.f32.gmra.mxu0 %v3278
    %v3371 = vpop.f32.mrf.mxu0
    %v3372 = vadd.f32 %v3255, %v3371
    %3373 = vmatmul.f32.gmra.mxu0 %v3281
    %v3374 = vpop.f32.mrf.mxu0
    %v3375 = vadd.f32 %v3255, %v3374
    %3376 = vmatmul.f32.gmra.mxu0 %v3284
    %v3377 = vpop.f32.mrf.mxu0
    %v3378 = vadd.f32 %v3255, %v3377
    %3379 = vmatmul.f32.gmra.mxu0 %v3287
    %v3380 = vpop.f32.mrf.mxu0
    %v3381 = vadd.f32 %v3255, %v3380
    %3382 = vmatmul.f32.gmra.mxu0 %v3290
    %v3383 = vpop.f32.mrf.mxu0
    %v3384 = vadd.f32 %v3255, %v3383
    %3385 = vmatmul.f32.gmra.mxu0 %v3293
    %v3386 = vpop.f32.mrf.mxu0
    %v3387 = vadd.f32 %v3255, %v3386
    %3388 = vmatmul.f32.gmra.mxu0 %v3296
    %v3389 = vpop.f32.mrf.mxu0
    %v3390 = vadd.f32 %v3255, %v3389
    %3391 = vdwg.mxu0
    %3392 = vmatpush.msra.mxu0 0.0
    %3393 = vmatpush.msra.mxu0 0.0
    %3394 = vmatpush.msra.mxu0 0.0
    %3395 = vmatpush.msra.mxu0 0.0
    %3396 = vmatpush.msra.mxu0 0.0
    %3397 = vmatpush.msra.mxu0 0.0
    %3398 = vmatpush.msra.mxu0 0.0
    %3399 = vmatpush.msra.mxu0 0.0
    %3400 = vmatpush.msra.mxu0 0.0
    %3401 = vmatpush.msra.mxu0 0.0
    %3402 = vmatpush.msra.mxu0 0.0
    %3403 = vmatpush.msra.mxu0 0.0
    %3404 = vmatpush.msra.mxu0 0.0
    %3405 = vmatpush.msra.mxu0 0.0
    %3406 = vmatpush.msra.mxu0 %v3247
    %3407 = vmatpush.msra.mxu0 %v3240
    %3408 = vmatmul.f32.gmra.mxu0 %v3269
    %v3409 = vpop.f32.mrf.mxu0
    %v3410 = vadd.f32 %v3256, %v3409
    %3411 = vmatmul.f32.gmra.mxu0 %v3272
    %v3412 = vpop.f32.mrf.mxu0
    %v3413 = vadd.f32 %v3256, %v3412
    %3414 = vmatmul.f32.gmra.mxu0 %v3275
    %v3415 = vpop.f32.mrf.mxu0
    %v3416 = vadd.f32 %v3256, %v3415
    %3417 = vmatmul.f32.gmra.mxu0 %v3278
    %v3418 = vpop.f32.mrf.mxu0
    %v3419 = vadd.f32 %v3256, %v3418
    %3420 = vmatmul.f32.gmra.mxu0 %v3281
    %v3421 = vpop.f32.mrf.mxu0
    %v3422 = vadd.f32 %v3256, %v3421
    %3423 = vmatmul.f32.gmra.mxu0 %v3284
    %v3424 = vpop.f32.mrf.mxu0
    %v3425 = vadd.f32 %v3256, %v3424
    %3426 = vmatmul.f32.gmra.mxu0 %v3287
    %v3427 = vpop.f32.mrf.mxu0
    %v3428 = vadd.f32 %v3256, %v3427
    %3429 = vmatmul.f32.gmra.mxu0 %v3290
    %v3430 = vpop.f32.mrf.mxu0
    %v3431 = vadd.f32 %v3256, %v3430
    %3432 = vmatmul.f32.gmra.mxu0 %v3293
    %v3433 = vpop.f32.mrf.mxu0
    %v3434 = vadd.f32 %v3256, %v3433
    %3435 = vmatmul.f32.gmra.mxu0 %v3296
    %v3436 = vpop.f32.mrf.mxu0
    %v3437 = vadd.f32 %v3256, %v3436
    %3438 = vdwg.mxu0
    %3439 = vmatpush.msra.mxu0 0.0
    %3440 = vmatpush.msra.mxu0 0.0
    %3441 = vmatpush.msra.mxu0 0.0
    %3442 = vmatpush.msra.mxu0 0.0
    %3443 = vmatpush.msra.mxu0 0.0
    %3444 = vmatpush.msra.mxu0 0.0
    %3445 = vmatpush.msra.mxu0 0.0
    %3446 = vmatpush.msra.mxu0 0.0
    %3447 = vmatpush.msra.mxu0 0.0
    %3448 = vmatpush.msra.mxu0 0.0
    %3449 = vmatpush.msra.mxu0 0.0
    %3450 = vmatpush.msra.mxu0 0.0
    %3451 = vmatpush.msra.mxu0 0.0
    %3452 = vmatpush.msra.mxu0 0.0
    %3453 = vmatpush.msra.mxu0 %v3248
    %3454 = vmatpush.msra.mxu0 %v3241
    %3455 = vmatmul.f32.gmra.mxu0 %v3269
    %v3456 = vpop.f32.mrf.mxu0
    %v3457 = vadd.f32 %v3257, %v3456
    %3458 = vmatmul.f32.gmra.mxu0 %v3272
    %v3459 = vpop.f32.mrf.mxu0
    %v3460 = vadd.f32 %v3257, %v3459
    %3461 = vmatmul.f32.gmra.mxu0 %v3275
    %v3462 = vpop.f32.mrf.mxu0
    %v3463 = vadd.f32 %v3257, %v3462
    %3464 = vmatmul.f32.gmra.mxu0 %v3278
    %v3465 = vpop.f32.mrf.mxu0
    %v3466 = vadd.f32 %v3257, %v3465
    %3467 = vmatmul.f32.gmra.mxu0 %v3281
    %v3468 = vpop.f32.mrf.mxu0
    %v3469 = vadd.f32 %v3257, %v3468
    %3470 = vmatmul.f32.gmra.mxu0 %v3284
    %v3471 = vpop.f32.mrf.mxu0
    %v3472 = vadd.f32 %v3257, %v3471
    %3473 = vmatmul.f32.gmra.mxu0 %v3287
    %v3474 = vpop.f32.mrf.mxu0
    %v3475 = vadd.f32 %v3257, %v3474
    %3476 = vmatmul.f32.gmra.mxu0 %v3290
    %v3477 = vpop.f32.mrf.mxu0
    %v3478 = vadd.f32 %v3257, %v3477
    %3479 = vmatmul.f32.gmra.mxu0 %v3293
    %v3480 = vpop.f32.mrf.mxu0
    %v3481 = vadd.f32 %v3257, %v3480
    %3482 = vmatmul.f32.gmra.mxu0 %v3296
    %v3483 = vpop.f32.mrf.mxu0
    %v3484 = vadd.f32 %v3257, %v3483
    %3485 = vdwg.mxu0
    %3486 = vmatpush.msra.mxu0 0.0
    %3487 = vmatpush.msra.mxu0 0.0
    %3488 = vmatpush.msra.mxu0 0.0
    %3489 = vmatpush.msra.mxu0 0.0
    %3490 = vmatpush.msra.mxu0 0.0
    %3491 = vmatpush.msra.mxu0 0.0
    %3492 = vmatpush.msra.mxu0 0.0
    %3493 = vmatpush.msra.mxu0 0.0
    %3494 = vmatpush.msra.mxu0 0.0
    %3495 = vmatpush.msra.mxu0 0.0
    %3496 = vmatpush.msra.mxu0 0.0
    %3497 = vmatpush.msra.mxu0 0.0
    %3498 = vmatpush.msra.mxu0 0.0
    %3499 = vmatpush.msra.mxu0 0.0
    %3500 = vmatpush.msra.mxu0 %v3249
    %3501 = vmatpush.msra.mxu0 %v3242
    %3502 = vmatmul.f32.gmra.mxu0 %v3269
    %v3503 = vpop.f32.mrf.mxu0
    %v3504 = vadd.f32 %v3258, %v3503
    %3505 = vmatmul.f32.gmra.mxu0 %v3272
    %v3506 = vpop.f32.mrf.mxu0
    %v3507 = vadd.f32 %v3258, %v3506
    %3508 = vmatmul.f32.gmra.mxu0 %v3275
    %v3509 = vpop.f32.mrf.mxu0
    %v3510 = vadd.f32 %v3258, %v3509
    %3511 = vmatmul.f32.gmra.mxu0 %v3278
    %v3512 = vpop.f32.mrf.mxu0
    %v3513 = vadd.f32 %v3258, %v3512
    %3514 = vmatmul.f32.gmra.mxu0 %v3281
    %v3515 = vpop.f32.mrf.mxu0
    %v3516 = vadd.f32 %v3258, %v3515
    %3517 = vmatmul.f32.gmra.mxu0 %v3284
    %v3518 = vpop.f32.mrf.mxu0
    %v3519 = vadd.f32 %v3258, %v3518
    %3520 = vmatmul.f32.gmra.mxu0 %v3287
    %v3521 = vpop.f32.mrf.mxu0
    %v3522 = vadd.f32 %v3258, %v3521
    %3523 = vmatmul.f32.gmra.mxu0 %v3290
    %v3524 = vpop.f32.mrf.mxu0
    %v3525 = vadd.f32 %v3258, %v3524
    %3526 = vmatmul.f32.gmra.mxu0 %v3293
    %v3527 = vpop.f32.mrf.mxu0
    %v3528 = vadd.f32 %v3258, %v3527
    %3529 = vmatmul.f32.gmra.mxu0 %v3296
    %v3530 = vpop.f32.mrf.mxu0
    %v3531 = vadd.f32 %v3258, %v3530
    %3532 = vdwg.mxu0
    %3533 = vmatpush.msra.mxu0 0.0
    %3534 = vmatpush.msra.mxu0 0.0
    %3535 = vmatpush.msra.mxu0 0.0
    %3536 = vmatpush.msra.mxu0 0.0
    %3537 = vmatpush.msra.mxu0 0.0
    %3538 = vmatpush.msra.mxu0 0.0
    %3539 = vmatpush.msra.mxu0 0.0
    %3540 = vmatpush.msra.mxu0 0.0
    %3541 = vmatpush.msra.mxu0 0.0
    %3542 = vmatpush.msra.mxu0 0.0
    %3543 = vmatpush.msra.mxu0 0.0
    %3544 = vmatpush.msra.mxu0 0.0
    %3545 = vmatpush.msra.mxu0 0.0
    %3546 = vmatpush.msra.mxu0 0.0
    %3547 = vmatpush.msra.mxu0 %v3250
    %3548 = vmatpush.msra.mxu0 %v3243
    %3549 = vmatmul.f32.gmra.mxu0 %v3269
    %v3550 = vpop.f32.mrf.mxu0
    %v3551 = vadd.f32 %v3259, %v3550
    %3552 = vmatmul.f32.gmra.mxu0 %v3272
    %v3553 = vpop.f32.mrf.mxu0
    %v3554 = vadd.f32 %v3259, %v3553
    %3555 = vmatmul.f32.gmra.mxu0 %v3275
    %v3556 = vpop.f32.mrf.mxu0
    %v3557 = vadd.f32 %v3259, %v3556
    %3558 = vmatmul.f32.gmra.mxu0 %v3278
    %v3559 = vpop.f32.mrf.mxu0
    %v3560 = vadd.f32 %v3259, %v3559
    %3561 = vmatmul.f32.gmra.mxu0 %v3281
    %v3562 = vpop.f32.mrf.mxu0
    %v3563 = vadd.f32 %v3259, %v3562
    %3564 = vmatmul.f32.gmra.mxu0 %v3284
    %v3565 = vpop.f32.mrf.mxu0
    %v3566 = vadd.f32 %v3259, %v3565
    %3567 = vmatmul.f32.gmra.mxu0 %v3287
    %v3568 = vpop.f32.mrf.mxu0
    %v3569 = vadd.f32 %v3259, %v3568
    %3570 = vmatmul.f32.gmra.mxu0 %v3290
    %v3571 = vpop.f32.mrf.mxu0
    %v3572 = vadd.f32 %v3259, %v3571
    %3573 = vmatmul.f32.gmra.mxu0 %v3293
    %v3574 = vpop.f32.mrf.mxu0
    %v3575 = vadd.f32 %v3259, %v3574
    %3576 = vmatmul.f32.gmra.mxu0 %v3296
    %v3577 = vpop.f32.mrf.mxu0
    %v3578 = vadd.f32 %v3259, %v3577
    %3579 = vdwg.mxu0
    %3580 = vmatpush.msra.mxu0 0.0
    %3581 = vmatpush.msra.mxu0 0.0
    %3582 = vmatpush.msra.mxu0 0.0
    %3583 = vmatpush.msra.mxu0 0.0
    %3584 = vmatpush.msra.mxu0 0.0
    %3585 = vmatpush.msra.mxu0 0.0
    %3586 = vmatpush.msra.mxu0 0.0
    %3587 = vmatpush.msra.mxu0 0.0
    %3588 = vmatpush.msra.mxu0 0.0
    %3589 = vmatpush.msra.mxu0 0.0
    %3590 = vmatpush.msra.mxu0 0.0
    %3591 = vmatpush.msra.mxu0 0.0
    %3592 = vmatpush.msra.mxu0 0.0
    %3593 = vmatpush.msra.mxu0 0.0
    %3594 = vmatpush.msra.mxu0 %v3251
    %3595 = vmatpush.msra.mxu0 %v3244
    %3596 = vmatmul.f32.gmra.mxu0 %v3269
    %v3597 = vpop.f32.mrf.mxu0
    %v3598 = vadd.f32 %v3260, %v3597
    %3599 = vmatmul.f32.gmra.mxu0 %v3272
    %v3600 = vpop.f32.mrf.mxu0
    %v3601 = vadd.f32 %v3260, %v3600
    %3602 = vmatmul.f32.gmra.mxu0 %v3275
    %v3603 = vpop.f32.mrf.mxu0
    %v3604 = vadd.f32 %v3260, %v3603
    %3605 = vmatmul.f32.gmra.mxu0 %v3278
    %v3606 = vpop.f32.mrf.mxu0
    %v3607 = vadd.f32 %v3260, %v3606
    %3608 = vmatmul.f32.gmra.mxu0 %v3281
    %v3609 = vpop.f32.mrf.mxu0
    %v3610 = vadd.f32 %v3260, %v3609
    %3611 = vmatmul.f32.gmra.mxu0 %v3284
    %v3612 = vpop.f32.mrf.mxu0
    %v3613 = vadd.f32 %v3260, %v3612
    %3614 = vmatmul.f32.gmra.mxu0 %v3287
    %v3615 = vpop.f32.mrf.mxu0
    %v3616 = vadd.f32 %v3260, %v3615
    %3617 = vmatmul.f32.gmra.mxu0 %v3290
    %v3618 = vpop.f32.mrf.mxu0
    %v3619 = vadd.f32 %v3260, %v3618
    %3620 = vmatmul.f32.gmra.mxu0 %v3293
    %v3621 = vpop.f32.mrf.mxu0
    %v3622 = vadd.f32 %v3260, %v3621
    %3623 = vmatmul.f32.gmra.mxu0 %v3296
    %v3624 = vpop.f32.mrf.mxu0
    %v3625 = vadd.f32 %v3260, %v3624
    %3626 = vdwg.mxu0
    %v3627 = vmax.f32 %v3316, 0.0
    %v3628 = vmax.f32 %v3363, 0.0
    %v3629 = vmax.f32 %v3410, 0.0
    %v3630 = vmax.f32 %v3457, 0.0
    %v3631 = vmax.f32 %v3504, 0.0
    %v3632 = vmax.f32 %v3551, 0.0
    %v3633 = vmax.f32 %v3598, 0.0
    %v3634 = vmax.f32 %v3319, 0.0
    %v3635 = vmax.f32 %v3366, 0.0
    %v3636 = vmax.f32 %v3413, 0.0
    %v3637 = vmax.f32 %v3460, 0.0
    %v3638 = vmax.f32 %v3507, 0.0
    %v3639 = vmax.f32 %v3554, 0.0
    %v3640 = vmax.f32 %v3601, 0.0
    %v3641 = vmax.f32 %v3322, 0.0
    %v3642 = vmax.f32 %v3369, 0.0
    %v3643 = vmax.f32 %v3416, 0.0
    %v3644 = vmax.f32 %v3463, 0.0
    %v3645 = vmax.f32 %v3510, 0.0
    %v3646 = vmax.f32 %v3557, 0.0
    %v3647 = vmax.f32 %v3604, 0.0
    %v3648 = vmax.f32 %v3325, 0.0
    %v3649 = vmax.f32 %v3372, 0.0
    %v3650 = vmax.f32 %v3419, 0.0
    %v3651 = vmax.f32 %v3466, 0.0
    %v3652 = vmax.f32 %v3513, 0.0
    %v3653 = vmax.f32 %v3560, 0.0
    %v3654 = vmax.f32 %v3607, 0.0
    %v3655 = vmax.f32 %v3328, 0.0
    %v3656 = vmax.f32 %v3375, 0.0
    %v3657 = vmax.f32 %v3422, 0.0
    %v3658 = vmax.f32 %v3469, 0.0
    %v3659 = vmax.f32 %v3516, 0.0
    %v3660 = vmax.f32 %v3563, 0.0
    %v3661 = vmax.f32 %v3610, 0.0
    %v3662 = vmax.f32 %v3331, 0.0
    %v3663 = vmax.f32 %v3378, 0.0
    %v3664 = vmax.f32 %v3425, 0.0
    %v3665 = vmax.f32 %v3472, 0.0
    %v3666 = vmax.f32 %v3519, 0.0
    %v3667 = vmax.f32 %v3566, 0.0
    %v3668 = vmax.f32 %v3613, 0.0
    %v3669 = vmax.f32 %v3334, 0.0
    %v3670 = vmax.f32 %v3381, 0.0
    %v3671 = vmax.f32 %v3428, 0.0
    %v3672 = vmax.f32 %v3475, 0.0
    %v3673 = vmax.f32 %v3522, 0.0
    %v3674 = vmax.f32 %v3569, 0.0
    %v3675 = vmax.f32 %v3616, 0.0
    %v3676 = vmax.f32 %v3337, 0.0
    %v3677 = vmax.f32 %v3384, 0.0
    %v3678 = vmax.f32 %v3431, 0.0
    %v3679 = vmax.f32 %v3478, 0.0
    %v3680 = vmax.f32 %v3525, 0.0
    %v3681 = vmax.f32 %v3572, 0.0
    %v3682 = vmax.f32 %v3619, 0.0
    %v3683 = vmax.f32 %v3340, 0.0
    %v3684 = vmax.f32 %v3387, 0.0
    %v3685 = vmax.f32 %v3434, 0.0
    %v3686 = vmax.f32 %v3481, 0.0
    %v3687 = vmax.f32 %v3528, 0.0
    %v3688 = vmax.f32 %v3575, 0.0
    %v3689 = vmax.f32 %v3622, 0.0
    %v3690 = vmax.f32 %v3343, 0.0
    %v3691 = vmax.f32 %v3390, 0.0
    %v3692 = vmax.f32 %v3437, 0.0
    %v3693 = vmax.f32 %v3484, 0.0
    %v3694 = vmax.f32 %v3531, 0.0
    %v3695 = vmax.f32 %v3578, 0.0
    %v3696 = vmax.f32 %v3625, 0.0
    %v3697 = vld [vmem:[%s18] sm:$0xff]
    %v3698 = vld [vmem:[%s18 + $0x8] sm:$0xff]
    %v3699 = vld [vmem:[%s18 + $0x10] sm:$0xff]
    %v3700 = vld [vmem:[%s18 + $0x18] sm:$0xff]
    %v3701 = vld [vmem:[%s18 + $0x20] sm:$0xff]
    %v3702 = vld [vmem:[%s18 + $0x28] sm:$0xff]
    %v3703 = vld [vmem:[%s18 + $0x30] sm:$0xff]
    %v3704 = vld [vmem:[%s18 + $0x38] sm:$0xff]
    %v3705 = vld [vmem:[%s18 + $0x40] sm:$0xff]
    %v3706 = vld [vmem:[%s18 + $0x48] sm:$0xff]
    %v3707 = vld [vmem:[%s18 + $0x50] sm:$0xff]
    %v3708 = vld [vmem:[%s18 + $0x58] sm:$0xff]
    %v3709 = vld [vmem:[%s18 + $0x60] sm:$0xff]
    %v3710 = vld [vmem:[%s18 + $0x68] sm:$0xff]
    %v3711 = vld [vmem:[%s18 + $0x70] sm:$0xff]
    %v3712 = vld [vmem:[%s18 + $0x78] sm:$0xff]
    %v3713 = vld [vmem:[%s18 + $0x80] sm:$0xff]
    %v3714 = vld [vmem:[%s18 + $0x88] sm:$0xff]
    %v3715 = vld [vmem:[%s18 + $0x90] sm:$0xff]
    %v3716 = vld [vmem:[%s18 + $0x98] sm:$0xff]
    %v3717 = vld [vmem:[%s18 + $0xa0] sm:$0xff]
    %v3718 = vld [vmem:[%s18 + $0xa8] sm:$0xff]
    %v3719 = vld [vmem:[%s18 + $0xb0] sm:$0xff]
    %v3720 = vld [vmem:[%s18 + $0xb8] sm:$0xff]
    %v3721 = vld [vmem:[%s18 + $0xc0] sm:$0xff]
    %v3722 = vld [vmem:[%s18 + $0xc8] sm:$0xff]
    %v3723 = vld [vmem:[%s18 + $0xd0] sm:$0xff]
    %v3724 = vld [vmem:[%s18 + $0xd8] sm:$0xff]
    %v3725 = vld [vmem:[%s18 + $0xe0] sm:$0xff]
    %v3726 = vld [vmem:[%s18 + $0xe8] sm:$0xff]
    %v3727 = vld [vmem:[%s18 + $0xf0] sm:$0xff]
    %v3728 = vld [vmem:[%s18 + $0xf8] sm:$0xff]
    %v3729 = vld [vmem:[%s18 + $0x100] sm:$0xff]
    %v3730 = vld [vmem:[%s18 + $0x108] sm:$0xff]
    %v3731 = vld [vmem:[%s18 + $0x110] sm:$0xff]
    %v3732 = vld [vmem:[%s18 + $0x118] sm:$0xff]
    %v3733 = vld [vmem:[%s18 + $0x120] sm:$0xff]
    %v3734 = vld [vmem:[%s18 + $0x128] sm:$0xff]
    %v3735 = vld [vmem:[%s18 + $0x130] sm:$0xff]
    %v3736 = vld [vmem:[%s18 + $0x138] sm:$0xff]
    %v3737 = vld [vmem:[%s18 + $0x140] sm:$0xff]
    %v3738 = vld [vmem:[%s18 + $0x148] sm:$0xff]
    %v3739 = vld [vmem:[%s18 + $0x150] sm:$0xff]
    %v3740 = vld [vmem:[%s18 + $0x158] sm:$0xff]
    %v3741 = vld [vmem:[%s18 + $0x160] sm:$0xff]
    %v3742 = vld [vmem:[%s18 + $0x168] sm:$0xff]
    %v3743 = vld [vmem:[%s18 + $0x170] sm:$0xff]
    %v3744 = vld [vmem:[%s18 + $0x178] sm:$0xff]
    %v3745 = vld [vmem:[%s18 + $0x180] sm:$0xff]
    %v3746 = vld [vmem:[%s18 + $0x188] sm:$0xff]
    %v3747 = vld [vmem:[%s18 + $0x190] sm:$0xff]
    %v3748 = vld [vmem:[%s18 + $0x198] sm:$0xff]
    %v3749 = vld [vmem:[%s18 + $0x1a0] sm:$0xff]
    %v3750 = vld [vmem:[%s18 + $0x1a8] sm:$0xff]
    %v3751 = vld [vmem:[%s18 + $0x1b0] sm:$0xff]
    %v3752 = vld [vmem:[%s18 + $0x1b8] sm:$0xff]
    %v3753 = vld [vmem:[%s18 + $0x1c0] sm:$0xff]
    %v3754 = vld [vmem:[%s18 + $0x1c8] sm:$0xff]
    %v3755 = vld [vmem:[%s18 + $0x1d0] sm:$0xff]
    %v3756 = vld [vmem:[%s18 + $0x1d8] sm:$0xff]
    %v3757 = vld [vmem:[%s18 + $0x1e0] sm:$0xff]
    %v3758 = vld [vmem:[%s18 + $0x1e8] sm:$0xff]
    %v3759 = vld [vmem:[%s18 + $0x1f0] sm:$0xff]
    %v3760 = vld [vmem:[%s18 + $0x1f8] sm:$0xff]
    %v3761 = vld [vmem:[%s18 + $0x200] sm:$0xff]
    %v3762 = vld [vmem:[%s18 + $0x208] sm:$0xff]
    %v3763 = vld [vmem:[%s18 + $0x210] sm:$0xff]
    %v3764 = vld [vmem:[%s18 + $0x218] sm:$0xff]
    %v3765 = vld [vmem:[%s18 + $0x220] sm:$0xff]
    %v3766 = vld [vmem:[%s18 + $0x228] sm:$0xff]
    %v3767 = vld [vmem:[%s18 + $0x230] sm:$0xff]
    %v3768 = vld [vmem:[%s18 + $0x238] sm:$0xff]
    %v3769 = vld [vmem:[%s18 + $0x240] sm:$0xff]
    %v3770 = vld [vmem:[%s18 + $0x248] sm:$0xff]
    %v3771 = vld [vmem:[%s18 + $0x250] sm:$0xff]
    %v3772 = vld [vmem:[%s18 + $0x258] sm:$0xff]
    %v3773 = vld [vmem:[%s18 + $0x260] sm:$0xff]
    %v3774 = vld [vmem:[%s18 + $0x268] sm:$0xff]
    %v3775 = vld [vmem:[%s18 + $0x270] sm:$0xff]
    %v3776 = vld [vmem:[%s18 + $0x278] sm:$0xff]
    %v3777 = vld [vmem:[%s18 + $0x280] sm:$0xff]
    %v3778 = vld [vmem:[%s18 + $0x288] sm:$0xff]
    %v3779 = vld [vmem:[%s18 + $0x290] sm:$0xff]
    %v3780 = vld [vmem:[%s18 + $0x298] sm:$0xff]
    %v3781 = vld [vmem:[%s18 + $0x2a0] sm:$0xff]
    %v3782 = vld [vmem:[%s18 + $0x2a8] sm:$0xff]
    %v3783 = vld [vmem:[%s18 + $0x2b0] sm:$0xff]
    %v3784 = vld [vmem:[%s18 + $0x2b8] sm:$0xff]
    %v3785 = vld [vmem:[%s18 + $0x2c0] sm:$0xff]
    %v3786 = vld [vmem:[%s18 + $0x2c8] sm:$0xff]
    %v3787 = vld [vmem:[%s18 + $0x2d0] sm:$0xff]
    %v3788 = vld [vmem:[%s18 + $0x2d8] sm:$0xff]
    %v3789 = vld [vmem:[%s18 + $0x2e0] sm:$0xff]
    %v3790 = vld [vmem:[%s18 + $0x2e8] sm:$0xff]
    %v3791 = vld [vmem:[%s18 + $0x2f0] sm:$0xff]
    %v3792 = vld [vmem:[%s18 + $0x2f8] sm:$0xff]
    %v3793 = vld [vmem:[%s18 + $0x300] sm:$0xff]
    %v3794 = vld [vmem:[%s18 + $0x308] sm:$0xff]
    %v3795 = vld [vmem:[%s18 + $0x310] sm:$0xff]
    %v3796 = vld [vmem:[%s18 + $0x318] sm:$0xff]
    %v3797 = vld [vmem:[#allocation25] sm:$0x1]
    %v3799 = vperm.slane %v3797, 0
    %v3802 = vsel %vm1234, %v3633, 0
    %v3805 = vsel %vm1234, %v3640, 0
    %v3808 = vsel %vm1234, %v3647, 0
    %v3811 = vsel %vm1234, %v3654, 0
    %v3814 = vsel %vm1234, %v3661, 0
    %v3817 = vsel %vm1234, %v3668, 0
    %v3820 = vsel %vm1234, %v3675, 0
    %v3823 = vsel %vm1234, %v3682, 0
    %v3826 = vsel %vm1234, %v3689, 0
    %v3829 = vsel %vm1234, %v3696, 0
    %3831 = vmatpush.msra.mxu0 %v3712
    %3832 = vmatpush.msra.mxu0 %v3711
    %3833 = vmatpush.msra.mxu0 %v3710
    %3834 = vmatpush.msra.mxu0 %v3709
    %3835 = vmatpush.msra.mxu0 %v3708
    %3836 = vmatpush.msra.mxu0 %v3707
    %3837 = vmatpush.msra.mxu0 %v3706
    %3838 = vmatpush.msra.mxu0 %v3705
    %3839 = vmatpush.msra.mxu0 %v3704
    %3840 = vmatpush.msra.mxu0 %v3703
    %3841 = vmatpush.msra.mxu0 %v3702
    %3842 = vmatpush.msra.mxu0 %v3701
    %3843 = vmatpush.msra.mxu0 %v3700
    %3844 = vmatpush.msra.mxu0 %v3699
    %3845 = vmatpush.msra.mxu0 %v3698
    %3846 = vmatpush.msra.mxu0 %v3697
    %3847 = vmatmul.f32.gmra.mxu0 %v3627
    %v3848 = vpop.f32.mrf.mxu0
    %v3849 = vadd.f32 %v3799, %v3848
    %3850 = vmatmul.f32.gmra.mxu0 %v3634
    %v3851 = vpop.f32.mrf.mxu0
    %v3852 = vadd.f32 %v3799, %v3851
    %3853 = vmatmul.f32.gmra.mxu0 %v3641
    %v3854 = vpop.f32.mrf.mxu0
    %v3855 = vadd.f32 %v3799, %v3854
    %3856 = vmatmul.f32.gmra.mxu0 %v3648
    %v3857 = vpop.f32.mrf.mxu0
    %v3858 = vadd.f32 %v3799, %v3857
    %3859 = vmatmul.f32.gmra.mxu0 %v3655
    %v3860 = vpop.f32.mrf.mxu0
    %v3861 = vadd.f32 %v3799, %v3860
    %3862 = vmatmul.f32.gmra.mxu0 %v3662
    %v3863 = vpop.f32.mrf.mxu0
    %v3864 = vadd.f32 %v3799, %v3863
    %3865 = vmatmul.f32.gmra.mxu0 %v3669
    %v3866 = vpop.f32.mrf.mxu0
    %v3867 = vadd.f32 %v3799, %v3866
    %3868 = vmatmul.f32.gmra.mxu0 %v3676
    %v3869 = vpop.f32.mrf.mxu0
    %v3870 = vadd.f32 %v3799, %v3869
    %3871 = vmatmul.f32.gmra.mxu0 %v3683
    %v3872 = vpop.f32.mrf.mxu0
    %v3873 = vadd.f32 %v3799, %v3872
    %3874 = vmatmul.f32.gmra.mxu0 %v3690
    %v3875 = vpop.f32.mrf.mxu0
    %v3876 = vadd.f32 %v3799, %v3875
    %3877 = vdwg.mxu0
    %3878 = vmatpush.msra.mxu0 %v3728
    %3879 = vmatpush.msra.mxu0 %v3727
    %3880 = vmatpush.msra.mxu0 %v3726
    %3881 = vmatpush.msra.mxu0 %v3725
    %3882 = vmatpush.msra.mxu0 %v3724
    %3883 = vmatpush.msra.mxu0 %v3723
    %3884 = vmatpush.msra.mxu0 %v3722
    %3885 = vmatpush.msra.mxu0 %v3721
    %3886 = vmatpush.msra.mxu0 %v3720
    %3887 = vmatpush.msra.mxu0 %v3719
    %3888 = vmatpush.msra.mxu0 %v3718
    %3889 = vmatpush.msra.mxu0 %v3717
    %3890 = vmatpush.msra.mxu0 %v3716
    %3891 = vmatpush.msra.mxu0 %v3715
    %3892 = vmatpush.msra.mxu0 %v3714
    %3893 = vmatpush.msra.mxu0 %v3713
    %3894 = vmatmul.f32.gmra.mxu0 %v3628
    %v3895 = vpop.f32.mrf.mxu0
    %v3896 = vadd.f32 %v3849, %v3895
    %3897 = vmatmul.f32.gmra.mxu0 %v3635
    %v3898 = vpop.f32.mrf.mxu0
    %v3899 = vadd.f32 %v3852, %v3898
    %3900 = vmatmul.f32.gmra.mxu0 %v3642
    %v3901 = vpop.f32.mrf.mxu0
    %v3902 = vadd.f32 %v3855, %v3901
    %3903 = vmatmul.f32.gmra.mxu0 %v3649
    %v3904 = vpop.f32.mrf.mxu0
    %v3905 = vadd.f32 %v3858, %v3904
    %3906 = vmatmul.f32.gmra.mxu0 %v3656
    %v3907 = vpop.f32.mrf.mxu0
    %v3908 = vadd.f32 %v3861, %v3907
    %3909 = vmatmul.f32.gmra.mxu0 %v3663
    %v3910 = vpop.f32.mrf.mxu0
    %v3911 = vadd.f32 %v3864, %v3910
    %3912 = vmatmul.f32.gmra.mxu0 %v3670
    %v3913 = vpop.f32.mrf.mxu0
    %v3914 = vadd.f32 %v3867, %v3913
    %3915 = vmatmul.f32.gmra.mxu0 %v3677
    %v3916 = vpop.f32.mrf.mxu0
    %v3917 = vadd.f32 %v3870, %v3916
    %3918 = vmatmul.f32.gmra.mxu0 %v3684
    %v3919 = vpop.f32.mrf.mxu0
    %v3920 = vadd.f32 %v3873, %v3919
    %3921 = vmatmul.f32.gmra.mxu0 %v3691
    %v3922 = vpop.f32.mrf.mxu0
    %v3923 = vadd.f32 %v3876, %v3922
    %3924 = vdwg.mxu0
    %3925 = vmatpush.msra.mxu0 %v3744
    %3926 = vmatpush.msra.mxu0 %v3743
    %3927 = vmatpush.msra.mxu0 %v3742
    %3928 = vmatpush.msra.mxu0 %v3741
    %3929 = vmatpush.msra.mxu0 %v3740
    %3930 = vmatpush.msra.mxu0 %v3739
    %3931 = vmatpush.msra.mxu0 %v3738
    %3932 = vmatpush.msra.mxu0 %v3737
    %3933 = vmatpush.msra.mxu0 %v3736
    %3934 = vmatpush.msra.mxu0 %v3735
    %3935 = vmatpush.msra.mxu0 %v3734
    %3936 = vmatpush.msra.mxu0 %v3733
    %3937 = vmatpush.msra.mxu0 %v3732
    %3938 = vmatpush.msra.mxu0 %v3731
    %3939 = vmatpush.msra.mxu0 %v3730
    %3940 = vmatpush.msra.mxu0 %v3729
    %3941 = vmatmul.f32.gmra.mxu0 %v3629
    %v3942 = vpop.f32.mrf.mxu0
    %v3943 = vadd.f32 %v3896, %v3942
    %3944 = vmatmul.f32.gmra.mxu0 %v3636
    %v3945 = vpop.f32.mrf.mxu0
    %v3946 = vadd.f32 %v3899, %v3945
    %3947 = vmatmul.f32.gmra.mxu0 %v3643
    %v3948 = vpop.f32.mrf.mxu0
    %v3949 = vadd.f32 %v3902, %v3948
    %3950 = vmatmul.f32.gmra.mxu0 %v3650
    %v3951 = vpop.f32.mrf.mxu0
    %v3952 = vadd.f32 %v3905, %v3951
    %3953 = vmatmul.f32.gmra.mxu0 %v3657
    %v3954 = vpop.f32.mrf.mxu0
    %v3955 = vadd.f32 %v3908, %v3954
    %3956 = vmatmul.f32.gmra.mxu0 %v3664
    %v3957 = vpop.f32.mrf.mxu0
    %v3958 = vadd.f32 %v3911, %v3957
    %3959 = vmatmul.f32.gmra.mxu0 %v3671
    %v3960 = vpop.f32.mrf.mxu0
    %v3961 = vadd.f32 %v3914, %v3960
    %3962 = vmatmul.f32.gmra.mxu0 %v3678
    %v3963 = vpop.f32.mrf.mxu0
    %v3964 = vadd.f32 %v3917, %v3963
    %3965 = vmatmul.f32.gmra.mxu0 %v3685
    %v3966 = vpop.f32.mrf.mxu0
    %v3967 = vadd.f32 %v3920, %v3966
    %3968 = vmatmul.f32.gmra.mxu0 %v3692
    %v3969 = vpop.f32.mrf.mxu0
    %v3970 = vadd.f32 %v3923, %v3969
    %3971 = vdwg.mxu0
    %3972 = vmatpush.msra.mxu0 %v3760
    %3973 = vmatpush.msra.mxu0 %v3759
    %3974 = vmatpush.msra.mxu0 %v3758
    %3975 = vmatpush.msra.mxu0 %v3757
    %3976 = vmatpush.msra.mxu0 %v3756
    %3977 = vmatpush.msra.mxu0 %v3755
    %3978 = vmatpush.msra.mxu0 %v3754
    %3979 = vmatpush.msra.mxu0 %v3753
    %3980 = vmatpush.msra.mxu0 %v3752
    %3981 = vmatpush.msra.mxu0 %v3751
    %3982 = vmatpush.msra.mxu0 %v3750
    %3983 = vmatpush.msra.mxu0 %v3749
    %3984 = vmatpush.msra.mxu0 %v3748
    %3985 = vmatpush.msra.mxu0 %v3747
    %3986 = vmatpush.msra.mxu0 %v3746
    %3987 = vmatpush.msra.mxu0 %v3745
    %3988 = vmatmul.f32.gmra.mxu0 %v3630
    %v3989 = vpop.f32.mrf.mxu0
    %v3990 = vadd.f32 %v3943, %v3989
    %3991 = vmatmul.f32.gmra.mxu0 %v3637
    %v3992 = vpop.f32.mrf.mxu0
    %v3993 = vadd.f32 %v3946, %v3992
    %3994 = vmatmul.f32.gmra.mxu0 %v3644
    %v3995 = vpop.f32.mrf.mxu0
    %v3996 = vadd.f32 %v3949, %v3995
    %3997 = vmatmul.f32.gmra.mxu0 %v3651
    %v3998 = vpop.f32.mrf.mxu0
    %v3999 = vadd.f32 %v3952, %v3998
    %4000 = vmatmul.f32.gmra.mxu0 %v3658
    %v4001 = vpop.f32.mrf.mxu0
    %v4002 = vadd.f32 %v3955, %v4001
    %4003 = vmatmul.f32.gmra.mxu0 %v3665
    %v4004 = vpop.f32.mrf.mxu0
    %v4005 = vadd.f32 %v3958, %v4004
    %4006 = vmatmul.f32.gmra.mxu0 %v3672
    %v4007 = vpop.f32.mrf.mxu0
    %v4008 = vadd.f32 %v3961, %v4007
    %4009 = vmatmul.f32.gmra.mxu0 %v3679
    %v4010 = vpop.f32.mrf.mxu0
    %v4011 = vadd.f32 %v3964, %v4010
    %4012 = vmatmul.f32.gmra.mxu0 %v3686
    %v4013 = vpop.f32.mrf.mxu0
    %v4014 = vadd.f32 %v3967, %v4013
    %4015 = vmatmul.f32.gmra.mxu0 %v3693
    %v4016 = vpop.f32.mrf.mxu0
    %v4017 = vadd.f32 %v3970, %v4016
    %4018 = vdwg.mxu0
    %4019 = vmatpush.msra.mxu0 %v3776
    %4020 = vmatpush.msra.mxu0 %v3775
    %4021 = vmatpush.msra.mxu0 %v3774
    %4022 = vmatpush.msra.mxu0 %v3773
    %4023 = vmatpush.msra.mxu0 %v3772
    %4024 = vmatpush.msra.mxu0 %v3771
    %4025 = vmatpush.msra.mxu0 %v3770
    %4026 = vmatpush.msra.mxu0 %v3769
    %4027 = vmatpush.msra.mxu0 %v3768
    %4028 = vmatpush.msra.mxu0 %v3767
    %4029 = vmatpush.msra.mxu0 %v3766
    %4030 = vmatpush.msra.mxu0 %v3765
    %4031 = vmatpush.msra.mxu0 %v3764
    %4032 = vmatpush.msra.mxu0 %v3763
    %4033 = vmatpush.msra.mxu0 %v3762
    %4034 = vmatpush.msra.mxu0 %v3761
    %4035 = vmatmul.f32.gmra.mxu0 %v3631
    %v4036 = vpop.f32.mrf.mxu0
    %v4037 = vadd.f32 %v3990, %v4036
    %4038 = vmatmul.f32.gmra.mxu0 %v3638
    %v4039 = vpop.f32.mrf.mxu0
    %v4040 = vadd.f32 %v3993, %v4039
    %4041 = vmatmul.f32.gmra.mxu0 %v3645
    %v4042 = vpop.f32.mrf.mxu0
    %v4043 = vadd.f32 %v3996, %v4042
    %4044 = vmatmul.f32.gmra.mxu0 %v3652
    %v4045 = vpop.f32.mrf.mxu0
    %v4046 = vadd.f32 %v3999, %v4045
    %4047 = vmatmul.f32.gmra.mxu0 %v3659
    %v4048 = vpop.f32.mrf.mxu0
    %v4049 = vadd.f32 %v4002, %v4048
    %4050 = vmatmul.f32.gmra.mxu0 %v3666
    %v4051 = vpop.f32.mrf.mxu0
    %v4052 = vadd.f32 %v4005, %v4051
    %4053 = vmatmul.f32.gmra.mxu0 %v3673
    %v4054 = vpop.f32.mrf.mxu0
    %v4055 = vadd.f32 %v4008, %v4054
    %4056 = vmatmul.f32.gmra.mxu0 %v3680
    %v4057 = vpop.f32.mrf.mxu0
    %v4058 = vadd.f32 %v4011, %v4057
    %4059 = vmatmul.f32.gmra.mxu0 %v3687
    %v4060 = vpop.f32.mrf.mxu0
    %v4061 = vadd.f32 %v4014, %v4060
    %4062 = vmatmul.f32.gmra.mxu0 %v3694
    %v4063 = vpop.f32.mrf.mxu0
    %v4064 = vadd.f32 %v4017, %v4063
    %4065 = vdwg.mxu0
    %4066 = vmatpush.msra.mxu0 %v3792
    %4067 = vmatpush.msra.mxu0 %v3791
    %4068 = vmatpush.msra.mxu0 %v3790
    %4069 = vmatpush.msra.mxu0 %v3789
    %4070 = vmatpush.msra.mxu0 %v3788
    %4071 = vmatpush.msra.mxu0 %v3787
    %4072 = vmatpush.msra.mxu0 %v3786
    %4073 = vmatpush.msra.mxu0 %v3785
    %4074 = vmatpush.msra.mxu0 %v3784
    %4075 = vmatpush.msra.mxu0 %v3783
    %4076 = vmatpush.msra.mxu0 %v3782
    %4077 = vmatpush.msra.mxu0 %v3781
    %4078 = vmatpush.msra.mxu0 %v3780
    %4079 = vmatpush.msra.mxu0 %v3779
    %4080 = vmatpush.msra.mxu0 %v3778
    %4081 = vmatpush.msra.mxu0 %v3777
    %4082 = vmatmul.f32.gmra.mxu0 %v3632
    %v4083 = vpop.f32.mrf.mxu0
    %v4084 = vadd.f32 %v4037, %v4083
    %4085 = vmatmul.f32.gmra.mxu0 %v3639
    %v4086 = vpop.f32.mrf.mxu0
    %v4087 = vadd.f32 %v4040, %v4086
    %4088 = vmatmul.f32.gmra.mxu0 %v3646
    %v4089 = vpop.f32.mrf.mxu0
    %v4090 = vadd.f32 %v4043, %v4089
    %4091 = vmatmul.f32.gmra.mxu0 %v3653
    %v4092 = vpop.f32.mrf.mxu0
    %v4093 = vadd.f32 %v4046, %v4092
    %4094 = vmatmul.f32.gmra.mxu0 %v3660
    %v4095 = vpop.f32.mrf.mxu0
    %v4096 = vadd.f32 %v4049, %v4095
    %4097 = vmatmul.f32.gmra.mxu0 %v3667
    %v4098 = vpop.f32.mrf.mxu0
    %v4099 = vadd.f32 %v4052, %v4098
    %4100 = vmatmul.f32.gmra.mxu0 %v3674
    %v4101 = vpop.f32.mrf.mxu0
    %v4102 = vadd.f32 %v4055, %v4101
    %4103 = vmatmul.f32.gmra.mxu0 %v3681
    %v4104 = vpop.f32.mrf.mxu0
    %v4105 = vadd.f32 %v4058, %v4104
    %4106 = vmatmul.f32.gmra.mxu0 %v3688
    %v4107 = vpop.f32.mrf.mxu0
    %v4108 = vadd.f32 %v4061, %v4107
    %4109 = vmatmul.f32.gmra.mxu0 %v3695
    %v4110 = vpop.f32.mrf.mxu0
    %v4111 = vadd.f32 %v4064, %v4110
    %4112 = vdwg.mxu0
    %4113 = vmatpush.msra.mxu0 0.0
    %4114 = vmatpush.msra.mxu0 0.0
    %4115 = vmatpush.msra.mxu0 0.0
    %4116 = vmatpush.msra.mxu0 0.0
    %4117 = vmatpush.msra.mxu0 0.0
    %4118 = vmatpush.msra.mxu0 0.0
    %4119 = vmatpush.msra.mxu0 0.0
    %4120 = vmatpush.msra.mxu0 0.0
    %4121 = vmatpush.msra.mxu0 0.0
    %4122 = vmatpush.msra.mxu0 0.0
    %4123 = vmatpush.msra.mxu0 0.0
    %4124 = vmatpush.msra.mxu0 0.0
    %4125 = vmatpush.msra.mxu0 %v3796
    %4126 = vmatpush.msra.mxu0 %v3795
    %4127 = vmatpush.msra.mxu0 %v3794
    %4128 = vmatpush.msra.mxu0 %v3793
    %4129 = vmatmul.f32.gmra.mxu0 %v3802
    %v4130 = vpop.f32.mrf.mxu0
    %v4131 = vadd.f32 %v4084, %v4130
    %4132 = vmatmul.f32.gmra.mxu0 %v3805
    %v4133 = vpop.f32.mrf.mxu0
    %v4134 = vadd.f32 %v4087, %v4133
    %4135 = vmatmul.f32.gmra.mxu0 %v3808
    %v4136 = vpop.f32.mrf.mxu0
    %v4137 = vadd.f32 %v4090, %v4136
    %4138 = vmatmul.f32.gmra.mxu0 %v3811
    %v4139 = vpop.f32.mrf.mxu0
    %v4140 = vadd.f32 %v4093, %v4139
    %4141 = vmatmul.f32.gmra.mxu0 %v3814
    %v4142 = vpop.f32.mrf.mxu0
    %v4143 = vadd.f32 %v4096, %v4142
    %4144 = vmatmul.f32.gmra.mxu0 %v3817
    %v4145 = vpop.f32.mrf.mxu0
    %v4146 = vadd.f32 %v4099, %v4145
    %4147 = vmatmul.f32.gmra.mxu0 %v3820
    %v4148 = vpop.f32.mrf.mxu0
    %v4149 = vadd.f32 %v4102, %v4148
    %4150 = vmatmul.f32.gmra.mxu0 %v3823
    %v4151 = vpop.f32.mrf.mxu0
    %v4152 = vadd.f32 %v4105, %v4151
    %4153 = vmatmul.f32.gmra.mxu0 %v3826
    %v4154 = vpop.f32.mrf.mxu0
    %v4155 = vadd.f32 %v4108, %v4154
    %4156 = vmatmul.f32.gmra.mxu0 %v3829
    %v4157 = vpop.f32.mrf.mxu0
    %v4158 = vadd.f32 %v4111, %v4157
    %4159 = vdwg.mxu0
    %4160 = vst.msk [vmem:[%s20] sm:$0xff] %vm2860, %v4131
    %4161 = vst.msk [vmem:[%s20 + $0x8] sm:$0xff] %vm2860, %v4134
    %4162 = vst.msk [vmem:[%s20 + $0x10] sm:$0xff] %vm2860, %v4137
    %4163 = vst.msk [vmem:[%s20 + $0x18] sm:$0xff] %vm2860, %v4140
    %4164 = vst.msk [vmem:[%s20 + $0x20] sm:$0xff] %vm2860, %v4143
    %4165 = vst.msk [vmem:[%s20 + $0x28] sm:$0xff] %vm2860, %v4146
    %4166 = vst.msk [vmem:[%s20 + $0x30] sm:$0xff] %vm2860, %v4149
    %4167 = vst.msk [vmem:[%s20 + $0x38] sm:$0xff] %vm2860, %v4152
    %4168 = vst.msk [vmem:[%s20 + $0x40] sm:$0xff] %vm2860, %v4155
    %4169 = vst.msk [vmem:[%s20 + $0x48] sm:$0xff] %vm2860, %v4158
    // Predicated region
    $region146: #{tpu_custom_call.1} parent=1 // pred_check
      _
    $region147: #{tpu_custom_call.1} parent=1 // pred_check_branch
      %4171 = sbr.rel (0) target = $region149
    $region148: #{tpu_custom_call.1} parent=1 // pred_region
      _
    $region149: #{tpu_custom_call.1} parent=1 // pred_fallthru
      _
    // Predicated region
    $region150: #{tpu_custom_call.1} parent=1 // pred_check
      _
    $region151: #{tpu_custom_call.1} parent=1 // pred_check_branch
      %4173 = sbr.rel (0) target = $region153
    $region152: #{tpu_custom_call.1} parent=1 // pred_region
      _
    $region153: #{tpu_custom_call.1} parent=1 // pred_fallthru
      _
    %4174 = vsyncpa [#allocation3], 1
    %4175 = vsyncpa [#allocation5], 1
    %4176 = vsyncpa [#allocation8], 1
    %4177 = vsyncpa [#allocation11], 1
    %4178 = vsyncpa [#allocation14], 1
    %4179 = vsyncpa [#allocation17], 1
    %4180 = vsyncpa [#allocation20], 1
    %4181 = vsyncpa [#allocation23], 1
    %4182 = vsyncpa [#allocation26], 1

</llo_original>
